<compile_context>
chip_gen: v6e
topology: v6e:2x2x1
jax: 0.10.0
libtpu: 0.0.40
codegen_flags: <defaults>
</compile_context>

<pallas_src>
import numpy as np
import jax
import jax.numpy as jnp
from jax.experimental import pallas as pl
from jax.experimental.pallas import tpu as pltpu


# ----------------------------------------------------------------------------
# Scaled-down CelebAEncoder configuration (same structure / strides / kernel
# sizes / paddings as the PyTorch module, smaller channels).
#   Original: conv(3->2048,k3,s2,p1) conv(2048->1024,k3,s2,p1)
#             conv(1024->512,k5,s2,p2) conv(512->256,k5,s2,p2)
#             fc(256*4*4 -> 2048); mu, log_sigma = chunk(.., 2); softplus
# ----------------------------------------------------------------------------
C_IN, C1, C2, C3, C4 = 3, 32, 16, 16, 8
H_IN = W_IN = 32                    # spatial: 32 -> 16 -> 8 -> 4 -> 2
LATENT = 16                         # fc: C4*2*2 -> 2*LATENT

# (kernel, stride, pad, Cin, Cout, Hin, Win, Hout, Wout) per conv layer
_CONV_CFG = (
    (3, 2, 1, C_IN, C1, 32, 32, 16, 16),
    (3, 2, 1, C1, C2, 16, 16, 8, 8),
    (5, 2, 2, C2, C3, 8, 8, 4, 4),
    (5, 2, 2, C3, C4, 4, 4, 2, 2),
)
_H_LAST, _W_LAST = 2, 2


# ----------------------------------------------------------------------------
# Fused Pallas kernel: whole forward for ONE sample (grid axis = batch)
# ----------------------------------------------------------------------------
def _fused_encoder_kernel(*refs):
    """refs = (x, [S_1,B_1,bias_1, ..., S_4,B_4,bias_4], G_fc, bias_fc, y).

    x      : (Hin, Win*Cin)            rows = image rows, lanes = (w, c)
    S_s    : (k, Hout, Hin)            0/1 vertical-tap row selectors
    B_s    : (k, Win*Cin, Wout*Cout)   per-tap weights (kw taps + stride + pad
                                       folded in; zero rows encode padding)
    bias_s : (1, Wout*Cout)            channel bias tiled over output columns
    G_fc   : (Hlast, Wlast*Clast, 2L)  fc weights, NCHW flatten folded in
    bias_fc: (1, 2L)
    y      : (1, 1, 2L)                [mu | softplus(log_sigma)]
    """
    x_ref, y_ref = refs[0], refs[-1]
    prefs = refs[1:-1]
    n_conv = (len(prefs) - 2) // 3

    h = x_ref[...].astype(jnp.float32)                      # (Hin, Win*Cin)

    for s in range(n_conv):
        s_ref = prefs[3 * s]
        b_ref = prefs[3 * s + 1]
        bias_ref = prefs[3 * s + 2]
        taps = s_ref.shape[0]
        hb = h.astype(jnp.bfloat16)                         # bf16 MXU operands
        acc = jnp.zeros((s_ref.shape[1], b_ref.shape[2]), jnp.float32)
        for t in range(taps):                               # static unroll (kh)
            rows = jnp.dot(s_ref[t], hb,
                           preferred_element_type=jnp.float32)
            acc = acc + jnp.dot(rows.astype(jnp.bfloat16), b_ref[t],
                                preferred_element_type=jnp.float32)
        h = jnp.maximum(acc + bias_ref[...], 0.0)           # f32 epilogue

    # fc head: y = sum_i h[i] @ G[i] + bias   (flatten folded into G)
    g_ref, bias_fc_ref = prefs[-2], prefs[-1]
    acc = jnp.zeros((1, g_ref.shape[2]), jnp.float32)
    for t in range(g_ref.shape[0]):
        row = h[t:t + 1, :].astype(jnp.bfloat16)            # (1, Wlast*Clast)
        acc = acc + jnp.dot(row, g_ref[t],
                            preferred_element_type=jnp.float32)
    y = acc + bias_fc_ref[...]                              # (1, 2*LATENT)

    latent = y.shape[-1] // 2
    col = jax.lax.broadcasted_iota(jnp.int32, y.shape, dimension=1)
    out = jnp.where(col < latent, y, jax.nn.softplus(y))    # lane-dense store
    y_ref[...] = out[None].astype(y_ref.dtype)


# ----------------------------------------------------------------------------
# pallas_call wrapper
# ----------------------------------------------------------------------------
def _zero_index_map(ndim):
    zeros = (0,) * ndim
    return lambda i: zeros


def fused_forward(x2d, packed):
    """x2d: (N*H_IN, W_IN*C_IN) f32; packed: tuple from pack_params()."""
    n = x2d.shape[0] // H_IN
    out_cols = 2 * LATENT

    in_specs = [pl.BlockSpec((H_IN, W_IN * C_IN), lambda i: (i, 0))]
    for arr in packed:
        in_specs.append(pl.BlockSpec(arr.shape, _zero_index_map(arr.ndim)))
    out_specs = pl.BlockSpec((1, 1, out_cols), lambda i: (i, 0, 0))

    # advisory cost estimate
    flops = 0
    for s in range(len(_CONV_CFG)):
        s_arr, b_arr = packed[3 * s], packed[3 * s + 1]
        taps, ho, hi = s_arr.shape
        _, kk, nn = b_arr.shape
        flops += 2 * taps * (ho * hi * kk + ho * kk * nn)
    g_arr = packed[-2]
    flops += 2 * g_arr.shape[0] * g_arr.shape[1] * g_arr.shape[2]
    flops *= n
    bytes_accessed = int(
        x2d.size * x2d.dtype.itemsize
        + sum(a.size * a.dtype.itemsize for a in packed)
        + n * out_cols * 4)
    cost = pl.CostEstimate(flops=int(flops),
                           transcendentals=int(2 * n * out_cols),
                           bytes_accessed=bytes_accessed)

    y3 = pl.pallas_call(
        _fused_encoder_kernel,
        out_shape=jax.ShapeDtypeStruct((n, 1, out_cols), jnp.float32),
        grid=(n,),
        in_specs=in_specs,
        out_specs=out_specs,
        compiler_params=pltpu.CompilerParams(
            dimension_semantics=("parallel",)),   # 2 samples -> 2 TCs on v7x
        cost_estimate=cost,
    )(x2d, *packed)
    return y3[:, 0, :]


# ----------------------------------------------------------------------------
# One-time weight folding (pure function of the weights / static shapes)
# ----------------------------------------------------------------------------
def _row_select(k, h_out, h_in, stride, pad):
    """S[kh, i, r] = 1 iff r == stride*i + kh - pad (zero rows = zero padding)."""
    kh = np.arange(k)[:, None, None]
    i = np.arange(h_out)[None, :, None]
    r = np.arange(h_in)[None, None, :]
    return jnp.asarray(r == stride * i + kh - pad, dtype=jnp.bfloat16)


def _tap_weights(w_hwio, w_in, w_out, stride, pad):
    """B[kh, w*Cin+c, j*Cout+o] = w_hwio[kh, w - stride*j + pad, c, o] (0 if OOB)."""
    k, _, c_in, c_out = w_hwio.shape
    w = np.arange(w_in)[:, None]
    j = np.arange(w_out)[None, :]
    kw = w - stride * j + pad                         # (Win, Wout)
    valid = (kw >= 0) & (kw < k)
    kw_clipped = np.clip(kw, 0, k - 1)
    t = w_hwio[:, kw_clipped]                         # (k, Win, Wout, Cin, Cout)
    t = jnp.where(jnp.asarray(valid)[None, :, :, None, None], t, 0.0)
    b = jnp.transpose(t, (0, 1, 3, 2, 4)).reshape(k, w_in * c_in, w_out * c_out)
    return b.astype(jnp.bfloat16)


def pack_params(params):
    """Fold conv/fc weights into the kernel's matmul operands (run once)."""
    packed = []
    weights = ((params["w1"], params["b1"]), (params["w2"], params["b2"]),
               (params["w3"], params["b3"]), (params["w4"], params["b4"]))
    for (w_hwio, b), (k, stride, pad, _ci, c_out, h_in, w_in, h_out, w_out) in zip(
            weights, _CONV_CFG):
        packed.append(_row_select(k, h_out, h_in, stride, pad))
        packed.append(_tap_weights(w_hwio, w_in, w_out, stride, pad))
        packed.append(jnp.tile(b, w_out)[None, :].astype(jnp.float32))
    # fc: fold PyTorch NCHW flatten (q = c*H*W + i*W + j) into the weights:
    # G[i, j*C4 + c, m] = wfc[c*H*W + i*W + j, m]
    wfc4 = params["wfc"].reshape(C4, _H_LAST, _W_LAST, 2 * LATENT)
    g = jnp.transpose(wfc4, (1, 2, 0, 3)).reshape(_H_LAST, _W_LAST * C4,
                                                  2 * LATENT)
    packed.append(g.astype(jnp.bfloat16))
    packed.append(params["bfc"][None, :].astype(jnp.float32))
    return tuple(packed)


# ----------------------------------------------------------------------------
# Model params (HWIO conv weights; wfc is (in_features, out_features))
# ----------------------------------------------------------------------------
def init_params(key):
    ks = jax.random.split(key, 10)
    s = 0.05
    f32 = jnp.float32
    return {
        "w1": jax.random.normal(ks[0], (3, 3, C_IN, C1), f32) * s,
        "b1": jax.random.normal(ks[1], (C1,), f32) * s,
        "w2": jax.random.normal(ks[2], (3, 3, C1, C2), f32) * s,
        "b2": jax.random.normal(ks[3], (C2,), f32) * s,
        "w3": jax.random.normal(ks[4], (5, 5, C2, C3), f32) * s,
        "b3": jax.random.normal(ks[5], (C3,), f32) * s,
        "w4": jax.random.normal(ks[6], (5, 5, C3, C4), f32) * s,
        "b4": jax.random.normal(ks[7], (C4,), f32) * s,
        "wfc": jax.random.normal(ks[8], (C4 * _H_LAST * _W_LAST, 2 * LATENT), f32) * s,
        "bfc": jax.random.normal(ks[9], (2 * LATENT,), f32) * s,
    }


@jax.jit
def celeba_encoder_forward(x_nchw, packed):
    n = x_nchw.shape[0]
    # NCHW (PyTorch) -> (N*H, W*C): single cheap relayout at the boundary.
    x2d = jnp.transpose(x_nchw, (0, 2, 3, 1)).reshape(n * H_IN, W_IN * C_IN)
    y = fused_forward(x2d, packed)                 # (N, 2*LATENT)
    return y[:, :LATENT], y[:, LATENT:]            # mu, softplus(log_sigma)


# ----------------------------------------------------------------------------
# Plain-XLA reference (for a loose numerical cross-check)
# ----------------------------------------------------------------------------
def _reference_forward(x_nchw, params):
    x = jnp.transpose(x_nchw, (0, 2, 3, 1))

    def conv(x, w, b, stride, pad):
        y = jax.lax.conv_general_dilated(
            x, w, window_strides=(stride, stride),
            padding=((pad, pad), (pad, pad)),
            dimension_numbers=("NHWC", "HWIO", "NHWC"))
        return jax.nn.relu(y + b)

    x = conv(x, params["w1"], params["b1"], 2, 1)
    x = conv(x, params["w2"], params["b2"], 2, 1)
    x = conv(x, params["w3"], params["b3"], 2, 2)
    x = conv(x, params["w4"], params["b4"], 2, 2)
    n = x.shape[0]
    x = jnp.transpose(x, (0, 3, 1, 2)).reshape(n, -1)   # PyTorch .view(N,-1)
    y = x @ params["wfc"] + params["bfc"]
    return y[:, :LATENT], jax.nn.softplus(y[:, LATENT:])


if __name__ == "__main__":
    key = jax.random.PRNGKey(0)
    k_x, k_p = jax.random.split(key)
    x = jax.random.normal(k_x, (2, C_IN, H_IN, W_IN), jnp.float32)  # NCHW input
    params = init_params(k_p)
    packed = pack_params(params)                  # one-time weight folding

    mu, sigma = celeba_encoder_forward(x, packed)
    jax.block_until_ready((mu, sigma))

    assert mu.shape == (2, LATENT) and sigma.shape == (2, LATENT)
    assert bool(jnp.all(sigma > 0))               # softplus output positive
    assert bool(jnp.all(jnp.isfinite(mu))) and bool(jnp.all(jnp.isfinite(sigma)))

    # cross-check vs plain XLA (loose tolerance: bf16 MXU operands, f32 accum)
    mu_ref, sigma_ref = _reference_forward(x, params)
    np.testing.assert_allclose(np.asarray(mu), np.asarray(mu_ref),
                               atol=1e-2, rtol=1e-1)
    np.testing.assert_allclose(np.asarray(sigma), np.asarray(sigma_ref),
                               atol=1e-2, rtol=1e-1)

    print("KERNEL_OK")
</pallas_src>

<mosaic_0001>
module attributes {stable_mosaic.version = 11 : i64} {
  func.func @_fused_encoder_kernel(%arg0: i32, %arg1: memref<32x96xf32, #tpu.memory_space<vmem>>, %arg2: memref<3x16x32xbf16, #tpu.memory_space<vmem>>, %arg3: memref<3x96x512xbf16, #tpu.memory_space<vmem>>, %arg4: memref<1x512xf32, #tpu.memory_space<vmem>>, %arg5: memref<3x8x16xbf16, #tpu.memory_space<vmem>>, %arg6: memref<3x512x128xbf16, #tpu.memory_space<vmem>>, %arg7: memref<1x128xf32, #tpu.memory_space<vmem>>, %arg8: memref<5x4x8xbf16, #tpu.memory_space<vmem>>, %arg9: memref<5x128x64xbf16, #tpu.memory_space<vmem>>, %arg10: memref<1x64xf32, #tpu.memory_space<vmem>>, %arg11: memref<5x2x4xbf16, #tpu.memory_space<vmem>>, %arg12: memref<5x64x16xbf16, #tpu.memory_space<vmem>>, %arg13: memref<1x16xf32, #tpu.memory_space<vmem>>, %arg14: memref<2x16x32xbf16, #tpu.memory_space<vmem>>, %arg15: memref<1x32xf32, #tpu.memory_space<vmem>>, %arg16: memref<1x1x32xf32, #tpu.memory_space<vmem>>) attributes {dimension_semantics = [#tpu.dimension_semantics<parallel>], iteration_bounds = array<i64: 2>, scalar_prefetch = 0 : i64, scratch_operands = 0 : i64, tpu.core_type = #tpu.core_type<tc>, window_params = [{transform_indices = @transform_0, window_bounds = array<i64: 32, 96>}, {pipeline_mode = #tpu.pipeline_mode<synchronous>, transform_indices = @transform_1, window_bounds = array<i64: 3, 16, 32>}, {pipeline_mode = #tpu.pipeline_mode<synchronous>, transform_indices = @transform_2, window_bounds = array<i64: 3, 96, 512>}, {pipeline_mode = #tpu.pipeline_mode<synchronous>, transform_indices = @transform_3, window_bounds = array<i64: 1, 512>}, {pipeline_mode = #tpu.pipeline_mode<synchronous>, transform_indices = @transform_4, window_bounds = array<i64: 3, 8, 16>}, {pipeline_mode = #tpu.pipeline_mode<synchronous>, transform_indices = @transform_5, window_bounds = array<i64: 3, 512, 128>}, {pipeline_mode = #tpu.pipeline_mode<synchronous>, transform_indices = @transform_6, window_bounds = array<i64: 1, 128>}, {pipeline_mode = #tpu.pipeline_mode<synchronous>, transform_indices = @transform_7, window_bounds = array<i64: 5, 4, 8>}, {pipeline_mode = #tpu.pipeline_mode<synchronous>, transform_indices = @transform_8, window_bounds = array<i64: 5, 128, 64>}, {pipeline_mode = #tpu.pipeline_mode<synchronous>, transform_indices = @transform_9, window_bounds = array<i64: 1, 64>}, {pipeline_mode = #tpu.pipeline_mode<synchronous>, transform_indices = @transform_10, window_bounds = array<i64: 5, 2, 4>}, {pipeline_mode = #tpu.pipeline_mode<synchronous>, transform_indices = @transform_11, window_bounds = array<i64: 5, 64, 16>}, {pipeline_mode = #tpu.pipeline_mode<synchronous>, transform_indices = @transform_12, window_bounds = array<i64: 1, 16>}, {pipeline_mode = #tpu.pipeline_mode<synchronous>, transform_indices = @transform_13, window_bounds = array<i64: 2, 16, 32>}, {pipeline_mode = #tpu.pipeline_mode<synchronous>, transform_indices = @transform_14, window_bounds = array<i64: 1, 32>}, {transform_indices = @transform_15, window_bounds = array<i64: 1, 1, 32>}]} {
    %c0 = arith.constant 0 : index
    %c0_0 = arith.constant 0 : index
    %0 = vector.load %arg1[%c0, %c0_0] : memref<32x96xf32, #tpu.memory_space<vmem>>, vector<32x96xf32>
    %1 = arith.truncf %0 : vector<32x96xf32> to vector<32x96xbf16>
    %cst = arith.constant 0.000000e+00 : f32
    %2 = vector.broadcast %cst : f32 to vector<16x512xf32>
    %c0_1 = arith.constant 0 : index
    %c0_2 = arith.constant 0 : index
    %c0_3 = arith.constant 0 : index
    %3 = vector.load %arg2[%c0_1, %c0_2, %c0_3] : memref<3x16x32xbf16, #tpu.memory_space<vmem>>, vector<1x16x32xbf16>
    %4 = vector.shape_cast %3 : vector<1x16x32xbf16> to vector<16x32xbf16>
    %cst_4 = arith.constant dense<0.000000e+00> : vector<16x96xf32>
    %5 = tpu.matmul %4, %1, %cst_4 {dimension_numbers = #tpu.dot_dimension_numbers<[1], [0], [0], [1], [0, 0, 1, 1], [], []>} : vector<16x32xbf16>, vector<32x96xbf16>, vector<16x96xf32> -> vector<16x96xf32>
    %6 = arith.truncf %5 : vector<16x96xf32> to vector<16x96xbf16>
    %c0_5 = arith.constant 0 : index
    %c0_6 = arith.constant 0 : index
    %c0_7 = arith.constant 0 : index
    %7 = vector.load %arg3[%c0_5, %c0_6, %c0_7] : memref<3x96x512xbf16, #tpu.memory_space<vmem>>, vector<1x96x512xbf16>
    %8 = vector.shape_cast %7 : vector<1x96x512xbf16> to vector<96x512xbf16>
    %cst_8 = arith.constant dense<0.000000e+00> : vector<16x512xf32>
    %9 = tpu.matmul %6, %8, %cst_8 {dimension_numbers = #tpu.dot_dimension_numbers<[1], [0], [0], [1], [0, 0, 1, 1], [], []>} : vector<16x96xbf16>, vector<96x512xbf16>, vector<16x512xf32> -> vector<16x512xf32>
    %10 = arith.addf %2, %9 : vector<16x512xf32>
    %c1 = arith.constant 1 : index
    %c0_9 = arith.constant 0 : index
    %c0_10 = arith.constant 0 : index
    %11 = vector.load %arg2[%c1, %c0_9, %c0_10] : memref<3x16x32xbf16, #tpu.memory_space<vmem>>, vector<1x16x32xbf16>
    %12 = vector.shape_cast %11 : vector<1x16x32xbf16> to vector<16x32xbf16>
    %cst_11 = arith.constant dense<0.000000e+00> : vector<16x96xf32>
    %13 = tpu.matmul %12, %1, %cst_11 {dimension_numbers = #tpu.dot_dimension_numbers<[1], [0], [0], [1], [0, 0, 1, 1], [], []>} : vector<16x32xbf16>, vector<32x96xbf16>, vector<16x96xf32> -> vector<16x96xf32>
    %14 = arith.truncf %13 : vector<16x96xf32> to vector<16x96xbf16>
    %c1_12 = arith.constant 1 : index
    %c0_13 = arith.constant 0 : index
    %c0_14 = arith.constant 0 : index
    %15 = vector.load %arg3[%c1_12, %c0_13, %c0_14] : memref<3x96x512xbf16, #tpu.memory_space<vmem>>, vector<1x96x512xbf16>
    %16 = vector.shape_cast %15 : vector<1x96x512xbf16> to vector<96x512xbf16>
    %cst_15 = arith.constant dense<0.000000e+00> : vector<16x512xf32>
    %17 = tpu.matmul %14, %16, %cst_15 {dimension_numbers = #tpu.dot_dimension_numbers<[1], [0], [0], [1], [0, 0, 1, 1], [], []>} : vector<16x96xbf16>, vector<96x512xbf16>, vector<16x512xf32> -> vector<16x512xf32>
    %18 = arith.addf %10, %17 : vector<16x512xf32>
    %c2 = arith.constant 2 : index
    %c0_16 = arith.constant 0 : index
    %c0_17 = arith.constant 0 : index
    %19 = vector.load %arg2[%c2, %c0_16, %c0_17] : memref<3x16x32xbf16, #tpu.memory_space<vmem>>, vector<1x16x32xbf16>
    %20 = vector.shape_cast %19 : vector<1x16x32xbf16> to vector<16x32xbf16>
    %cst_18 = arith.constant dense<0.000000e+00> : vector<16x96xf32>
    %21 = tpu.matmul %20, %1, %cst_18 {dimension_numbers = #tpu.dot_dimension_numbers<[1], [0], [0], [1], [0, 0, 1, 1], [], []>} : vector<16x32xbf16>, vector<32x96xbf16>, vector<16x96xf32> -> vector<16x96xf32>
    %22 = arith.truncf %21 : vector<16x96xf32> to vector<16x96xbf16>
    %c2_19 = arith.constant 2 : index
    %c0_20 = arith.constant 0 : index
    %c0_21 = arith.constant 0 : index
    %23 = vector.load %arg3[%c2_19, %c0_20, %c0_21] : memref<3x96x512xbf16, #tpu.memory_space<vmem>>, vector<1x96x512xbf16>
    %24 = vector.shape_cast %23 : vector<1x96x512xbf16> to vector<96x512xbf16>
    %cst_22 = arith.constant dense<0.000000e+00> : vector<16x512xf32>
    %25 = tpu.matmul %22, %24, %cst_22 {dimension_numbers = #tpu.dot_dimension_numbers<[1], [0], [0], [1], [0, 0, 1, 1], [], []>} : vector<16x96xbf16>, vector<96x512xbf16>, vector<16x512xf32> -> vector<16x512xf32>
    %26 = arith.addf %18, %25 : vector<16x512xf32>
    %c0_23 = arith.constant 0 : index
    %c0_24 = arith.constant 0 : index
    %27 = vector.load %arg4[%c0_23, %c0_24] : memref<1x512xf32, #tpu.memory_space<vmem>>, vector<1x512xf32>
    %28 = vector.broadcast %27 : vector<1x512xf32> to vector<16x512xf32>
    %29 = arith.addf %26, %28 : vector<16x512xf32>
    %cst_25 = arith.constant 0.000000e+00 : f32
    %30 = vector.broadcast %cst_25 : f32 to vector<16x512xf32>
    %31 = arith.maximumf %29, %30 : vector<16x512xf32>
    %32 = arith.truncf %31 : vector<16x512xf32> to vector<16x512xbf16>
    %cst_26 = arith.constant 0.000000e+00 : f32
    %33 = vector.broadcast %cst_26 : f32 to vector<8x128xf32>
    %c0_27 = arith.constant 0 : index
    %c0_28 = arith.constant 0 : index
    %c0_29 = arith.constant 0 : index
    %34 = vector.load %arg5[%c0_27, %c0_28, %c0_29] : memref<3x8x16xbf16, #tpu.memory_space<vmem>>, vector<1x8x16xbf16>
    %35 = vector.shape_cast %34 : vector<1x8x16xbf16> to vector<8x16xbf16>
    %cst_30 = arith.constant dense<0.000000e+00> : vector<8x512xf32>
    %36 = tpu.matmul %35, %32, %cst_30 {dimension_numbers = #tpu.dot_dimension_numbers<[1], [0], [0], [1], [0, 0, 1, 1], [], []>} : vector<8x16xbf16>, vector<16x512xbf16>, vector<8x512xf32> -> vector<8x512xf32>
    %37 = arith.truncf %36 : vector<8x512xf32> to vector<8x512xbf16>
    %c0_31 = arith.constant 0 : index
    %c0_32 = arith.constant 0 : index
    %c0_33 = arith.constant 0 : index
    %38 = vector.load %arg6[%c0_31, %c0_32, %c0_33] : memref<3x512x128xbf16, #tpu.memory_space<vmem>>, vector<1x512x128xbf16>
    %39 = vector.shape_cast %38 : vector<1x512x128xbf16> to vector<512x128xbf16>
    %cst_34 = arith.constant dense<0.000000e+00> : vector<8x128xf32>
    %40 = tpu.matmul %37, %39, %cst_34 {dimension_numbers = #tpu.dot_dimension_numbers<[1], [0], [0], [1], [0, 0, 1, 1], [], []>} : vector<8x512xbf16>, vector<512x128xbf16>, vector<8x128xf32> -> vector<8x128xf32>
    %41 = arith.addf %33, %40 : vector<8x128xf32>
    %c1_35 = arith.constant 1 : index
    %c0_36 = arith.constant 0 : index
    %c0_37 = arith.constant 0 : index
    %42 = vector.load %arg5[%c1_35, %c0_36, %c0_37] : memref<3x8x16xbf16, #tpu.memory_space<vmem>>, vector<1x8x16xbf16>
    %43 = vector.shape_cast %42 : vector<1x8x16xbf16> to vector<8x16xbf16>
    %cst_38 = arith.constant dense<0.000000e+00> : vector<8x512xf32>
    %44 = tpu.matmul %43, %32, %cst_38 {dimension_numbers = #tpu.dot_dimension_numbers<[1], [0], [0], [1], [0, 0, 1, 1], [], []>} : vector<8x16xbf16>, vector<16x512xbf16>, vector<8x512xf32> -> vector<8x512xf32>
    %45 = arith.truncf %44 : vector<8x512xf32> to vector<8x512xbf16>
    %c1_39 = arith.constant 1 : index
    %c0_40 = arith.constant 0 : index
    %c0_41 = arith.constant 0 : index
    %46 = vector.load %arg6[%c1_39, %c0_40, %c0_41] : memref<3x512x128xbf16, #tpu.memory_space<vmem>>, vector<1x512x128xbf16>
    %47 = vector.shape_cast %46 : vector<1x512x128xbf16> to vector<512x128xbf16>
    %cst_42 = arith.constant dense<0.000000e+00> : vector<8x128xf32>
    %48 = tpu.matmul %45, %47, %cst_42 {dimension_numbers = #tpu.dot_dimension_numbers<[1], [0], [0], [1], [0, 0, 1, 1], [], []>} : vector<8x512xbf16>, vector<512x128xbf16>, vector<8x128xf32> -> vector<8x128xf32>
    %49 = arith.addf %41, %48 : vector<8x128xf32>
    %c2_43 = arith.constant 2 : index
    %c0_44 = arith.constant 0 : index
    %c0_45 = arith.constant 0 : index
    %50 = vector.load %arg5[%c2_43, %c0_44, %c0_45] : memref<3x8x16xbf16, #tpu.memory_space<vmem>>, vector<1x8x16xbf16>
    %51 = vector.shape_cast %50 : vector<1x8x16xbf16> to vector<8x16xbf16>
    %cst_46 = arith.constant dense<0.000000e+00> : vector<8x512xf32>
    %52 = tpu.matmul %51, %32, %cst_46 {dimension_numbers = #tpu.dot_dimension_numbers<[1], [0], [0], [1], [0, 0, 1, 1], [], []>} : vector<8x16xbf16>, vector<16x512xbf16>, vector<8x512xf32> -> vector<8x512xf32>
    %53 = arith.truncf %52 : vector<8x512xf32> to vector<8x512xbf16>
    %c2_47 = arith.constant 2 : index
    %c0_48 = arith.constant 0 : index
    %c0_49 = arith.constant 0 : index
    %54 = vector.load %arg6[%c2_47, %c0_48, %c0_49] : memref<3x512x128xbf16, #tpu.memory_space<vmem>>, vector<1x512x128xbf16>
    %55 = vector.shape_cast %54 : vector<1x512x128xbf16> to vector<512x128xbf16>
    %cst_50 = arith.constant dense<0.000000e+00> : vector<8x128xf32>
    %56 = tpu.matmul %53, %55, %cst_50 {dimension_numbers = #tpu.dot_dimension_numbers<[1], [0], [0], [1], [0, 0, 1, 1], [], []>} : vector<8x512xbf16>, vector<512x128xbf16>, vector<8x128xf32> -> vector<8x128xf32>
    %57 = arith.addf %49, %56 : vector<8x128xf32>
    %c0_51 = arith.constant 0 : index
    %c0_52 = arith.constant 0 : index
    %58 = vector.load %arg7[%c0_51, %c0_52] : memref<1x128xf32, #tpu.memory_space<vmem>>, vector<1x128xf32>
    %59 = vector.broadcast %58 : vector<1x128xf32> to vector<8x128xf32>
    %60 = arith.addf %57, %59 : vector<8x128xf32>
    %cst_53 = arith.constant 0.000000e+00 : f32
    %61 = vector.broadcast %cst_53 : f32 to vector<8x128xf32>
    %62 = arith.maximumf %60, %61 : vector<8x128xf32>
    %63 = arith.truncf %62 : vector<8x128xf32> to vector<8x128xbf16>
    %cst_54 = arith.constant 0.000000e+00 : f32
    %64 = vector.broadcast %cst_54 : f32 to vector<4x64xf32>
    %c0_55 = arith.constant 0 : index
    %c0_56 = arith.constant 0 : index
    %c0_57 = arith.constant 0 : index
    %65 = vector.load %arg8[%c0_55, %c0_56, %c0_57] : memref<5x4x8xbf16, #tpu.memory_space<vmem>>, vector<1x4x8xbf16>
    %66 = vector.shape_cast %65 : vector<1x4x8xbf16> to vector<4x8xbf16>
    %cst_58 = arith.constant dense<0.000000e+00> : vector<4x128xf32>
    %67 = tpu.matmul %66, %63, %cst_58 {dimension_numbers = #tpu.dot_dimension_numbers<[1], [0], [0], [1], [0, 0, 1, 1], [], []>} : vector<4x8xbf16>, vector<8x128xbf16>, vector<4x128xf32> -> vector<4x128xf32>
    %68 = arith.truncf %67 : vector<4x128xf32> to vector<4x128xbf16>
    %c0_59 = arith.constant 0 : index
    %c0_60 = arith.constant 0 : index
    %c0_61 = arith.constant 0 : index
    %69 = vector.load %arg9[%c0_59, %c0_60, %c0_61] : memref<5x128x64xbf16, #tpu.memory_space<vmem>>, vector<1x128x64xbf16>
    %70 = vector.shape_cast %69 : vector<1x128x64xbf16> to vector<128x64xbf16>
    %cst_62 = arith.constant dense<0.000000e+00> : vector<4x64xf32>
    %71 = tpu.matmul %68, %70, %cst_62 {dimension_numbers = #tpu.dot_dimension_numbers<[1], [0], [0], [1], [0, 0, 1, 1], [], []>} : vector<4x128xbf16>, vector<128x64xbf16>, vector<4x64xf32> -> vector<4x64xf32>
    %72 = arith.addf %64, %71 : vector<4x64xf32>
    %c1_63 = arith.constant 1 : index
    %c0_64 = arith.constant 0 : index
    %c0_65 = arith.constant 0 : index
    %73 = vector.load %arg8[%c1_63, %c0_64, %c0_65] : memref<5x4x8xbf16, #tpu.memory_space<vmem>>, vector<1x4x8xbf16>
    %74 = vector.shape_cast %73 : vector<1x4x8xbf16> to vector<4x8xbf16>
    %cst_66 = arith.constant dense<0.000000e+00> : vector<4x128xf32>
    %75 = tpu.matmul %74, %63, %cst_66 {dimension_numbers = #tpu.dot_dimension_numbers<[1], [0], [0], [1], [0, 0, 1, 1], [], []>} : vector<4x8xbf16>, vector<8x128xbf16>, vector<4x128xf32> -> vector<4x128xf32>
    %76 = arith.truncf %75 : vector<4x128xf32> to vector<4x128xbf16>
    %c1_67 = arith.constant 1 : index
    %c0_68 = arith.constant 0 : index
    %c0_69 = arith.constant 0 : index
    %77 = vector.load %arg9[%c1_67, %c0_68, %c0_69] : memref<5x128x64xbf16, #tpu.memory_space<vmem>>, vector<1x128x64xbf16>
    %78 = vector.shape_cast %77 : vector<1x128x64xbf16> to vector<128x64xbf16>
    %cst_70 = arith.constant dense<0.000000e+00> : vector<4x64xf32>
    %79 = tpu.matmul %76, %78, %cst_70 {dimension_numbers = #tpu.dot_dimension_numbers<[1], [0], [0], [1], [0, 0, 1, 1], [], []>} : vector<4x128xbf16>, vector<128x64xbf16>, vector<4x64xf32> -> vector<4x64xf32>
    %80 = arith.addf %72, %79 : vector<4x64xf32>
    %c2_71 = arith.constant 2 : index
    %c0_72 = arith.constant 0 : index
    %c0_73 = arith.constant 0 : index
    %81 = vector.load %arg8[%c2_71, %c0_72, %c0_73] : memref<5x4x8xbf16, #tpu.memory_space<vmem>>, vector<1x4x8xbf16>
    %82 = vector.shape_cast %81 : vector<1x4x8xbf16> to vector<4x8xbf16>
    %cst_74 = arith.constant dense<0.000000e+00> : vector<4x128xf32>
    %83 = tpu.matmul %82, %63, %cst_74 {dimension_numbers = #tpu.dot_dimension_numbers<[1], [0], [0], [1], [0, 0, 1, 1], [], []>} : vector<4x8xbf16>, vector<8x128xbf16>, vector<4x128xf32> -> vector<4x128xf32>
    %84 = arith.truncf %83 : vector<4x128xf32> to vector<4x128xbf16>
    %c2_75 = arith.constant 2 : index
    %c0_76 = arith.constant 0 : index
    %c0_77 = arith.constant 0 : index
    %85 = vector.load %arg9[%c2_75, %c0_76, %c0_77] : memref<5x128x64xbf16, #tpu.memory_space<vmem>>, vector<1x128x64xbf16>
    %86 = vector.shape_cast %85 : vector<1x128x64xbf16> to vector<128x64xbf16>
    %cst_78 = arith.constant dense<0.000000e+00> : vector<4x64xf32>
    %87 = tpu.matmul %84, %86, %cst_78 {dimension_numbers = #tpu.dot_dimension_numbers<[1], [0], [0], [1], [0, 0, 1, 1], [], []>} : vector<4x128xbf16>, vector<128x64xbf16>, vector<4x64xf32> -> vector<4x64xf32>
    %88 = arith.addf %80, %87 : vector<4x64xf32>
    %c3 = arith.constant 3 : index
    %c0_79 = arith.constant 0 : index
    %c0_80 = arith.constant 0 : index
    %89 = vector.load %arg8[%c3, %c0_79, %c0_80] : memref<5x4x8xbf16, #tpu.memory_space<vmem>>, vector<1x4x8xbf16>
    %90 = vector.shape_cast %89 : vector<1x4x8xbf16> to vector<4x8xbf16>
    %cst_81 = arith.constant dense<0.000000e+00> : vector<4x128xf32>
    %91 = tpu.matmul %90, %63, %cst_81 {dimension_numbers = #tpu.dot_dimension_numbers<[1], [0], [0], [1], [0, 0, 1, 1], [], []>} : vector<4x8xbf16>, vector<8x128xbf16>, vector<4x128xf32> -> vector<4x128xf32>
    %92 = arith.truncf %91 : vector<4x128xf32> to vector<4x128xbf16>
    %c3_82 = arith.constant 3 : index
    %c0_83 = arith.constant 0 : index
    %c0_84 = arith.constant 0 : index
    %93 = vector.load %arg9[%c3_82, %c0_83, %c0_84] : memref<5x128x64xbf16, #tpu.memory_space<vmem>>, vector<1x128x64xbf16>
    %94 = vector.shape_cast %93 : vector<1x128x64xbf16> to vector<128x64xbf16>
    %cst_85 = arith.constant dense<0.000000e+00> : vector<4x64xf32>
    %95 = tpu.matmul %92, %94, %cst_85 {dimension_numbers = #tpu.dot_dimension_numbers<[1], [0], [0], [1], [0, 0, 1, 1], [], []>} : vector<4x128xbf16>, vector<128x64xbf16>, vector<4x64xf32> -> vector<4x64xf32>
    %96 = arith.addf %88, %95 : vector<4x64xf32>
    %c4 = arith.constant 4 : index
    %c0_86 = arith.constant 0 : index
    %c0_87 = arith.constant 0 : index
    %97 = vector.load %arg8[%c4, %c0_86, %c0_87] : memref<5x4x8xbf16, #tpu.memory_space<vmem>>, vector<1x4x8xbf16>
    %98 = vector.shape_cast %97 : vector<1x4x8xbf16> to vector<4x8xbf16>
    %cst_88 = arith.constant dense<0.000000e+00> : vector<4x128xf32>
    %99 = tpu.matmul %98, %63, %cst_88 {dimension_numbers = #tpu.dot_dimension_numbers<[1], [0], [0], [1], [0, 0, 1, 1], [], []>} : vector<4x8xbf16>, vector<8x128xbf16>, vector<4x128xf32> -> vector<4x128xf32>
    %100 = arith.truncf %99 : vector<4x128xf32> to vector<4x128xbf16>
    %c4_89 = arith.constant 4 : index
    %c0_90 = arith.constant 0 : index
    %c0_91 = arith.constant 0 : index
    %101 = vector.load %arg9[%c4_89, %c0_90, %c0_91] : memref<5x128x64xbf16, #tpu.memory_space<vmem>>, vector<1x128x64xbf16>
    %102 = vector.shape_cast %101 : vector<1x128x64xbf16> to vector<128x64xbf16>
    %cst_92 = arith.constant dense<0.000000e+00> : vector<4x64xf32>
    %103 = tpu.matmul %100, %102, %cst_92 {dimension_numbers = #tpu.dot_dimension_numbers<[1], [0], [0], [1], [0, 0, 1, 1], [], []>} : vector<4x128xbf16>, vector<128x64xbf16>, vector<4x64xf32> -> vector<4x64xf32>
    %104 = arith.addf %96, %103 : vector<4x64xf32>
    %c0_93 = arith.constant 0 : index
    %c0_94 = arith.constant 0 : index
    %105 = vector.load %arg10[%c0_93, %c0_94] : memref<1x64xf32, #tpu.memory_space<vmem>>, vector<1x64xf32>
    %106 = vector.broadcast %105 : vector<1x64xf32> to vector<4x64xf32>
    %107 = arith.addf %104, %106 : vector<4x64xf32>
    %cst_95 = arith.constant 0.000000e+00 : f32
    %108 = vector.broadcast %cst_95 : f32 to vector<4x64xf32>
    %109 = arith.maximumf %107, %108 : vector<4x64xf32>
    %110 = arith.truncf %109 : vector<4x64xf32> to vector<4x64xbf16>
    %cst_96 = arith.constant 0.000000e+00 : f32
    %111 = vector.broadcast %cst_96 : f32 to vector<2x16xf32>
    %c0_97 = arith.constant 0 : index
    %c0_98 = arith.constant 0 : index
    %c0_99 = arith.constant 0 : index
    %112 = vector.load %arg11[%c0_97, %c0_98, %c0_99] : memref<5x2x4xbf16, #tpu.memory_space<vmem>>, vector<1x2x4xbf16>
    %113 = vector.shape_cast %112 : vector<1x2x4xbf16> to vector<2x4xbf16>
    %cst_100 = arith.constant dense<0.000000e+00> : vector<2x64xf32>
    %114 = tpu.matmul %113, %110, %cst_100 {dimension_numbers = #tpu.dot_dimension_numbers<[1], [0], [0], [1], [0, 0, 1, 1], [], []>} : vector<2x4xbf16>, vector<4x64xbf16>, vector<2x64xf32> -> vector<2x64xf32>
    %115 = arith.truncf %114 : vector<2x64xf32> to vector<2x64xbf16>
    %c0_101 = arith.constant 0 : index
    %c0_102 = arith.constant 0 : index
    %c0_103 = arith.constant 0 : index
    %116 = vector.load %arg12[%c0_101, %c0_102, %c0_103] : memref<5x64x16xbf16, #tpu.memory_space<vmem>>, vector<1x64x16xbf16>
    %117 = vector.shape_cast %116 : vector<1x64x16xbf16> to vector<64x16xbf16>
    %cst_104 = arith.constant dense<0.000000e+00> : vector<2x16xf32>
    %118 = tpu.matmul %115, %117, %cst_104 {dimension_numbers = #tpu.dot_dimension_numbers<[1], [0], [0], [1], [0, 0, 1, 1], [], []>} : vector<2x64xbf16>, vector<64x16xbf16>, vector<2x16xf32> -> vector<2x16xf32>
    %119 = arith.addf %111, %118 : vector<2x16xf32>
    %c1_105 = arith.constant 1 : index
    %c0_106 = arith.constant 0 : index
    %c0_107 = arith.constant 0 : index
    %120 = vector.load %arg11[%c1_105, %c0_106, %c0_107] : memref<5x2x4xbf16, #tpu.memory_space<vmem>>, vector<1x2x4xbf16>
    %121 = vector.shape_cast %120 : vector<1x2x4xbf16> to vector<2x4xbf16>
    %cst_108 = arith.constant dense<0.000000e+00> : vector<2x64xf32>
    %122 = tpu.matmul %121, %110, %cst_108 {dimension_numbers = #tpu.dot_dimension_numbers<[1], [0], [0], [1], [0, 0, 1, 1], [], []>} : vector<2x4xbf16>, vector<4x64xbf16>, vector<2x64xf32> -> vector<2x64xf32>
    %123 = arith.truncf %122 : vector<2x64xf32> to vector<2x64xbf16>
    %c1_109 = arith.constant 1 : index
    %c0_110 = arith.constant 0 : index
    %c0_111 = arith.constant 0 : index
    %124 = vector.load %arg12[%c1_109, %c0_110, %c0_111] : memref<5x64x16xbf16, #tpu.memory_space<vmem>>, vector<1x64x16xbf16>
    %125 = vector.shape_cast %124 : vector<1x64x16xbf16> to vector<64x16xbf16>
    %cst_112 = arith.constant dense<0.000000e+00> : vector<2x16xf32>
    %126 = tpu.matmul %123, %125, %cst_112 {dimension_numbers = #tpu.dot_dimension_numbers<[1], [0], [0], [1], [0, 0, 1, 1], [], []>} : vector<2x64xbf16>, vector<64x16xbf16>, vector<2x16xf32> -> vector<2x16xf32>
    %127 = arith.addf %119, %126 : vector<2x16xf32>
    %c2_113 = arith.constant 2 : index
    %c0_114 = arith.constant 0 : index
    %c0_115 = arith.constant 0 : index
    %128 = vector.load %arg11[%c2_113, %c0_114, %c0_115] : memref<5x2x4xbf16, #tpu.memory_space<vmem>>, vector<1x2x4xbf16>
    %129 = vector.shape_cast %128 : vector<1x2x4xbf16> to vector<2x4xbf16>
    %cst_116 = arith.constant dense<0.000000e+00> : vector<2x64xf32>
    %130 = tpu.matmul %129, %110, %cst_116 {dimension_numbers = #tpu.dot_dimension_numbers<[1], [0], [0], [1], [0, 0, 1, 1], [], []>} : vector<2x4xbf16>, vector<4x64xbf16>, vector<2x64xf32> -> vector<2x64xf32>
    %131 = arith.truncf %130 : vector<2x64xf32> to vector<2x64xbf16>
    %c2_117 = arith.constant 2 : index
    %c0_118 = arith.constant 0 : index
    %c0_119 = arith.constant 0 : index
    %132 = vector.load %arg12[%c2_117, %c0_118, %c0_119] : memref<5x64x16xbf16, #tpu.memory_space<vmem>>, vector<1x64x16xbf16>
    %133 = vector.shape_cast %132 : vector<1x64x16xbf16> to vector<64x16xbf16>
    %cst_120 = arith.constant dense<0.000000e+00> : vector<2x16xf32>
    %134 = tpu.matmul %131, %133, %cst_120 {dimension_numbers = #tpu.dot_dimension_numbers<[1], [0], [0], [1], [0, 0, 1, 1], [], []>} : vector<2x64xbf16>, vector<64x16xbf16>, vector<2x16xf32> -> vector<2x16xf32>
    %135 = arith.addf %127, %134 : vector<2x16xf32>
    %c3_121 = arith.constant 3 : index
    %c0_122 = arith.constant 0 : index
    %c0_123 = arith.constant 0 : index
    %136 = vector.load %arg11[%c3_121, %c0_122, %c0_123] : memref<5x2x4xbf16, #tpu.memory_space<vmem>>, vector<1x2x4xbf16>
    %137 = vector.shape_cast %136 : vector<1x2x4xbf16> to vector<2x4xbf16>
    %cst_124 = arith.constant dense<0.000000e+00> : vector<2x64xf32>
    %138 = tpu.matmul %137, %110, %cst_124 {dimension_numbers = #tpu.dot_dimension_numbers<[1], [0], [0], [1], [0, 0, 1, 1], [], []>} : vector<2x4xbf16>, vector<4x64xbf16>, vector<2x64xf32> -> vector<2x64xf32>
    %139 = arith.truncf %138 : vector<2x64xf32> to vector<2x64xbf16>
    %c3_125 = arith.constant 3 : index
    %c0_126 = arith.constant 0 : index
    %c0_127 = arith.constant 0 : index
    %140 = vector.load %arg12[%c3_125, %c0_126, %c0_127] : memref<5x64x16xbf16, #tpu.memory_space<vmem>>, vector<1x64x16xbf16>
    %141 = vector.shape_cast %140 : vector<1x64x16xbf16> to vector<64x16xbf16>
    %cst_128 = arith.constant dense<0.000000e+00> : vector<2x16xf32>
    %142 = tpu.matmul %139, %141, %cst_128 {dimension_numbers = #tpu.dot_dimension_numbers<[1], [0], [0], [1], [0, 0, 1, 1], [], []>} : vector<2x64xbf16>, vector<64x16xbf16>, vector<2x16xf32> -> vector<2x16xf32>
    %143 = arith.addf %135, %142 : vector<2x16xf32>
    %c4_129 = arith.constant 4 : index
    %c0_130 = arith.constant 0 : index
    %c0_131 = arith.constant 0 : index
    %144 = vector.load %arg11[%c4_129, %c0_130, %c0_131] : memref<5x2x4xbf16, #tpu.memory_space<vmem>>, vector<1x2x4xbf16>
    %145 = vector.shape_cast %144 : vector<1x2x4xbf16> to vector<2x4xbf16>
    %cst_132 = arith.constant dense<0.000000e+00> : vector<2x64xf32>
    %146 = tpu.matmul %145, %110, %cst_132 {dimension_numbers = #tpu.dot_dimension_numbers<[1], [0], [0], [1], [0, 0, 1, 1], [], []>} : vector<2x4xbf16>, vector<4x64xbf16>, vector<2x64xf32> -> vector<2x64xf32>
    %147 = arith.truncf %146 : vector<2x64xf32> to vector<2x64xbf16>
    %c4_133 = arith.constant 4 : index
    %c0_134 = arith.constant 0 : index
    %c0_135 = arith.constant 0 : index
    %148 = vector.load %arg12[%c4_133, %c0_134, %c0_135] : memref<5x64x16xbf16, #tpu.memory_space<vmem>>, vector<1x64x16xbf16>
    %149 = vector.shape_cast %148 : vector<1x64x16xbf16> to vector<64x16xbf16>
    %cst_136 = arith.constant dense<0.000000e+00> : vector<2x16xf32>
    %150 = tpu.matmul %147, %149, %cst_136 {dimension_numbers = #tpu.dot_dimension_numbers<[1], [0], [0], [1], [0, 0, 1, 1], [], []>} : vector<2x64xbf16>, vector<64x16xbf16>, vector<2x16xf32> -> vector<2x16xf32>
    %151 = arith.addf %143, %150 : vector<2x16xf32>
    %c0_137 = arith.constant 0 : index
    %c0_138 = arith.constant 0 : index
    %152 = vector.load %arg13[%c0_137, %c0_138] : memref<1x16xf32, #tpu.memory_space<vmem>>, vector<1x16xf32>
    %153 = vector.broadcast %152 : vector<1x16xf32> to vector<2x16xf32>
    %154 = arith.addf %151, %153 : vector<2x16xf32>
    %cst_139 = arith.constant 0.000000e+00 : f32
    %155 = vector.broadcast %cst_139 : f32 to vector<2x16xf32>
    %156 = arith.maximumf %154, %155 : vector<2x16xf32>
    %cst_140 = arith.constant 0.000000e+00 : f32
    %157 = vector.broadcast %cst_140 : f32 to vector<1x32xf32>
    %158 = vector.extract_strided_slice %156 {offsets = [0, 0], sizes = [1, 16], strides = [1, 1]} : vector<2x16xf32> to vector<1x16xf32>
    %159 = arith.truncf %158 : vector<1x16xf32> to vector<1x16xbf16>
    %c0_141 = arith.constant 0 : index
    %c0_142 = arith.constant 0 : index
    %c0_143 = arith.constant 0 : index
    %160 = vector.load %arg14[%c0_141, %c0_142, %c0_143] : memref<2x16x32xbf16, #tpu.memory_space<vmem>>, vector<1x16x32xbf16>
    %161 = vector.shape_cast %160 : vector<1x16x32xbf16> to vector<16x32xbf16>
    %cst_144 = arith.constant dense<0.000000e+00> : vector<1x32xf32>
    %162 = tpu.matmul %159, %161, %cst_144 {dimension_numbers = #tpu.dot_dimension_numbers<[1], [0], [0], [1], [0, 0, 1, 1], [], []>} : vector<1x16xbf16>, vector<16x32xbf16>, vector<1x32xf32> -> vector<1x32xf32>
    %163 = arith.addf %157, %162 : vector<1x32xf32>
    %164 = vector.extract_strided_slice %156 {offsets = [1, 0], sizes = [1, 16], strides = [1, 1]} : vector<2x16xf32> to vector<1x16xf32>
    %165 = arith.truncf %164 : vector<1x16xf32> to vector<1x16xbf16>
    %c1_145 = arith.constant 1 : index
    %c0_146 = arith.constant 0 : index
    %c0_147 = arith.constant 0 : index
    %166 = vector.load %arg14[%c1_145, %c0_146, %c0_147] : memref<2x16x32xbf16, #tpu.memory_space<vmem>>, vector<1x16x32xbf16>
    %167 = vector.shape_cast %166 : vector<1x16x32xbf16> to vector<16x32xbf16>
    %cst_148 = arith.constant dense<0.000000e+00> : vector<1x32xf32>
    %168 = tpu.matmul %165, %167, %cst_148 {dimension_numbers = #tpu.dot_dimension_numbers<[1], [0], [0], [1], [0, 0, 1, 1], [], []>} : vector<1x16xbf16>, vector<16x32xbf16>, vector<1x32xf32> -> vector<1x32xf32>
    %169 = arith.addf %163, %168 : vector<1x32xf32>
    %c0_149 = arith.constant 0 : index
    %c0_150 = arith.constant 0 : index
    %170 = vector.load %arg15[%c0_149, %c0_150] : memref<1x32xf32, #tpu.memory_space<vmem>>, vector<1x32xf32>
    %171 = arith.addf %169, %170 : vector<1x32xf32>
    %172 = tpu.iota {dimensions = array<i32: 1>} : vector<1x32xi32>
    %c16_i32 = arith.constant 16 : i32
    %173 = vector.broadcast %c16_i32 : i32 to vector<1x32xi32>
    %174 = arith.cmpi slt, %172, %173 : vector<1x32xi32>
    %cst_151 = arith.constant 0.000000e+00 : f32
    %175 = vector.broadcast %cst_151 : f32 to vector<1x32xf32>
    %176 = arith.maximumf %171, %175 : vector<1x32xf32>
    %177 = vector.broadcast %cst_151 : f32 to vector<1x32xf32>
    %178 = arith.subf %171, %177 : vector<1x32xf32>
    %179 = arith.cmpf one, %178, %178 : vector<1x32xf32>
    %180 = vector.broadcast %cst_151 : f32 to vector<1x32xf32>
    %181 = arith.addf %171, %180 : vector<1x32xf32>
    %182 = math.absf %178 : vector<1x32xf32>
    %cst_152 = arith.constant 0.000000e+00 : f32
    %183 = vector.broadcast %cst_152 : f32 to vector<1x32xf32>
    %184 = arith.subf %183, %182 : vector<1x32xf32>
    %185 = math.exp %184 : vector<1x32xf32>
    %186 = math.log1p %185 : vector<1x32xf32>
    %187 = arith.addf %176, %186 : vector<1x32xf32>
    %188 = arith.select %179, %181, %187 : vector<1x32xi1>, vector<1x32xf32>
    %189 = arith.select %174, %171, %188 : vector<1x32xi1>, vector<1x32xf32>
    %190 = vector.shape_cast %189 : vector<1x32xf32> to vector<1x1x32xf32>
    %c0_153 = arith.constant 0 : index
    %c0_154 = arith.constant 0 : index
    %c0_155 = arith.constant 0 : index
    %191 = vector.load %arg16[%c0_153, %c0_154, %c0_155] : memref<1x1x32xf32, #tpu.memory_space<vmem>>, vector<1x1x32xf32>
    tpu.vector_store %arg16[%c0_153, %c0_154, %c0_155], %190 {strides = array<i32>} : memref<1x1x32xf32, #tpu.memory_space<vmem>>, vector<1x1x32xf32>,
    return
  }
  func.func @transform_0(%arg0: i32) -> (i32, i32) {
    %c0_i32 = arith.constant 0 : i32
    %c0_i32_0 = arith.constant 0 : i32
    return %arg0, %c0_i32 : i32, i32
  }
  func.func @transform_1(%arg0: i32) -> (i32, i32, i32) {
    %c0_i32 = arith.constant 0 : i32
    %c0_i32_0 = arith.constant 0 : i32
    %c0_i32_1 = arith.constant 0 : i32
    %c0_i32_2 = arith.constant 0 : i32
    return %c0_i32, %c0_i32_0, %c0_i32_1 : i32, i32, i32
  }
  func.func @transform_2(%arg0: i32) -> (i32, i32, i32) {
    %c0_i32 = arith.constant 0 : i32
    %c0_i32_0 = arith.constant 0 : i32
    %c0_i32_1 = arith.constant 0 : i32
    %c0_i32_2 = arith.constant 0 : i32
    return %c0_i32, %c0_i32_0, %c0_i32_1 : i32, i32, i32
  }
  func.func @transform_3(%arg0: i32) -> (i32, i32) {
    %c0_i32 = arith.constant 0 : i32
    %c0_i32_0 = arith.constant 0 : i32
    %c0_i32_1 = arith.constant 0 : i32
    return %c0_i32, %c0_i32_0 : i32, i32
  }
  func.func @transform_4(%arg0: i32) -> (i32, i32, i32) {
    %c0_i32 = arith.constant 0 : i32
    %c0_i32_0 = arith.constant 0 : i32
    %c0_i32_1 = arith.constant 0 : i32
    %c0_i32_2 = arith.constant 0 : i32
    return %c0_i32, %c0_i32_0, %c0_i32_1 : i32, i32, i32
  }
  func.func @transform_5(%arg0: i32) -> (i32, i32, i32) {
    %c0_i32 = arith.constant 0 : i32
    %c0_i32_0 = arith.constant 0 : i32
    %c0_i32_1 = arith.constant 0 : i32
    %c0_i32_2 = arith.constant 0 : i32
    return %c0_i32, %c0_i32_0, %c0_i32_1 : i32, i32, i32
  }
  func.func @transform_6(%arg0: i32) -> (i32, i32) {
    %c0_i32 = arith.constant 0 : i32
    %c0_i32_0 = arith.constant 0 : i32
    %c0_i32_1 = arith.constant 0 : i32
    return %c0_i32, %c0_i32_0 : i32, i32
  }
  func.func @transform_7(%arg0: i32) -> (i32, i32, i32) {
    %c0_i32 = arith.constant 0 : i32
    %c0_i32_0 = arith.constant 0 : i32
    %c0_i32_1 = arith.constant 0 : i32
    %c0_i32_2 = arith.constant 0 : i32
    return %c0_i32, %c0_i32_0, %c0_i32_1 : i32, i32, i32
  }
  func.func @transform_8(%arg0: i32) -> (i32, i32, i32) {
    %c0_i32 = arith.constant 0 : i32
    %c0_i32_0 = arith.constant 0 : i32
    %c0_i32_1 = arith.constant 0 : i32
    %c0_i32_2 = arith.constant 0 : i32
    return %c0_i32, %c0_i32_0, %c0_i32_1 : i32, i32, i32
  }
  func.func @transform_9(%arg0: i32) -> (i32, i32) {
    %c0_i32 = arith.constant 0 : i32
    %c0_i32_0 = arith.constant 0 : i32
    %c0_i32_1 = arith.constant 0 : i32
    return %c0_i32, %c0_i32_0 : i32, i32
  }
  func.func @transform_10(%arg0: i32) -> (i32, i32, i32) {
    %c0_i32 = arith.constant 0 : i32
    %c0_i32_0 = arith.constant 0 : i32
    %c0_i32_1 = arith.constant 0 : i32
    %c0_i32_2 = arith.constant 0 : i32
    return %c0_i32, %c0_i32_0, %c0_i32_1 : i32, i32, i32
  }
  func.func @transform_11(%arg0: i32) -> (i32, i32, i32) {
    %c0_i32 = arith.constant 0 : i32
    %c0_i32_0 = arith.constant 0 : i32
    %c0_i32_1 = arith.constant 0 : i32
    %c0_i32_2 = arith.constant 0 : i32
    return %c0_i32, %c0_i32_0, %c0_i32_1 : i32, i32, i32
  }
  func.func @transform_12(%arg0: i32) -> (i32, i32) {
    %c0_i32 = arith.constant 0 : i32
    %c0_i32_0 = arith.constant 0 : i32
    %c0_i32_1 = arith.constant 0 : i32
    return %c0_i32, %c0_i32_0 : i32, i32
  }
  func.func @transform_13(%arg0: i32) -> (i32, i32, i32) {
    %c0_i32 = arith.constant 0 : i32
    %c0_i32_0 = arith.constant 0 : i32
    %c0_i32_1 = arith.constant 0 : i32
    %c0_i32_2 = arith.constant 0 : i32
    return %c0_i32, %c0_i32_0, %c0_i32_1 : i32, i32, i32
  }
  func.func @transform_14(%arg0: i32) -> (i32, i32) {
    %c0_i32 = arith.constant 0 : i32
    %c0_i32_0 = arith.constant 0 : i32
    %c0_i32_1 = arith.constant 0 : i32
    return %c0_i32, %c0_i32_0 : i32, i32
  }
  func.func @transform_15(%arg0: i32) -> (i32, i32, i32) {
    %c0_i32 = arith.constant 0 : i32
    %c0_i32_0 = arith.constant 0 : i32
    %c0_i32_1 = arith.constant 0 : i32
    return %arg0, %c0_i32, %c0_i32_0 : i32, i32, i32
  }
}

</mosaic_0001>

<llo_original>
// kernel: celeba_encoder_forward.1
$region0: #{celeba_encoder_forward.1}
  #allocation0 [shape = 'u32[]', space=smem, size = 0x4, offset = 0x4, fixed_abs, tag = 'smem constant byte address 0x4 - core index']
  #allocation1 [shape = 'u32[144,128]{1,0:T(1,128)}', space=vmem, size = 0x12000, scoped, tag = 'internal scratch']
  %s0 = inlined_call_operand.vmem [shape: f32[64,96], index: 0, kind: input, shape index: {}]
  %s1 = inlined_call_operand.vmem [shape: bf16[3,16,32], index: 1, kind: input, shape index: {}]
  %s2 = inlined_call_operand.vmem [shape: bf16[3,96,512], index: 2, kind: input, shape index: {}]
  %s3 = inlined_call_operand.hbm [shape: f32[1,512], index: 3, kind: input, shape index: {}]
  %s4 = inlined_call_operand.hbm [shape: bf16[3,8,16], index: 4, kind: input, shape index: {}]
  %s5 = inlined_call_operand.vmem [shape: bf16[3,512,128], index: 5, kind: input, shape index: {}]
  %s6 = inlined_call_operand.hbm [shape: f32[1,128], index: 6, kind: input, shape index: {}]
  %s7 = inlined_call_operand.hbm [shape: bf16[5,4,8], index: 7, kind: input, shape index: {}]
  %s8 = inlined_call_operand.vmem [shape: bf16[5,128,64], index: 8, kind: input, shape index: {}]
  %s9 = inlined_call_operand.hbm [shape: f32[1,64], index: 9, kind: input, shape index: {}]
  %s10 = inlined_call_operand.vmem [shape: bf16[5,2,4], index: 10, kind: input, shape index: {}]
  %s11 = inlined_call_operand.vmem [shape: bf16[5,64,16], index: 11, kind: input, shape index: {}]
  %s12 = inlined_call_operand.hbm [shape: f32[1,16], index: 12, kind: input, shape index: {}]
  %s13 = inlined_call_operand.vmem [shape: bf16[2,16,32], index: 13, kind: input, shape index: {}]
  %s14 = inlined_call_operand.hbm [shape: f32[1,32], index: 14, kind: input, shape index: {}]
  %s15 = inlined_call_operand.vmem [shape: f32[2,1,32], index: 15, kind: output, shape index: {}]
  %s16 = sld [smem:[#allocation0]]
  $region121: #{celeba_encoder_forward.1} parent=0
    _
  %s18 = ssub.s32 1, %s16
  %s19 = scalar_select 0, %s18, %s16
  $region1: #{celeba_encoder_forward.1} parent=0
    #allocation2 [shape = 'u8[2048]{0}', space=vmem, size = 0x800, scoped, tag = 'input window, operand 3, single buffered']
    #allocation3 [shape = 's32[2]{0}', space=sflag, size = 0x8, scoped, tag = 'scoped memory for celeba_encoder_forward.1']
    #allocation4 [shape = 'u8[6144]{0}', space=vmem, size = 0x1800, scoped, tag = 'input window, operand 4, single buffered']
    #allocation5 [shape = 's32[1]{0}', space=sflag, size = 0x4, scoped, tag = 'scoped memory for celeba_encoder_forward.1']
    #allocation6 [shape = 'u8[512]{0}', space=vmem, size = 0x400, scoped, tag = 'input window, operand 6, single buffered']
    #allocation7 [shape = 'u8[5120]{0}', space=vmem, size = 0x1400, scoped, tag = 'input window, operand 7, single buffered']
    #allocation8 [shape = 's32[1]{0}', space=sflag, size = 0x4, scoped, tag = 'scoped memory for celeba_encoder_forward.1']
    #allocation9 [shape = 'u8[512]{0}', space=vmem, size = 0x400, scoped, tag = 'input window, operand 9, single buffered']
    #allocation10 [shape = 'u8[512]{0}', space=vmem, size = 0x400, scoped, tag = 'input window, operand 12, single buffered']
    #allocation11 [shape = 's32[1]{0}', space=sflag, size = 0x4, scoped, tag = 'scoped memory for celeba_encoder_forward.1']
    #allocation12 [shape = 'u8[512]{0}', space=vmem, size = 0x400, scoped, tag = 'input window, operand 14, single buffered']
    %20 = vsyncpa [#allocation3], 0
    %21 = vsyncpa [#allocation5], 0
    %22 = vsyncpa [#allocation8], 0
    %23 = vsyncpa [#allocation11], 0
    loop: start=0, step=1, limit=4
    $region2: #{celeba_encoder_forward.1} parent=1 // loop_pre_header
      _
    $region3: #{celeba_encoder_forward.1} parent=1 // loop_header
      %s25 = sphi 0, %s29
      %p26 = scmp.ge.s32.totalorder %s25, 4
      %s35 = sphi 0, %s37
      %s38 = sphi 0, %s35
      %s39 = sphi 0, %s38
      %s55 = sphi 0, %s39
      %s59 = sphi 0, %s59
      %s61 = sphi 0, %s59
      %s62 = sphi 0, %s61
      %s76 = sphi 0, %s62
      %s80 = sphi 0, %s80
      %s82 = sphi 0, %s80
      %s83 = sphi 0, %s82
      %s97 = sphi 0, %s83
      %s101 = sphi 0, %s101
      %s103 = sphi 0, %s101
      %s104 = sphi 0, %s103
      %s118 = sphi 0, %s104
      %s122 = sphi 0, %s122
      %s124 = sphi 0, %s122
      %s125 = sphi 0, %s124
      %s139 = sphi 0, %s125
      %s143 = sphi 0, %s143
      %s145 = sphi 0, %s143
      %s146 = sphi 0, %s145
      %s160 = sphi 0, %s146
      %s164 = sphi 0, %s164
      %s166 = sphi 0, %s164
      %s167 = sphi 0, %s166
      %s181 = sphi 0, %s167
      %s185 = sphi 0, %s185
      %s187 = sphi 0, %s185
      %s188 = sphi 0, %s187
      %s202 = sphi 0, %s188
      %s206 = sphi 0, %s206
      %s208 = sphi 0, %s206
      %s209 = sphi 0, %s208
      %s223 = sphi 0, %s209
      %s227 = sphi 0, %s227
      %s229 = sphi 0, %s227
      %s230 = sphi 0, %s229
      %s244 = sphi 0, %s230
      %s248 = sphi 0, %s248
      %s250 = sphi 0, %s248
      %s251 = sphi 0, %s250
      %s265 = sphi 0, %s251
      %s269 = sphi 0, %s269
      %s271 = sphi 0, %s269
      %s272 = sphi 0, %s271
      %s286 = sphi 0, %s272
      %s290 = sphi 0, %s290
      %s292 = sphi 0, %s290
      %s293 = sphi 0, %s292
      %s307 = sphi 0, %s293
      %s311 = sphi 0, %s311
      %s313 = sphi 0, %s311
      %s314 = sphi 0, %s313
      %s328 = sphi 0, %s314
      %s332 = sphi 0, %s332
      %s334 = sphi 0, %s332
      %s335 = sphi 0, %s334
      %s349 = sphi 0, %s335
      %s355 = sphi 0, %s357
      %s358 = sphi 0, %s355
      %s359 = sphi 0, %s358
      %s375 = sphi 0, %s359
    $region4: #{celeba_encoder_forward.1} parent=1 // loop_header_branch
      %28 = sbr.rel (%p26) target = $region8
    $region5: #{celeba_encoder_forward.1} parent=1 // loop_body
      %s30 = ssub.s32 %s25, 1
      %s31 = ssub.s32 %s25, 2
      %s32 = sadd.s32 %s25, 1
      %s33 = ssub.s32 %s25, %s32
      %p34 = scmp.eq.s32.totalorder %s33, 0
      %s36 = sadd.s32 %s35, 1
      %s37 = scalar_select %p34, %s35, %s36
      %p40 = pneg %p34
      %p41 = scmp.eq.s32.totalorder %s25, 1
      %p42 = por %p40, %p41
      %p43 = scmp.ne.s32.totalorder %s35, %s38
      %p44 = scmp.eq.s32.totalorder %s25, 0
      %p45 = por %p43, %p44
      %p46 = scmp.ne.s32.totalorder %s35, %s38
      %p47 = scmp.eq.s32.totalorder %s30, 1
      %p48 = por %p46, %p47
      %p49 = scmp.ne.s32.totalorder %s38, %s39
      %p50 = scmp.eq.s32.totalorder %s30, 0
      %p51 = por %p49, %p50
      %p52 = scmp.ne.s32.totalorder %s38, %s39
      %p53 = scmp.eq.s32.totalorder %s31, 1
      %p54 = por %p52, %p53
      %p56 = scmp.ne.s32.totalorder %s39, %s55
      %p57 = scmp.eq.s32.totalorder %s31, 0
      %p58 = por %p56, %p57
      %s60 = sadd.s32 %s59, 1
      %p63 = scmp.eq.s32.totalorder %s25, 1
      %p64 = scmp.ne.s32.totalorder %s59, %s61
      %p65 = scmp.eq.s32.totalorder %s25, 0
      %p66 = por %p64, %p65
      %p67 = scmp.ne.s32.totalorder %s59, %s61
      %p68 = scmp.eq.s32.totalorder %s30, 1
      %p69 = por %p67, %p68
      %p70 = scmp.ne.s32.totalorder %s61, %s62
      %p71 = scmp.eq.s32.totalorder %s30, 0
      %p72 = por %p70, %p71
      %p73 = scmp.ne.s32.totalorder %s61, %s62
      %p74 = scmp.eq.s32.totalorder %s31, 1
      %p75 = por %p73, %p74
      %p77 = scmp.ne.s32.totalorder %s62, %s76
      %p78 = scmp.eq.s32.totalorder %s31, 0
      %p79 = por %p77, %p78
      %s81 = sadd.s32 %s80, 1
      %p84 = scmp.eq.s32.totalorder %s25, 1
      %p85 = scmp.ne.s32.totalorder %s80, %s82
      %p86 = scmp.eq.s32.totalorder %s25, 0
      %p87 = por %p85, %p86
      %p88 = scmp.ne.s32.totalorder %s80, %s82
      %p89 = scmp.eq.s32.totalorder %s30, 1
      %p90 = por %p88, %p89
      %p91 = scmp.ne.s32.totalorder %s82, %s83
      %p92 = scmp.eq.s32.totalorder %s30, 0
      %p93 = por %p91, %p92
      %p94 = scmp.ne.s32.totalorder %s82, %s83
      %p95 = scmp.eq.s32.totalorder %s31, 1
      %p96 = por %p94, %p95
      %p98 = scmp.ne.s32.totalorder %s83, %s97
      %p99 = scmp.eq.s32.totalorder %s31, 0
      %p100 = por %p98, %p99
      %s102 = sadd.s32 %s101, 1
      %p105 = scmp.eq.s32.totalorder %s25, 1
      %p106 = scmp.ne.s32.totalorder %s101, %s103
      %p107 = scmp.eq.s32.totalorder %s25, 0
      %p108 = por %p106, %p107
      %p109 = scmp.ne.s32.totalorder %s101, %s103
      %p110 = scmp.eq.s32.totalorder %s30, 1
      %p111 = por %p109, %p110
      %p112 = scmp.ne.s32.totalorder %s103, %s104
      %p113 = scmp.eq.s32.totalorder %s30, 0
      %p114 = por %p112, %p113
      %p115 = scmp.ne.s32.totalorder %s103, %s104
      %p116 = scmp.eq.s32.totalorder %s31, 1
      %p117 = por %p115, %p116
      %p119 = scmp.ne.s32.totalorder %s104, %s118
      %p120 = scmp.eq.s32.totalorder %s31, 0
      %p121 = por %p119, %p120
      %s123 = sadd.s32 %s122, 1
      %p126 = scmp.eq.s32.totalorder %s25, 1
      %p127 = scmp.ne.s32.totalorder %s122, %s124
      %p128 = scmp.eq.s32.totalorder %s25, 0
      %p129 = por %p127, %p128
      %p130 = scmp.ne.s32.totalorder %s122, %s124
      %p131 = scmp.eq.s32.totalorder %s30, 1
      %p132 = por %p130, %p131
      %p133 = scmp.ne.s32.totalorder %s124, %s125
      %p134 = scmp.eq.s32.totalorder %s30, 0
      %p135 = por %p133, %p134
      %p136 = scmp.ne.s32.totalorder %s124, %s125
      %p137 = scmp.eq.s32.totalorder %s31, 1
      %p138 = por %p136, %p137
      %p140 = scmp.ne.s32.totalorder %s125, %s139
      %p141 = scmp.eq.s32.totalorder %s31, 0
      %p142 = por %p140, %p141
      %s144 = sadd.s32 %s143, 1
      %p147 = scmp.eq.s32.totalorder %s25, 1
      %p148 = scmp.ne.s32.totalorder %s143, %s145
      %p149 = scmp.eq.s32.totalorder %s25, 0
      %p150 = por %p148, %p149
      %p151 = scmp.ne.s32.totalorder %s143, %s145
      %p152 = scmp.eq.s32.totalorder %s30, 1
      %p153 = por %p151, %p152
      %p154 = scmp.ne.s32.totalorder %s145, %s146
      %p155 = scmp.eq.s32.totalorder %s30, 0
      %p156 = por %p154, %p155
      %p157 = scmp.ne.s32.totalorder %s145, %s146
      %p158 = scmp.eq.s32.totalorder %s31, 1
      %p159 = por %p157, %p158
      %p161 = scmp.ne.s32.totalorder %s146, %s160
      %p162 = scmp.eq.s32.totalorder %s31, 0
      %p163 = por %p161, %p162
      %s165 = sadd.s32 %s164, 1
      %p168 = scmp.eq.s32.totalorder %s25, 1
      %p169 = scmp.ne.s32.totalorder %s164, %s166
      %p170 = scmp.eq.s32.totalorder %s25, 0
      %p171 = por %p169, %p170
      %p172 = scmp.ne.s32.totalorder %s164, %s166
      %p173 = scmp.eq.s32.totalorder %s30, 1
      %p174 = por %p172, %p173
      %p175 = scmp.ne.s32.totalorder %s166, %s167
      %p176 = scmp.eq.s32.totalorder %s30, 0
      %p177 = por %p175, %p176
      %p178 = scmp.ne.s32.totalorder %s166, %s167
      %p179 = scmp.eq.s32.totalorder %s31, 1
      %p180 = por %p178, %p179
      %p182 = scmp.ne.s32.totalorder %s167, %s181
      %p183 = scmp.eq.s32.totalorder %s31, 0
      %p184 = por %p182, %p183
      %s186 = sadd.s32 %s185, 1
      %p189 = scmp.eq.s32.totalorder %s25, 1
      %p190 = scmp.ne.s32.totalorder %s185, %s187
      %p191 = scmp.eq.s32.totalorder %s25, 0
      %p192 = por %p190, %p191
      %p193 = scmp.ne.s32.totalorder %s185, %s187
      %p194 = scmp.eq.s32.totalorder %s30, 1
      %p195 = por %p193, %p194
      %p196 = scmp.ne.s32.totalorder %s187, %s188
      %p197 = scmp.eq.s32.totalorder %s30, 0
      %p198 = por %p196, %p197
      %p199 = scmp.ne.s32.totalorder %s187, %s188
      %p200 = scmp.eq.s32.totalorder %s31, 1
      %p201 = por %p199, %p200
      %p203 = scmp.ne.s32.totalorder %s188, %s202
      %p204 = scmp.eq.s32.totalorder %s31, 0
      %p205 = por %p203, %p204
      %s207 = sadd.s32 %s206, 1
      %p210 = scmp.eq.s32.totalorder %s25, 1
      %p211 = scmp.ne.s32.totalorder %s206, %s208
      %p212 = scmp.eq.s32.totalorder %s25, 0
      %p213 = por %p211, %p212
      %p214 = scmp.ne.s32.totalorder %s206, %s208
      %p215 = scmp.eq.s32.totalorder %s30, 1
      %p216 = por %p214, %p215
      %p217 = scmp.ne.s32.totalorder %s208, %s209
      %p218 = scmp.eq.s32.totalorder %s30, 0
      %p219 = por %p217, %p218
      %p220 = scmp.ne.s32.totalorder %s208, %s209
      %p221 = scmp.eq.s32.totalorder %s31, 1
      %p222 = por %p220, %p221
      %p224 = scmp.ne.s32.totalorder %s209, %s223
      %p225 = scmp.eq.s32.totalorder %s31, 0
      %p226 = por %p224, %p225
      %s228 = sadd.s32 %s227, 1
      %p231 = scmp.eq.s32.totalorder %s25, 1
      %p232 = scmp.ne.s32.totalorder %s227, %s229
      %p233 = scmp.eq.s32.totalorder %s25, 0
      %p234 = por %p232, %p233
      %p235 = scmp.ne.s32.totalorder %s227, %s229
      %p236 = scmp.eq.s32.totalorder %s30, 1
      %p237 = por %p235, %p236
      %p238 = scmp.ne.s32.totalorder %s229, %s230
      %p239 = scmp.eq.s32.totalorder %s30, 0
      %p240 = por %p238, %p239
      %p241 = scmp.ne.s32.totalorder %s229, %s230
      %p242 = scmp.eq.s32.totalorder %s31, 1
      %p243 = por %p241, %p242
      %p245 = scmp.ne.s32.totalorder %s230, %s244
      %p246 = scmp.eq.s32.totalorder %s31, 0
      %p247 = por %p245, %p246
      %s249 = sadd.s32 %s248, 1
      %p252 = scmp.eq.s32.totalorder %s25, 1
      %p253 = scmp.ne.s32.totalorder %s248, %s250
      %p254 = scmp.eq.s32.totalorder %s25, 0
      %p255 = por %p253, %p254
      %p256 = scmp.ne.s32.totalorder %s248, %s250
      %p257 = scmp.eq.s32.totalorder %s30, 1
      %p258 = por %p256, %p257
      %p259 = scmp.ne.s32.totalorder %s250, %s251
      %p260 = scmp.eq.s32.totalorder %s30, 0
      %p261 = por %p259, %p260
      %p262 = scmp.ne.s32.totalorder %s250, %s251
      %p263 = scmp.eq.s32.totalorder %s31, 1
      %p264 = por %p262, %p263
      %p266 = scmp.ne.s32.totalorder %s251, %s265
      %p267 = scmp.eq.s32.totalorder %s31, 0
      %p268 = por %p266, %p267
      %s270 = sadd.s32 %s269, 1
      %p273 = scmp.eq.s32.totalorder %s25, 1
      %p274 = scmp.ne.s32.totalorder %s269, %s271
      %p275 = scmp.eq.s32.totalorder %s25, 0
      %p276 = por %p274, %p275
      %p277 = scmp.ne.s32.totalorder %s269, %s271
      %p278 = scmp.eq.s32.totalorder %s30, 1
      %p279 = por %p277, %p278
      %p280 = scmp.ne.s32.totalorder %s271, %s272
      %p281 = scmp.eq.s32.totalorder %s30, 0
      %p282 = por %p280, %p281
      %p283 = scmp.ne.s32.totalorder %s271, %s272
      %p284 = scmp.eq.s32.totalorder %s31, 1
      %p285 = por %p283, %p284
      %p287 = scmp.ne.s32.totalorder %s272, %s286
      %p288 = scmp.eq.s32.totalorder %s31, 0
      %p289 = por %p287, %p288
      %s291 = sadd.s32 %s290, 1
      %p294 = scmp.eq.s32.totalorder %s25, 1
      %p295 = scmp.ne.s32.totalorder %s290, %s292
      %p296 = scmp.eq.s32.totalorder %s25, 0
      %p297 = por %p295, %p296
      %p298 = scmp.ne.s32.totalorder %s290, %s292
      %p299 = scmp.eq.s32.totalorder %s30, 1
      %p300 = por %p298, %p299
      %p301 = scmp.ne.s32.totalorder %s292, %s293
      %p302 = scmp.eq.s32.totalorder %s30, 0
      %p303 = por %p301, %p302
      %p304 = scmp.ne.s32.totalorder %s292, %s293
      %p305 = scmp.eq.s32.totalorder %s31, 1
      %p306 = por %p304, %p305
      %p308 = scmp.ne.s32.totalorder %s293, %s307
      %p309 = scmp.eq.s32.totalorder %s31, 0
      %p310 = por %p308, %p309
      %s312 = sadd.s32 %s311, 1
      %p315 = scmp.eq.s32.totalorder %s25, 1
      %p316 = scmp.ne.s32.totalorder %s311, %s313
      %p317 = scmp.eq.s32.totalorder %s25, 0
      %p318 = por %p316, %p317
      %p319 = scmp.ne.s32.totalorder %s311, %s313
      %p320 = scmp.eq.s32.totalorder %s30, 1
      %p321 = por %p319, %p320
      %p322 = scmp.ne.s32.totalorder %s313, %s314
      %p323 = scmp.eq.s32.totalorder %s30, 0
      %p324 = por %p322, %p323
      %p325 = scmp.ne.s32.totalorder %s313, %s314
      %p326 = scmp.eq.s32.totalorder %s31, 1
      %p327 = por %p325, %p326
      %p329 = scmp.ne.s32.totalorder %s314, %s328
      %p330 = scmp.eq.s32.totalorder %s31, 0
      %p331 = por %p329, %p330
      %s333 = sadd.s32 %s332, 1
      %p336 = scmp.eq.s32.totalorder %s25, 1
      %p337 = scmp.ne.s32.totalorder %s332, %s334
      %p338 = scmp.eq.s32.totalorder %s25, 0
      %p339 = por %p337, %p338
      %p340 = scmp.ne.s32.totalorder %s332, %s334
      %p341 = scmp.eq.s32.totalorder %s30, 1
      %p342 = por %p340, %p341
      %p343 = scmp.ne.s32.totalorder %s334, %s335
      %p344 = scmp.eq.s32.totalorder %s30, 0
      %p345 = por %p343, %p344
      %p346 = scmp.ne.s32.totalorder %s334, %s335
      %p347 = scmp.eq.s32.totalorder %s31, 1
      %p348 = por %p346, %p347
      %p350 = scmp.ne.s32.totalorder %s335, %s349
      %p351 = scmp.eq.s32.totalorder %s31, 0
      %p352 = por %p350, %p351
      %s353 = ssub.s32 %s25, %s32
      %p354 = scmp.eq.s32.totalorder %s353, 0
      %s356 = sadd.s32 %s355, 1
      %s357 = scalar_select %p354, %s355, %s356
      %p360 = pneg %p354
      %p361 = scmp.eq.s32.totalorder %s25, 1
      %p362 = por %p360, %p361
      %p363 = scmp.ne.s32.totalorder %s355, %s358
      %p364 = scmp.eq.s32.totalorder %s25, 0
      %p365 = por %p363, %p364
      %p366 = scmp.ne.s32.totalorder %s355, %s358
      %p367 = scmp.eq.s32.totalorder %s30, 1
      %p368 = por %p366, %p367
      %p369 = scmp.ne.s32.totalorder %s358, %s359
      %p370 = scmp.eq.s32.totalorder %s30, 0
      %p371 = por %p369, %p370
      %p372 = scmp.ne.s32.totalorder %s358, %s359
      %p373 = scmp.eq.s32.totalorder %s31, 1
      %p374 = por %p372, %p373
      %p376 = scmp.ne.s32.totalorder %s359, %s375
      %p377 = scmp.eq.s32.totalorder %s31, 0
      %p378 = por %p376, %p377
      %p379 = scmp.le.s32.totalorder 1, %s25
      %p380 = scmp.lt.s32.totalorder %s25, 3
      %p381 = pnand %p379, %p380
      %p382 = pneg %p381
      // Predicated region
      $region9: #{celeba_encoder_forward.1} parent=5 // pred_check
        _
      $region10: #{celeba_encoder_forward.1} parent=5 // pred_check_branch
        %384 = sbr.rel (%p381) target = $region12
      $region11: #{celeba_encoder_forward.1} parent=5 // pred_region
        %s385 = ssub.s32 %s25, 1
        // Predicated region
        $region13: #{celeba_encoder_forward.1} parent=11 // pred_check
          %p386 = pneg %p72
        $region14: #{celeba_encoder_forward.1} parent=11 // pred_check_branch
          %388 = sbr.rel (%p386) target = $region16
        $region15: #{celeba_encoder_forward.1} parent=11 // pred_region
          _
        $region16: #{celeba_encoder_forward.1} parent=11 // pred_fallthru
          _
        // Predicated region
        $region17: #{celeba_encoder_forward.1} parent=11 // pred_check
          %p389 = pneg %p93
        $region18: #{celeba_encoder_forward.1} parent=11 // pred_check_branch
          %391 = sbr.rel (%p389) target = $region20
        $region19: #{celeba_encoder_forward.1} parent=11 // pred_region
          _
        $region20: #{celeba_encoder_forward.1} parent=11 // pred_fallthru
          _
        // Predicated region
        $region21: #{celeba_encoder_forward.1} parent=11 // pred_check
          %p392 = pneg %p114
        $region22: #{celeba_encoder_forward.1} parent=11 // pred_check_branch
          %394 = sbr.rel (%p392) target = $region24
        $region23: #{celeba_encoder_forward.1} parent=11 // pred_region
          %s396 = ssub.s32 64, 64
          %397 = vsyncadd [#allocation3], %s396
          %s399 = sshll.u32 [#allocation2], 4
          %s400 = int_to_ptr.vmem [resolvable:$true] %s399
          %402 = dma.hbm_to_vmem [thread:$0]  %s3, 64, %s400, [#allocation3]
        $region24: #{celeba_encoder_forward.1} parent=11 // pred_fallthru
          _
        // Predicated region
        $region25: #{celeba_encoder_forward.1} parent=11 // pred_check
          %p403 = pneg %p135
        $region26: #{celeba_encoder_forward.1} parent=11 // pred_check_branch
          %405 = sbr.rel (%p403) target = $region28
        $region27: #{celeba_encoder_forward.1} parent=11 // pred_region
          %s407 = ssub.s32 192, 192
          %408 = vsyncadd [#allocation5], %s407
          %s409 = sshll.u32 [#allocation4], 4
          %s410 = int_to_ptr.vmem [resolvable:$true] %s409
          %415 = dma.hbm_to_vmem [thread:$0]  %s4, 192, %s410, [#allocation5], 64, 64, 4
        $region28: #{celeba_encoder_forward.1} parent=11 // pred_fallthru
          _
        // Predicated region
        $region29: #{celeba_encoder_forward.1} parent=11 // pred_check
          %p416 = pneg %p156
        $region30: #{celeba_encoder_forward.1} parent=11 // pred_check_branch
          %418 = sbr.rel (%p416) target = $region32
        $region31: #{celeba_encoder_forward.1} parent=11 // pred_region
          _
        $region32: #{celeba_encoder_forward.1} parent=11 // pred_fallthru
          _
        // Predicated region
        $region33: #{celeba_encoder_forward.1} parent=11 // pred_check
          %p419 = pneg %p177
        $region34: #{celeba_encoder_forward.1} parent=11 // pred_check_branch
          %421 = sbr.rel (%p419) target = $region36
        $region35: #{celeba_encoder_forward.1} parent=11 // pred_region
          %s423 = ssub.s32 16, 16
          %424 = vsyncadd [#allocation5], %s423
          %s426 = sshll.u32 [#allocation6], 4
          %s427 = int_to_ptr.vmem [resolvable:$true] %s426
          %429 = dma.hbm_to_vmem [thread:$0]  %s6, 16, %s427, [#allocation5]
        $region36: #{celeba_encoder_forward.1} parent=11 // pred_fallthru
          _
        // Predicated region
        $region37: #{celeba_encoder_forward.1} parent=11 // pred_check
          %p430 = pneg %p198
        $region38: #{celeba_encoder_forward.1} parent=11 // pred_check_branch
          %432 = sbr.rel (%p430) target = $region40
        $region39: #{celeba_encoder_forward.1} parent=11 // pred_region
          %s434 = ssub.s32 160, 160
          %435 = vsyncadd [#allocation8], %s434
          %s436 = sshll.u32 [#allocation7], 4
          %s437 = int_to_ptr.vmem [resolvable:$true] %s436
          %442 = dma.hbm_to_vmem [thread:$0]  %s7, 160, %s437, [#allocation8], 32, 32, 2
        $region40: #{celeba_encoder_forward.1} parent=11 // pred_fallthru
          _
        // Predicated region
        $region41: #{celeba_encoder_forward.1} parent=11 // pred_check
          %p443 = pneg %p219
        $region42: #{celeba_encoder_forward.1} parent=11 // pred_check_branch
          %445 = sbr.rel (%p443) target = $region44
        $region43: #{celeba_encoder_forward.1} parent=11 // pred_region
          _
        $region44: #{celeba_encoder_forward.1} parent=11 // pred_fallthru
          _
        // Predicated region
        $region45: #{celeba_encoder_forward.1} parent=11 // pred_check
          %p446 = pneg %p240
        $region46: #{celeba_encoder_forward.1} parent=11 // pred_check_branch
          %448 = sbr.rel (%p446) target = $region48
        $region47: #{celeba_encoder_forward.1} parent=11 // pred_region
          %s450 = ssub.s32 16, 16
          %451 = vsyncadd [#allocation8], %s450
          %s453 = sshll.u32 [#allocation9], 4
          %s454 = int_to_ptr.vmem [resolvable:$true] %s453
          %456 = dma.hbm_to_vmem [thread:$0]  %s9, 16, %s454, [#allocation8]
        $region48: #{celeba_encoder_forward.1} parent=11 // pred_fallthru
          _
        // Predicated region
        $region49: #{celeba_encoder_forward.1} parent=11 // pred_check
          %p457 = pneg %p261
        $region50: #{celeba_encoder_forward.1} parent=11 // pred_check_branch
          %459 = sbr.rel (%p457) target = $region52
        $region51: #{celeba_encoder_forward.1} parent=11 // pred_region
          _
        $region52: #{celeba_encoder_forward.1} parent=11 // pred_fallthru
          _
        // Predicated region
        $region53: #{celeba_encoder_forward.1} parent=11 // pred_check
          %p460 = pneg %p282
        $region54: #{celeba_encoder_forward.1} parent=11 // pred_check_branch
          %462 = sbr.rel (%p460) target = $region56
        $region55: #{celeba_encoder_forward.1} parent=11 // pred_region
          _
        $region56: #{celeba_encoder_forward.1} parent=11 // pred_fallthru
          _
        // Predicated region
        $region57: #{celeba_encoder_forward.1} parent=11 // pred_check
          %p463 = pneg %p303
        $region58: #{celeba_encoder_forward.1} parent=11 // pred_check_branch
          %465 = sbr.rel (%p463) target = $region60
        $region59: #{celeba_encoder_forward.1} parent=11 // pred_region
          %s467 = ssub.s32 16, 16
          %468 = vsyncadd [#allocation11], %s467
          %s470 = sshll.u32 [#allocation10], 4
          %s471 = int_to_ptr.vmem [resolvable:$true] %s470
          %473 = dma.hbm_to_vmem [thread:$0]  %s12, 16, %s471, [#allocation11]
        $region60: #{celeba_encoder_forward.1} parent=11 // pred_fallthru
          _
        // Predicated region
        $region61: #{celeba_encoder_forward.1} parent=11 // pred_check
          %p474 = pneg %p324
        $region62: #{celeba_encoder_forward.1} parent=11 // pred_check_branch
          %476 = sbr.rel (%p474) target = $region64
        $region63: #{celeba_encoder_forward.1} parent=11 // pred_region
          _
        $region64: #{celeba_encoder_forward.1} parent=11 // pred_fallthru
          _
        // Predicated region
        $region65: #{celeba_encoder_forward.1} parent=11 // pred_check
          %p477 = pneg %p345
        $region66: #{celeba_encoder_forward.1} parent=11 // pred_check_branch
          %479 = sbr.rel (%p477) target = $region68
        $region67: #{celeba_encoder_forward.1} parent=11 // pred_region
          %s481 = ssub.s32 16, 16
          %482 = vsyncadd [#allocation11], %s481
          %s484 = sshll.u32 [#allocation12], 4
          %s485 = int_to_ptr.vmem [resolvable:$true] %s484
          %487 = dma.hbm_to_vmem [thread:$0]  %s14, 16, %s485, [#allocation11]
        $region68: #{celeba_encoder_forward.1} parent=11 // pred_fallthru
          _
      $region12: #{celeba_encoder_forward.1} parent=5 // pred_fallthru
        _
      %p488 = scmp.lt.s32.totalorder %s25, 2
      // Predicated region
      $region69: #{celeba_encoder_forward.1} parent=5 // pred_check
        %p489 = pneg %p488
      $region70: #{celeba_encoder_forward.1} parent=5 // pred_check_branch
        %491 = sbr.rel (%p489) target = $region72
      $region71: #{celeba_encoder_forward.1} parent=5 // pred_region
        // Predicated region
        $region73: #{celeba_encoder_forward.1} parent=71 // pred_check
          %p492 = pneg %p45
        $region74: #{celeba_encoder_forward.1} parent=71 // pred_check_branch
          %494 = sbr.rel (%p492) target = $region76
        $region75: #{celeba_encoder_forward.1} parent=71 // pred_region
          %s495 = smul.u32 4, %s25
          %p496 = scmp.lt.s32.totalorder %s495, 7
          %s497 = scalar_select %p496, %s495, 7
          %s498 = smul.addr %s497, 8
          %s499 = scalar_lea.vmem %s0, %s498
          %s500 = smul.u32 4, %s25
        $region76: #{celeba_encoder_forward.1} parent=71 // pred_fallthru
          _
      $region72: #{celeba_encoder_forward.1} parent=5 // pred_fallthru
        _
      %p501 = scmp.le.s32.totalorder 1, %s25
      %p502 = scmp.lt.s32.totalorder %s25, 3
      %p503 = pnand %p501, %p502
      %p504 = pneg %p503
      // Predicated region
      $region77: #{celeba_encoder_forward.1} parent=5 // pred_check
        _
      $region78: #{celeba_encoder_forward.1} parent=5 // pred_check_branch
        %506 = sbr.rel (%p503) target = $region80
      $region79: #{celeba_encoder_forward.1} parent=5 // pred_region
        %s507 = ssub.s32 %s25, 1
        // Predicated region
        $region81: #{celeba_encoder_forward.1} parent=79 // pred_check
          %p508 = pneg %p114
        $region82: #{celeba_encoder_forward.1} parent=79 // pred_check_branch
          %510 = sbr.rel (%p508) target = $region84
        $region83: #{celeba_encoder_forward.1} parent=79 // pred_region
          %511 = dma.done [#allocation3], 64
        $region84: #{celeba_encoder_forward.1} parent=79 // pred_fallthru
          _
        // Predicated region
        $region85: #{celeba_encoder_forward.1} parent=79 // pred_check
          %p512 = pneg %p135
        $region86: #{celeba_encoder_forward.1} parent=79 // pred_check_branch
          %514 = sbr.rel (%p512) target = $region88
        $region87: #{celeba_encoder_forward.1} parent=79 // pred_region
          %515 = dma.done [#allocation5], 192
        $region88: #{celeba_encoder_forward.1} parent=79 // pred_fallthru
          _
        // Predicated region
        $region89: #{celeba_encoder_forward.1} parent=79 // pred_check
          %p516 = pneg %p177
        $region90: #{celeba_encoder_forward.1} parent=79 // pred_check_branch
          %518 = sbr.rel (%p516) target = $region92
        $region91: #{celeba_encoder_forward.1} parent=79 // pred_region
          %519 = dma.done [#allocation5], 16
        $region92: #{celeba_encoder_forward.1} parent=79 // pred_fallthru
          _
        // Predicated region
        $region93: #{celeba_encoder_forward.1} parent=79 // pred_check
          %p520 = pneg %p198
        $region94: #{celeba_encoder_forward.1} parent=79 // pred_check_branch
          %522 = sbr.rel (%p520) target = $region96
        $region95: #{celeba_encoder_forward.1} parent=79 // pred_region
          %523 = dma.done [#allocation8], 160
        $region96: #{celeba_encoder_forward.1} parent=79 // pred_fallthru
          _
        // Predicated region
        $region97: #{celeba_encoder_forward.1} parent=79 // pred_check
          %p524 = pneg %p240
        $region98: #{celeba_encoder_forward.1} parent=79 // pred_check_branch
          %526 = sbr.rel (%p524) target = $region100
        $region99: #{celeba_encoder_forward.1} parent=79 // pred_region
          %527 = dma.done [#allocation8], 16
        $region100: #{celeba_encoder_forward.1} parent=79 // pred_fallthru
          _
        // Predicated region
        $region101: #{celeba_encoder_forward.1} parent=79 // pred_check
          %p528 = pneg %p303
        $region102: #{celeba_encoder_forward.1} parent=79 // pred_check_branch
          %530 = sbr.rel (%p528) target = $region104
        $region103: #{celeba_encoder_forward.1} parent=79 // pred_region
          %531 = dma.done [#allocation11], 16
        $region104: #{celeba_encoder_forward.1} parent=79 // pred_fallthru
          _
        // Predicated region
        $region105: #{celeba_encoder_forward.1} parent=79 // pred_check
          %p532 = pneg %p345
        $region106: #{celeba_encoder_forward.1} parent=79 // pred_check_branch
          %534 = sbr.rel (%p532) target = $region108
        $region107: #{celeba_encoder_forward.1} parent=79 // pred_region
          %535 = dma.done [#allocation11], 16
        $region108: #{celeba_encoder_forward.1} parent=79 // pred_fallthru
          _
        %s536 = smul.u32 4, %s30
        %p537 = scmp.lt.s32.totalorder %s536, 7
        %s538 = scalar_select %p537, %s536, 7
        %s539 = smul.addr %s538, 8
        %s540 = scalar_lea.vmem %s0, %s539
        %p541 = pneg %p51
        %p542 = pneg %p48
        %p543 = pneg %p72
        %p544 = pneg %p69
        %p545 = pneg %p93
        %p546 = pneg %p90
        %p547 = pneg %p114
        %p548 = pneg %p111
        %p549 = pneg %p135
        %p550 = pneg %p132
        %p551 = pneg %p156
        %p552 = pneg %p153
        %p553 = pneg %p177
        %p554 = pneg %p174
        %p555 = pneg %p198
        %p556 = pneg %p195
        %p557 = pneg %p219
        %p558 = pneg %p216
        %p559 = pneg %p240
        %p560 = pneg %p237
        %p561 = pneg %p261
        %p562 = pneg %p258
        %p563 = pneg %p282
        %p564 = pneg %p279
        %p565 = pneg %p303
        %p566 = pneg %p300
        %p567 = pneg %p324
        %p568 = pneg %p321
        %p569 = pneg %p345
        %p570 = pneg %p342
        %p571 = pneg %p371
        %p572 = pneg %p368
        %p573 = scmp.lt.s32.totalorder %s30, 1
        %s574 = scalar_select %p573, %s30, 1
        %s575 = scalar_lea.vmem %s15, %s574
        %s576 = smul.u32 4, %s30
        %p577 = scmp.lt.s32.totalorder %s576, 7
        %s578 = scalar_select %p577, %s576, 7
        %s579 = smul.addr %s578, 8
        %s580 = scalar_lea.vmem %s0, %s579
        %s581 = smul.u32 4, %s30
        %p582 = scmp.lt.s32.totalorder %s30, 1
        %s583 = scalar_select %p582, %s30, 1
        %s584 = scalar_lea.vmem %s15, %s583
        %v586 = vld [vmem:[%s580] sm:$0xff]
        %v587 = vld [vmem:[%s580 + $0x8] sm:$0xff]
        %v588 = vld [vmem:[%s580 + $0x10] sm:$0xff]
        %v589 = vld [vmem:[%s580 + $0x18] sm:$0xff]
        %v590 = vpack.c.bf16 %v587, %v586
        %v591 = vpack.c.bf16 %v589, %v588
        %v592 = vld [vmem:[%s1] sm:$0xf]
        %v593 = vld [vmem:[%s1 + $0x4] sm:$0xf]
        %v596 = vunpack.c.l.b16 %v592
        %v597 = vunpack.c.l.b16 %v593
        %v598 = vpack.c.b16 %v597, %v596
        %vm599 = vcmask 261120
        %v601 = vsel %vm599, %v598, 0
        %603 = vmatprep.subr.bf16.mxu0 0
        %604 = vmatpush1.bf16.msra.mxu0 0
        %605 = vmatprep.subr.bf16.mxu0 0
        %606 = vmatpush1.bf16.msra.mxu0 0
        %607 = vmatprep.subr.bf16.mxu0 0
        %608 = vmatpush1.bf16.msra.mxu0 0
        %609 = vmatprep.subr.bf16.mxu0 0
        %610 = vmatpush1.bf16.msra.mxu0 0
        %611 = vmatprep.subr.bf16.mxu0 0
        %612 = vmatpush1.bf16.msra.mxu0 0
        %613 = vmatprep.subr.bf16.mxu0 0
        %614 = vmatpush1.bf16.msra.mxu0 0
        %615 = vmatprep.subr.bf16.mxu0 0
        %616 = vmatpush1.bf16.msra.mxu0 %v591
        %617 = vmatprep.subr.bf16.mxu0 0
        %618 = vmatpush1.bf16.msra.mxu0 %v590
        %619 = vmatprep.subr.bf16.mxu0 0
        %620 = vmatpush2.bf16.msra.mxu0 0
        %621 = vmatprep.subr.bf16.mxu0 0
        %622 = vmatpush2.bf16.msra.mxu0 0
        %623 = vmatprep.subr.bf16.mxu0 0
        %624 = vmatpush2.bf16.msra.mxu0 0
        %625 = vmatprep.subr.bf16.mxu0 0
        %626 = vmatpush2.bf16.msra.mxu0 0
        %627 = vmatprep.subr.bf16.mxu0 0
        %628 = vmatpush2.bf16.msra.mxu0 0
        %629 = vmatprep.subr.bf16.mxu0 0
        %630 = vmatpush2.bf16.msra.mxu0 0
        %631 = vmatprep.subr.bf16.mxu0 0
        %632 = vmatpush2.bf16.msra.mxu0 0
        %633 = vmatprep.subr.bf16.mxu0 0
        %634 = vmatpush2.bf16.msra.mxu0 0
        %635 = vmatprep.mubr.bf16.mxu0 0
        %636 = vmatmul.mubr.bf16.gmra.mxu0 %v601
        %v637 = vpop.f32.mrf.mxu0
        %v638 = vadd.f32 0.0, %v637
        %v639 = vpop.f32.mrf.mxu0
        %v640 = vpop.f32.mrf.mxu0
        %v641 = vadd.f32 0.0, %v640
        %v642 = vpop.f32.mrf.mxu0
        %643 = vdwg.mxu0
        %v644 = vpack.c.bf16 %v641, %v638
        %v645 = vld [vmem:[%s2] sm:$0xff]
        %v646 = vld [vmem:[%s2 + $0x8] sm:$0xff]
        %v647 = vld [vmem:[%s2 + $0x10] sm:$0xff]
        %v648 = vld [vmem:[%s2 + $0x18] sm:$0xff]
        %v649 = vld [vmem:[%s2 + $0x20] sm:$0xff]
        %v650 = vld [vmem:[%s2 + $0x28] sm:$0xff]
        %v651 = vld [vmem:[%s2 + $0x30] sm:$0xff]
        %v652 = vld [vmem:[%s2 + $0x38] sm:$0xff]
        %v653 = vld [vmem:[%s2 + $0x40] sm:$0xff]
        %v654 = vld [vmem:[%s2 + $0x48] sm:$0xff]
        %v655 = vld [vmem:[%s2 + $0x50] sm:$0xff]
        %v656 = vld [vmem:[%s2 + $0x58] sm:$0xff]
        %v657 = vld [vmem:[%s2 + $0x60] sm:$0xff]
        %v658 = vld [vmem:[%s2 + $0x68] sm:$0xff]
        %v659 = vld [vmem:[%s2 + $0x70] sm:$0xff]
        %v660 = vld [vmem:[%s2 + $0x78] sm:$0xff]
        %v661 = vld [vmem:[%s2 + $0x80] sm:$0xff]
        %v662 = vld [vmem:[%s2 + $0x88] sm:$0xff]
        %v663 = vld [vmem:[%s2 + $0x90] sm:$0xff]
        %v664 = vld [vmem:[%s2 + $0x98] sm:$0xff]
        %v665 = vld [vmem:[%s2 + $0xa0] sm:$0xff]
        %v666 = vld [vmem:[%s2 + $0xa8] sm:$0xff]
        %v667 = vld [vmem:[%s2 + $0xb0] sm:$0xff]
        %v668 = vld [vmem:[%s2 + $0xb8] sm:$0xff]
        %s669 = scalar_lea.vmem %s1, 8
        %v670 = vld [vmem:[%s669] sm:$0xf]
        %v671 = vld [vmem:[%s669 + $0x4] sm:$0xf]
        %v674 = vunpack.c.l.b16 %v670
        %v675 = vunpack.c.l.b16 %v671
        %v676 = vpack.c.b16 %v675, %v674
        %v678 = vsel %vm599, %v676, 0
        %680 = vmatprep.subr.bf16.mxu0 0
        %681 = vmatpush1.bf16.msra.mxu0 0
        %682 = vmatprep.subr.bf16.mxu0 0
        %683 = vmatpush1.bf16.msra.mxu0 0
        %684 = vmatprep.subr.bf16.mxu0 0
        %685 = vmatpush1.bf16.msra.mxu0 0
        %686 = vmatprep.subr.bf16.mxu0 0
        %687 = vmatpush1.bf16.msra.mxu0 0
        %688 = vmatprep.subr.bf16.mxu0 0
        %689 = vmatpush1.bf16.msra.mxu0 0
        %690 = vmatprep.subr.bf16.mxu0 0
        %691 = vmatpush1.bf16.msra.mxu0 0
        %692 = vmatprep.subr.bf16.mxu0 0
        %693 = vmatpush1.bf16.msra.mxu0 %v591
        %694 = vmatprep.subr.bf16.mxu0 0
        %695 = vmatpush1.bf16.msra.mxu0 %v590
        %696 = vmatprep.subr.bf16.mxu0 0
        %697 = vmatpush2.bf16.msra.mxu0 0
        %698 = vmatprep.subr.bf16.mxu0 0
        %699 = vmatpush2.bf16.msra.mxu0 0
        %700 = vmatprep.subr.bf16.mxu0 0
        %701 = vmatpush2.bf16.msra.mxu0 0
        %702 = vmatprep.subr.bf16.mxu0 0
        %703 = vmatpush2.bf16.msra.mxu0 0
        %704 = vmatprep.subr.bf16.mxu0 0
        %705 = vmatpush2.bf16.msra.mxu0 0
        %706 = vmatprep.subr.bf16.mxu0 0
        %707 = vmatpush2.bf16.msra.mxu0 0
        %708 = vmatprep.subr.bf16.mxu0 0
        %709 = vmatpush2.bf16.msra.mxu0 0
        %710 = vmatprep.subr.bf16.mxu0 0
        %711 = vmatpush2.bf16.msra.mxu0 0
        %712 = vmatprep.mubr.bf16.mxu0 0
        %713 = vmatmul.mubr.bf16.gmra.mxu0 %v678
        %v714 = vpop.f32.mrf.mxu0
        %v715 = vadd.f32 0.0, %v714
        %v716 = vpop.f32.mrf.mxu0
        %v717 = vpop.f32.mrf.mxu0
        %v718 = vadd.f32 0.0, %v717
        %v719 = vpop.f32.mrf.mxu0
        %720 = vdwg.mxu0
        %v721 = vpack.c.bf16 %v718, %v715
        %s722 = scalar_lea.vmem %s2, 192
        %v723 = vld [vmem:[%s722] sm:$0xff]
        %v724 = vld [vmem:[%s722 + $0x8] sm:$0xff]
        %v725 = vld [vmem:[%s722 + $0x10] sm:$0xff]
        %v726 = vld [vmem:[%s722 + $0x18] sm:$0xff]
        %v727 = vld [vmem:[%s722 + $0x20] sm:$0xff]
        %v728 = vld [vmem:[%s722 + $0x28] sm:$0xff]
        %v729 = vld [vmem:[%s722 + $0x30] sm:$0xff]
        %v730 = vld [vmem:[%s722 + $0x38] sm:$0xff]
        %v731 = vld [vmem:[%s722 + $0x40] sm:$0xff]
        %v732 = vld [vmem:[%s722 + $0x48] sm:$0xff]
        %v733 = vld [vmem:[%s722 + $0x50] sm:$0xff]
        %v734 = vld [vmem:[%s722 + $0x58] sm:$0xff]
        %v735 = vld [vmem:[%s722 + $0x60] sm:$0xff]
        %v736 = vld [vmem:[%s722 + $0x68] sm:$0xff]
        %v737 = vld [vmem:[%s722 + $0x70] sm:$0xff]
        %v738 = vld [vmem:[%s722 + $0x78] sm:$0xff]
        %v739 = vld [vmem:[%s722 + $0x80] sm:$0xff]
        %v740 = vld [vmem:[%s722 + $0x88] sm:$0xff]
        %v741 = vld [vmem:[%s722 + $0x90] sm:$0xff]
        %v742 = vld [vmem:[%s722 + $0x98] sm:$0xff]
        %v743 = vld [vmem:[%s722 + $0xa0] sm:$0xff]
        %v744 = vld [vmem:[%s722 + $0xa8] sm:$0xff]
        %v745 = vld [vmem:[%s722 + $0xb0] sm:$0xff]
        %v746 = vld [vmem:[%s722 + $0xb8] sm:$0xff]
        %v771 = vunpack.c.l.b16 %v723
        %v772 = vunpack.c.h.b16 %v723
        %v773 = vunpack.c.l.b16 %v724
        %v774 = vunpack.c.h.b16 %v724
        %v775 = vunpack.c.l.b16 %v725
        %v776 = vunpack.c.h.b16 %v725
        %v777 = vunpack.c.l.b16 %v726
        %v778 = vunpack.c.h.b16 %v726
        %v779 = vunpack.c.l.b16 %v727
        %v780 = vunpack.c.h.b16 %v727
        %v781 = vunpack.c.l.b16 %v728
        %v782 = vunpack.c.h.b16 %v728
        %v783 = vunpack.c.l.b16 %v729
        %v784 = vunpack.c.h.b16 %v729
        %v785 = vunpack.c.l.b16 %v730
        %v786 = vunpack.c.h.b16 %v730
        %v787 = vunpack.c.l.b16 %v731
        %v788 = vunpack.c.h.b16 %v731
        %v789 = vunpack.c.l.b16 %v732
        %v790 = vunpack.c.h.b16 %v732
        %v791 = vunpack.c.l.b16 %v733
        %v792 = vunpack.c.h.b16 %v733
        %v793 = vunpack.c.l.b16 %v734
        %v794 = vunpack.c.h.b16 %v734
        %v795 = vunpack.c.l.b16 %v735
        %v796 = vunpack.c.h.b16 %v735
        %v797 = vunpack.c.l.b16 %v736
        %v798 = vunpack.c.h.b16 %v736
        %v799 = vunpack.c.l.b16 %v737
        %v800 = vunpack.c.h.b16 %v737
        %v801 = vunpack.c.l.b16 %v738
        %v802 = vunpack.c.h.b16 %v738
        %v803 = vunpack.c.l.b16 %v739
        %v804 = vunpack.c.h.b16 %v739
        %v805 = vunpack.c.l.b16 %v740
        %v806 = vunpack.c.h.b16 %v740
        %v807 = vunpack.c.l.b16 %v741
        %v808 = vunpack.c.h.b16 %v741
        %v809 = vunpack.c.l.b16 %v742
        %v810 = vunpack.c.h.b16 %v742
        %v811 = vunpack.c.l.b16 %v743
        %v812 = vunpack.c.h.b16 %v743
        %v813 = vunpack.c.l.b16 %v744
        %v814 = vunpack.c.h.b16 %v744
        %v815 = vunpack.c.l.b16 %v745
        %v816 = vunpack.c.h.b16 %v745
        %v817 = vunpack.c.l.b16 %v746
        %v818 = vunpack.c.h.b16 %v746
        %v819 = vpack.c.b16 %v775, %v771
        %v820 = vpack.c.b16 %v776, %v772
        %v821 = vpack.c.b16 %v777, %v773
        %v822 = vpack.c.b16 %v778, %v774
        %v823 = vpack.c.b16 %v783, %v779
        %v824 = vpack.c.b16 %v784, %v780
        %v825 = vpack.c.b16 %v785, %v781
        %v826 = vpack.c.b16 %v786, %v782
        %v827 = vpack.c.b16 %v791, %v787
        %v828 = vpack.c.b16 %v792, %v788
        %v829 = vpack.c.b16 %v793, %v789
        %v830 = vpack.c.b16 %v794, %v790
        %v831 = vpack.c.b16 %v799, %v795
        %v832 = vpack.c.b16 %v800, %v796
        %v833 = vpack.c.b16 %v801, %v797
        %v834 = vpack.c.b16 %v802, %v798
        %v835 = vpack.c.b16 %v807, %v803
        %v836 = vpack.c.b16 %v808, %v804
        %v837 = vpack.c.b16 %v809, %v805
        %v838 = vpack.c.b16 %v810, %v806
        %v839 = vpack.c.b16 %v815, %v811
        %v840 = vpack.c.b16 %v816, %v812
        %v841 = vpack.c.b16 %v817, %v813
        %v842 = vpack.c.b16 %v818, %v814
        %vm867 = vcmask 785408
        %v869 = vsel %vm867, %v721, 0
        %871 = vmatprep.subr.bf16.mxu0 0
        %872 = vmatpush1.bf16.msra.mxu0 0
        %873 = vmatprep.subr.bf16.mxu0 0
        %874 = vmatpush1.bf16.msra.mxu0 0
        %875 = vmatprep.subr.bf16.mxu0 %v840
        %876 = vmatpush1.bf16.msra.mxu0 %v839
        %877 = vmatprep.subr.bf16.mxu0 %v836
        %878 = vmatpush1.bf16.msra.mxu0 %v835
        %879 = vmatprep.subr.bf16.mxu0 %v832
        %880 = vmatpush1.bf16.msra.mxu0 %v831
        %881 = vmatprep.subr.bf16.mxu0 %v828
        %882 = vmatpush1.bf16.msra.mxu0 %v827
        %883 = vmatprep.subr.bf16.mxu0 %v824
        %884 = vmatpush1.bf16.msra.mxu0 %v823
        %885 = vmatprep.subr.bf16.mxu0 %v820
        %886 = vmatpush1.bf16.msra.mxu0 %v819
        %887 = vmatprep.subr.bf16.mxu0 0
        %888 = vmatpush2.bf16.msra.mxu0 0
        %889 = vmatprep.subr.bf16.mxu0 0
        %890 = vmatpush2.bf16.msra.mxu0 0
        %891 = vmatprep.subr.bf16.mxu0 0
        %892 = vmatpush2.bf16.msra.mxu0 0
        %893 = vmatprep.subr.bf16.mxu0 0
        %894 = vmatpush2.bf16.msra.mxu0 0
        %895 = vmatprep.subr.bf16.mxu0 0
        %896 = vmatpush2.bf16.msra.mxu0 0
        %897 = vmatprep.subr.bf16.mxu0 0
        %898 = vmatpush2.bf16.msra.mxu0 0
        %899 = vmatprep.subr.bf16.mxu0 0
        %900 = vmatpush2.bf16.msra.mxu0 0
        %901 = vmatprep.subr.bf16.mxu0 0
        %902 = vmatpush2.bf16.msra.mxu0 0
        %903 = vmatprep.mubr.bf16.mxu0 0
        %904 = vmatmul.mubr.bf16.gmra.mxu0 %v869
        %v905 = vpop.f32.mrf.mxu0
        %v906 = vadd.f32 0.0, %v905
        %v907 = vpop.f32.mrf.mxu0
        %v908 = vadd.f32 0.0, %v907
        %v909 = vpop.f32.mrf.mxu0
        %v910 = vadd.f32 0.0, %v909
        %v911 = vpop.f32.mrf.mxu0
        %v912 = vadd.f32 0.0, %v911
        %913 = vdwg.mxu0
        %914 = vmatprep.subr.bf16.mxu0 0
        %915 = vmatpush1.bf16.msra.mxu0 0
        %916 = vmatprep.subr.bf16.mxu0 0
        %917 = vmatpush1.bf16.msra.mxu0 0
        %918 = vmatprep.subr.bf16.mxu0 %v842
        %919 = vmatpush1.bf16.msra.mxu0 %v841
        %920 = vmatprep.subr.bf16.mxu0 %v838
        %921 = vmatpush1.bf16.msra.mxu0 %v837
        %922 = vmatprep.subr.bf16.mxu0 %v834
        %923 = vmatpush1.bf16.msra.mxu0 %v833
        %924 = vmatprep.subr.bf16.mxu0 %v830
        %925 = vmatpush1.bf16.msra.mxu0 %v829
        %926 = vmatprep.subr.bf16.mxu0 %v826
        %927 = vmatpush1.bf16.msra.mxu0 %v825
        %928 = vmatprep.subr.bf16.mxu0 %v822
        %929 = vmatpush1.bf16.msra.mxu0 %v821
        %930 = vmatprep.subr.bf16.mxu0 0
        %931 = vmatpush2.bf16.msra.mxu0 0
        %932 = vmatprep.subr.bf16.mxu0 0
        %933 = vmatpush2.bf16.msra.mxu0 0
        %934 = vmatprep.subr.bf16.mxu0 0
        %935 = vmatpush2.bf16.msra.mxu0 0
        %936 = vmatprep.subr.bf16.mxu0 0
        %937 = vmatpush2.bf16.msra.mxu0 0
        %938 = vmatprep.subr.bf16.mxu0 0
        %939 = vmatpush2.bf16.msra.mxu0 0
        %940 = vmatprep.subr.bf16.mxu0 0
        %941 = vmatpush2.bf16.msra.mxu0 0
        %942 = vmatprep.subr.bf16.mxu0 0
        %943 = vmatpush2.bf16.msra.mxu0 0
        %944 = vmatprep.subr.bf16.mxu0 0
        %945 = vmatpush2.bf16.msra.mxu0 0
        %946 = vmatprep.mubr.bf16.mxu0 0
        %947 = vmatmul.mubr.bf16.gmra.mxu0 %v869
        %v948 = vpop.f32.mrf.mxu0
        %v949 = vadd.f32 0.0, %v948
        %v950 = vpop.f32.mrf.mxu0
        %v951 = vadd.f32 0.0, %v950
        %v952 = vpop.f32.mrf.mxu0
        %v953 = vadd.f32 0.0, %v952
        %v954 = vpop.f32.mrf.mxu0
        %v955 = vadd.f32 0.0, %v954
        %956 = vdwg.mxu0
        %v981 = vunpack.c.l.b16 %v645
        %v982 = vunpack.c.h.b16 %v645
        %v983 = vunpack.c.l.b16 %v646
        %v984 = vunpack.c.h.b16 %v646
        %v985 = vunpack.c.l.b16 %v647
        %v986 = vunpack.c.h.b16 %v647
        %v987 = vunpack.c.l.b16 %v648
        %v988 = vunpack.c.h.b16 %v648
        %v989 = vunpack.c.l.b16 %v649
        %v990 = vunpack.c.h.b16 %v649
        %v991 = vunpack.c.l.b16 %v650
        %v992 = vunpack.c.h.b16 %v650
        %v993 = vunpack.c.l.b16 %v651
        %v994 = vunpack.c.h.b16 %v651
        %v995 = vunpack.c.l.b16 %v652
        %v996 = vunpack.c.h.b16 %v652
        %v997 = vunpack.c.l.b16 %v653
        %v998 = vunpack.c.h.b16 %v653
        %v999 = vunpack.c.l.b16 %v654
        %v1000 = vunpack.c.h.b16 %v654
        %v1001 = vunpack.c.l.b16 %v655
        %v1002 = vunpack.c.h.b16 %v655
        %v1003 = vunpack.c.l.b16 %v656
        %v1004 = vunpack.c.h.b16 %v656
        %v1005 = vunpack.c.l.b16 %v657
        %v1006 = vunpack.c.h.b16 %v657
        %v1007 = vunpack.c.l.b16 %v658
        %v1008 = vunpack.c.h.b16 %v658
        %v1009 = vunpack.c.l.b16 %v659
        %v1010 = vunpack.c.h.b16 %v659
        %v1011 = vunpack.c.l.b16 %v660
        %v1012 = vunpack.c.h.b16 %v660
        %v1013 = vunpack.c.l.b16 %v661
        %v1014 = vunpack.c.h.b16 %v661
        %v1015 = vunpack.c.l.b16 %v662
        %v1016 = vunpack.c.h.b16 %v662
        %v1017 = vunpack.c.l.b16 %v663
        %v1018 = vunpack.c.h.b16 %v663
        %v1019 = vunpack.c.l.b16 %v664
        %v1020 = vunpack.c.h.b16 %v664
        %v1021 = vunpack.c.l.b16 %v665
        %v1022 = vunpack.c.h.b16 %v665
        %v1023 = vunpack.c.l.b16 %v666
        %v1024 = vunpack.c.h.b16 %v666
        %v1025 = vunpack.c.l.b16 %v667
        %v1026 = vunpack.c.h.b16 %v667
        %v1027 = vunpack.c.l.b16 %v668
        %v1028 = vunpack.c.h.b16 %v668
        %v1029 = vpack.c.b16 %v985, %v981
        %v1030 = vpack.c.b16 %v986, %v982
        %v1031 = vpack.c.b16 %v987, %v983
        %v1032 = vpack.c.b16 %v988, %v984
        %v1033 = vpack.c.b16 %v993, %v989
        %v1034 = vpack.c.b16 %v994, %v990
        %v1035 = vpack.c.b16 %v995, %v991
        %v1036 = vpack.c.b16 %v996, %v992
        %v1037 = vpack.c.b16 %v1001, %v997
        %v1038 = vpack.c.b16 %v1002, %v998
        %v1039 = vpack.c.b16 %v1003, %v999
        %v1040 = vpack.c.b16 %v1004, %v1000
        %v1041 = vpack.c.b16 %v1009, %v1005
        %v1042 = vpack.c.b16 %v1010, %v1006
        %v1043 = vpack.c.b16 %v1011, %v1007
        %v1044 = vpack.c.b16 %v1012, %v1008
        %v1045 = vpack.c.b16 %v1017, %v1013
        %v1046 = vpack.c.b16 %v1018, %v1014
        %v1047 = vpack.c.b16 %v1019, %v1015
        %v1048 = vpack.c.b16 %v1020, %v1016
        %v1049 = vpack.c.b16 %v1025, %v1021
        %v1050 = vpack.c.b16 %v1026, %v1022
        %v1051 = vpack.c.b16 %v1027, %v1023
        %v1052 = vpack.c.b16 %v1028, %v1024
        %v1078 = vsel %vm867, %v644, 0
        %1080 = vmatprep.subr.bf16.mxu0 0
        %1081 = vmatpush1.bf16.msra.mxu0 0
        %1082 = vmatprep.subr.bf16.mxu0 0
        %1083 = vmatpush1.bf16.msra.mxu0 0
        %1084 = vmatprep.subr.bf16.mxu0 %v1050
        %1085 = vmatpush1.bf16.msra.mxu0 %v1049
        %1086 = vmatprep.subr.bf16.mxu0 %v1046
        %1087 = vmatpush1.bf16.msra.mxu0 %v1045
        %1088 = vmatprep.subr.bf16.mxu0 %v1042
        %1089 = vmatpush1.bf16.msra.mxu0 %v1041
        %1090 = vmatprep.subr.bf16.mxu0 %v1038
        %1091 = vmatpush1.bf16.msra.mxu0 %v1037
        %1092 = vmatprep.subr.bf16.mxu0 %v1034
        %1093 = vmatpush1.bf16.msra.mxu0 %v1033
        %1094 = vmatprep.subr.bf16.mxu0 %v1030
        %1095 = vmatpush1.bf16.msra.mxu0 %v1029
        %1096 = vmatprep.subr.bf16.mxu0 0
        %1097 = vmatpush2.bf16.msra.mxu0 0
        %1098 = vmatprep.subr.bf16.mxu0 0
        %1099 = vmatpush2.bf16.msra.mxu0 0
        %1100 = vmatprep.subr.bf16.mxu0 0
        %1101 = vmatpush2.bf16.msra.mxu0 0
        %1102 = vmatprep.subr.bf16.mxu0 0
        %1103 = vmatpush2.bf16.msra.mxu0 0
        %1104 = vmatprep.subr.bf16.mxu0 0
        %1105 = vmatpush2.bf16.msra.mxu0 0
        %1106 = vmatprep.subr.bf16.mxu0 0
        %1107 = vmatpush2.bf16.msra.mxu0 0
        %1108 = vmatprep.subr.bf16.mxu0 0
        %1109 = vmatpush2.bf16.msra.mxu0 0
        %1110 = vmatprep.subr.bf16.mxu0 0
        %1111 = vmatpush2.bf16.msra.mxu0 0
        %1112 = vmatprep.mubr.bf16.mxu0 0
        %1113 = vmatmul.mubr.bf16.gmra.mxu0 %v1078
        %v1114 = vpop.f32.mrf.mxu0
        %v1115 = vadd.f32 %v906, %v1114
        %v1116 = vpop.f32.mrf.mxu0
        %v1117 = vadd.f32 %v908, %v1116
        %v1118 = vpop.f32.mrf.mxu0
        %v1119 = vadd.f32 %v910, %v1118
        %v1120 = vpop.f32.mrf.mxu0
        %v1121 = vadd.f32 %v912, %v1120
        %1122 = vdwg.mxu0
        %1123 = vmatprep.subr.bf16.mxu0 0
        %1124 = vmatpush1.bf16.msra.mxu0 0
        %1125 = vmatprep.subr.bf16.mxu0 0
        %1126 = vmatpush1.bf16.msra.mxu0 0
        %1127 = vmatprep.subr.bf16.mxu0 %v1052
        %1128 = vmatpush1.bf16.msra.mxu0 %v1051
        %1129 = vmatprep.subr.bf16.mxu0 %v1048
        %1130 = vmatpush1.bf16.msra.mxu0 %v1047
        %1131 = vmatprep.subr.bf16.mxu0 %v1044
        %1132 = vmatpush1.bf16.msra.mxu0 %v1043
        %1133 = vmatprep.subr.bf16.mxu0 %v1040
        %1134 = vmatpush1.bf16.msra.mxu0 %v1039
        %1135 = vmatprep.subr.bf16.mxu0 %v1036
        %1136 = vmatpush1.bf16.msra.mxu0 %v1035
        %1137 = vmatprep.subr.bf16.mxu0 %v1032
        %1138 = vmatpush1.bf16.msra.mxu0 %v1031
        %1139 = vmatprep.subr.bf16.mxu0 0
        %1140 = vmatpush2.bf16.msra.mxu0 0
        %1141 = vmatprep.subr.bf16.mxu0 0
        %1142 = vmatpush2.bf16.msra.mxu0 0
        %1143 = vmatprep.subr.bf16.mxu0 0
        %1144 = vmatpush2.bf16.msra.mxu0 0
        %1145 = vmatprep.subr.bf16.mxu0 0
        %1146 = vmatpush2.bf16.msra.mxu0 0
        %1147 = vmatprep.subr.bf16.mxu0 0
        %1148 = vmatpush2.bf16.msra.mxu0 0
        %1149 = vmatprep.subr.bf16.mxu0 0
        %1150 = vmatpush2.bf16.msra.mxu0 0
        %1151 = vmatprep.subr.bf16.mxu0 0
        %1152 = vmatpush2.bf16.msra.mxu0 0
        %1153 = vmatprep.subr.bf16.mxu0 0
        %1154 = vmatpush2.bf16.msra.mxu0 0
        %1155 = vmatprep.mubr.bf16.mxu0 0
        %1156 = vmatmul.mubr.bf16.gmra.mxu0 %v1078
        %v1157 = vpop.f32.mrf.mxu0
        %v1158 = vadd.f32 %v949, %v1157
        %v1159 = vpop.f32.mrf.mxu0
        %v1160 = vadd.f32 %v951, %v1159
        %v1161 = vpop.f32.mrf.mxu0
        %v1162 = vadd.f32 %v953, %v1161
        %v1163 = vpop.f32.mrf.mxu0
        %v1164 = vadd.f32 %v955, %v1163
        %1165 = vdwg.mxu0
        %s1166 = scalar_lea.vmem %s1, 16
        %v1167 = vld [vmem:[%s1166] sm:$0xf]
        %v1168 = vld [vmem:[%s1166 + $0x4] sm:$0xf]
        %v1171 = vunpack.c.l.b16 %v1167
        %v1172 = vunpack.c.l.b16 %v1168
        %v1173 = vpack.c.b16 %v1172, %v1171
        %v1175 = vsel %vm599, %v1173, 0
        %1177 = vmatprep.subr.bf16.mxu0 0
        %1178 = vmatpush1.bf16.msra.mxu0 0
        %1179 = vmatprep.subr.bf16.mxu0 0
        %1180 = vmatpush1.bf16.msra.mxu0 0
        %1181 = vmatprep.subr.bf16.mxu0 0
        %1182 = vmatpush1.bf16.msra.mxu0 0
        %1183 = vmatprep.subr.bf16.mxu0 0
        %1184 = vmatpush1.bf16.msra.mxu0 0
        %1185 = vmatprep.subr.bf16.mxu0 0
        %1186 = vmatpush1.bf16.msra.mxu0 0
        %1187 = vmatprep.subr.bf16.mxu0 0
        %1188 = vmatpush1.bf16.msra.mxu0 0
        %1189 = vmatprep.subr.bf16.mxu0 0
        %1190 = vmatpush1.bf16.msra.mxu0 %v591
        %1191 = vmatprep.subr.bf16.mxu0 0
        %1192 = vmatpush1.bf16.msra.mxu0 %v590
        %1193 = vmatprep.subr.bf16.mxu0 0
        %1194 = vmatpush2.bf16.msra.mxu0 0
        %1195 = vmatprep.subr.bf16.mxu0 0
        %1196 = vmatpush2.bf16.msra.mxu0 0
        %1197 = vmatprep.subr.bf16.mxu0 0
        %1198 = vmatpush2.bf16.msra.mxu0 0
        %1199 = vmatprep.subr.bf16.mxu0 0
        %1200 = vmatpush2.bf16.msra.mxu0 0
        %1201 = vmatprep.subr.bf16.mxu0 0
        %1202 = vmatpush2.bf16.msra.mxu0 0
        %1203 = vmatprep.subr.bf16.mxu0 0
        %1204 = vmatpush2.bf16.msra.mxu0 0
        %1205 = vmatprep.subr.bf16.mxu0 0
        %1206 = vmatpush2.bf16.msra.mxu0 0
        %1207 = vmatprep.subr.bf16.mxu0 0
        %1208 = vmatpush2.bf16.msra.mxu0 0
        %1209 = vmatprep.mubr.bf16.mxu0 0
        %1210 = vmatmul.mubr.bf16.gmra.mxu0 %v1175
        %v1211 = vpop.f32.mrf.mxu0
        %v1212 = vadd.f32 0.0, %v1211
        %v1213 = vpop.f32.mrf.mxu0
        %v1214 = vpop.f32.mrf.mxu0
        %v1215 = vadd.f32 0.0, %v1214
        %v1216 = vpop.f32.mrf.mxu0
        %1217 = vdwg.mxu0
        %v1218 = vpack.c.bf16 %v1215, %v1212
        %s1219 = scalar_lea.vmem %s2, 384
        %v1220 = vld [vmem:[%s1219] sm:$0xff]
        %v1221 = vld [vmem:[%s1219 + $0x8] sm:$0xff]
        %v1222 = vld [vmem:[%s1219 + $0x10] sm:$0xff]
        %v1223 = vld [vmem:[%s1219 + $0x18] sm:$0xff]
        %v1224 = vld [vmem:[%s1219 + $0x20] sm:$0xff]
        %v1225 = vld [vmem:[%s1219 + $0x28] sm:$0xff]
        %v1226 = vld [vmem:[%s1219 + $0x30] sm:$0xff]
        %v1227 = vld [vmem:[%s1219 + $0x38] sm:$0xff]
        %v1228 = vld [vmem:[%s1219 + $0x40] sm:$0xff]
        %v1229 = vld [vmem:[%s1219 + $0x48] sm:$0xff]
        %v1230 = vld [vmem:[%s1219 + $0x50] sm:$0xff]
        %v1231 = vld [vmem:[%s1219 + $0x58] sm:$0xff]
        %v1232 = vld [vmem:[%s1219 + $0x60] sm:$0xff]
        %v1233 = vld [vmem:[%s1219 + $0x68] sm:$0xff]
        %v1234 = vld [vmem:[%s1219 + $0x70] sm:$0xff]
        %v1235 = vld [vmem:[%s1219 + $0x78] sm:$0xff]
        %v1236 = vld [vmem:[%s1219 + $0x80] sm:$0xff]
        %v1237 = vld [vmem:[%s1219 + $0x88] sm:$0xff]
        %v1238 = vld [vmem:[%s1219 + $0x90] sm:$0xff]
        %v1239 = vld [vmem:[%s1219 + $0x98] sm:$0xff]
        %v1240 = vld [vmem:[%s1219 + $0xa0] sm:$0xff]
        %v1241 = vld [vmem:[%s1219 + $0xa8] sm:$0xff]
        %v1242 = vld [vmem:[%s1219 + $0xb0] sm:$0xff]
        %v1243 = vld [vmem:[%s1219 + $0xb8] sm:$0xff]
        %v1268 = vunpack.c.l.b16 %v1220
        %v1269 = vunpack.c.h.b16 %v1220
        %v1270 = vunpack.c.l.b16 %v1221
        %v1271 = vunpack.c.h.b16 %v1221
        %v1272 = vunpack.c.l.b16 %v1222
        %v1273 = vunpack.c.h.b16 %v1222
        %v1274 = vunpack.c.l.b16 %v1223
        %v1275 = vunpack.c.h.b16 %v1223
        %v1276 = vunpack.c.l.b16 %v1224
        %v1277 = vunpack.c.h.b16 %v1224
        %v1278 = vunpack.c.l.b16 %v1225
        %v1279 = vunpack.c.h.b16 %v1225
        %v1280 = vunpack.c.l.b16 %v1226
        %v1281 = vunpack.c.h.b16 %v1226
        %v1282 = vunpack.c.l.b16 %v1227
        %v1283 = vunpack.c.h.b16 %v1227
        %v1284 = vunpack.c.l.b16 %v1228
        %v1285 = vunpack.c.h.b16 %v1228
        %v1286 = vunpack.c.l.b16 %v1229
        %v1287 = vunpack.c.h.b16 %v1229
        %v1288 = vunpack.c.l.b16 %v1230
        %v1289 = vunpack.c.h.b16 %v1230
        %v1290 = vunpack.c.l.b16 %v1231
        %v1291 = vunpack.c.h.b16 %v1231
        %v1292 = vunpack.c.l.b16 %v1232
        %v1293 = vunpack.c.h.b16 %v1232
        %v1294 = vunpack.c.l.b16 %v1233
        %v1295 = vunpack.c.h.b16 %v1233
        %v1296 = vunpack.c.l.b16 %v1234
        %v1297 = vunpack.c.h.b16 %v1234
        %v1298 = vunpack.c.l.b16 %v1235
        %v1299 = vunpack.c.h.b16 %v1235
        %v1300 = vunpack.c.l.b16 %v1236
        %v1301 = vunpack.c.h.b16 %v1236
        %v1302 = vunpack.c.l.b16 %v1237
        %v1303 = vunpack.c.h.b16 %v1237
        %v1304 = vunpack.c.l.b16 %v1238
        %v1305 = vunpack.c.h.b16 %v1238
        %v1306 = vunpack.c.l.b16 %v1239
        %v1307 = vunpack.c.h.b16 %v1239
        %v1308 = vunpack.c.l.b16 %v1240
        %v1309 = vunpack.c.h.b16 %v1240
        %v1310 = vunpack.c.l.b16 %v1241
        %v1311 = vunpack.c.h.b16 %v1241
        %v1312 = vunpack.c.l.b16 %v1242
        %v1313 = vunpack.c.h.b16 %v1242
        %v1314 = vunpack.c.l.b16 %v1243
        %v1315 = vunpack.c.h.b16 %v1243
        %v1316 = vpack.c.b16 %v1272, %v1268
        %v1317 = vpack.c.b16 %v1273, %v1269
        %v1318 = vpack.c.b16 %v1274, %v1270
        %v1319 = vpack.c.b16 %v1275, %v1271
        %v1320 = vpack.c.b16 %v1280, %v1276
        %v1321 = vpack.c.b16 %v1281, %v1277
        %v1322 = vpack.c.b16 %v1282, %v1278
        %v1323 = vpack.c.b16 %v1283, %v1279
        %v1324 = vpack.c.b16 %v1288, %v1284
        %v1325 = vpack.c.b16 %v1289, %v1285
        %v1326 = vpack.c.b16 %v1290, %v1286
        %v1327 = vpack.c.b16 %v1291, %v1287
        %v1328 = vpack.c.b16 %v1296, %v1292
        %v1329 = vpack.c.b16 %v1297, %v1293
        %v1330 = vpack.c.b16 %v1298, %v1294
        %v1331 = vpack.c.b16 %v1299, %v1295
        %v1332 = vpack.c.b16 %v1304, %v1300
        %v1333 = vpack.c.b16 %v1305, %v1301
        %v1334 = vpack.c.b16 %v1306, %v1302
        %v1335 = vpack.c.b16 %v1307, %v1303
        %v1336 = vpack.c.b16 %v1312, %v1308
        %v1337 = vpack.c.b16 %v1313, %v1309
        %v1338 = vpack.c.b16 %v1314, %v1310
        %v1339 = vpack.c.b16 %v1315, %v1311
        %v1365 = vsel %vm867, %v1218, 0
        %1367 = vmatprep.subr.bf16.mxu0 0
        %1368 = vmatpush1.bf16.msra.mxu0 0
        %1369 = vmatprep.subr.bf16.mxu0 0
        %1370 = vmatpush1.bf16.msra.mxu0 0
        %1371 = vmatprep.subr.bf16.mxu0 %v1337
        %1372 = vmatpush1.bf16.msra.mxu0 %v1336
        %1373 = vmatprep.subr.bf16.mxu0 %v1333
        %1374 = vmatpush1.bf16.msra.mxu0 %v1332
        %1375 = vmatprep.subr.bf16.mxu0 %v1329
        %1376 = vmatpush1.bf16.msra.mxu0 %v1328
        %1377 = vmatprep.subr.bf16.mxu0 %v1325
        %1378 = vmatpush1.bf16.msra.mxu0 %v1324
        %1379 = vmatprep.subr.bf16.mxu0 %v1321
        %1380 = vmatpush1.bf16.msra.mxu0 %v1320
        %1381 = vmatprep.subr.bf16.mxu0 %v1317
        %1382 = vmatpush1.bf16.msra.mxu0 %v1316
        %1383 = vmatprep.subr.bf16.mxu0 0
        %1384 = vmatpush2.bf16.msra.mxu0 0
        %1385 = vmatprep.subr.bf16.mxu0 0
        %1386 = vmatpush2.bf16.msra.mxu0 0
        %1387 = vmatprep.subr.bf16.mxu0 0
        %1388 = vmatpush2.bf16.msra.mxu0 0
        %1389 = vmatprep.subr.bf16.mxu0 0
        %1390 = vmatpush2.bf16.msra.mxu0 0
        %1391 = vmatprep.subr.bf16.mxu0 0
        %1392 = vmatpush2.bf16.msra.mxu0 0
        %1393 = vmatprep.subr.bf16.mxu0 0
        %1394 = vmatpush2.bf16.msra.mxu0 0
        %1395 = vmatprep.subr.bf16.mxu0 0
        %1396 = vmatpush2.bf16.msra.mxu0 0
        %1397 = vmatprep.subr.bf16.mxu0 0
        %1398 = vmatpush2.bf16.msra.mxu0 0
        %1399 = vmatprep.mubr.bf16.mxu0 0
        %1400 = vmatmul.mubr.bf16.gmra.mxu0 %v1365
        %v1401 = vpop.f32.mrf.mxu0
        %v1402 = vadd.f32 0.0, %v1401
        %v1403 = vpop.f32.mrf.mxu0
        %v1404 = vadd.f32 0.0, %v1403
        %v1405 = vpop.f32.mrf.mxu0
        %v1406 = vadd.f32 0.0, %v1405
        %v1407 = vpop.f32.mrf.mxu0
        %v1408 = vadd.f32 0.0, %v1407
        %1409 = vdwg.mxu0
        %1410 = vmatprep.subr.bf16.mxu0 0
        %1411 = vmatpush1.bf16.msra.mxu0 0
        %1412 = vmatprep.subr.bf16.mxu0 0
        %1413 = vmatpush1.bf16.msra.mxu0 0
        %1414 = vmatprep.subr.bf16.mxu0 %v1339
        %1415 = vmatpush1.bf16.msra.mxu0 %v1338
        %1416 = vmatprep.subr.bf16.mxu0 %v1335
        %1417 = vmatpush1.bf16.msra.mxu0 %v1334
        %1418 = vmatprep.subr.bf16.mxu0 %v1331
        %1419 = vmatpush1.bf16.msra.mxu0 %v1330
        %1420 = vmatprep.subr.bf16.mxu0 %v1327
        %1421 = vmatpush1.bf16.msra.mxu0 %v1326
        %1422 = vmatprep.subr.bf16.mxu0 %v1323
        %1423 = vmatpush1.bf16.msra.mxu0 %v1322
        %1424 = vmatprep.subr.bf16.mxu0 %v1319
        %1425 = vmatpush1.bf16.msra.mxu0 %v1318
        %1426 = vmatprep.subr.bf16.mxu0 0
        %1427 = vmatpush2.bf16.msra.mxu0 0
        %1428 = vmatprep.subr.bf16.mxu0 0
        %1429 = vmatpush2.bf16.msra.mxu0 0
        %1430 = vmatprep.subr.bf16.mxu0 0
        %1431 = vmatpush2.bf16.msra.mxu0 0
        %1432 = vmatprep.subr.bf16.mxu0 0
        %1433 = vmatpush2.bf16.msra.mxu0 0
        %1434 = vmatprep.subr.bf16.mxu0 0
        %1435 = vmatpush2.bf16.msra.mxu0 0
        %1436 = vmatprep.subr.bf16.mxu0 0
        %1437 = vmatpush2.bf16.msra.mxu0 0
        %1438 = vmatprep.subr.bf16.mxu0 0
        %1439 = vmatpush2.bf16.msra.mxu0 0
        %1440 = vmatprep.subr.bf16.mxu0 0
        %1441 = vmatpush2.bf16.msra.mxu0 0
        %1442 = vmatprep.mubr.bf16.mxu0 0
        %1443 = vmatmul.mubr.bf16.gmra.mxu0 %v1365
        %v1444 = vpop.f32.mrf.mxu0
        %v1445 = vadd.f32 0.0, %v1444
        %v1446 = vpop.f32.mrf.mxu0
        %v1447 = vadd.f32 0.0, %v1446
        %v1448 = vpop.f32.mrf.mxu0
        %v1449 = vadd.f32 0.0, %v1448
        %v1450 = vpop.f32.mrf.mxu0
        %v1451 = vadd.f32 0.0, %v1450
        %1452 = vdwg.mxu0
        %v1453 = vadd.f32 %v1115, %v1402
        %v1454 = vadd.f32 %v1117, %v1404
        %v1455 = vadd.f32 %v1158, %v1445
        %v1456 = vadd.f32 %v1160, %v1447
        %v1457 = vadd.f32 %v1119, %v1406
        %v1458 = vadd.f32 %v1121, %v1408
        %v1459 = vadd.f32 %v1162, %v1449
        %v1460 = vadd.f32 %v1164, %v1451
        %v1461 = vld [vmem:[#allocation2] sm:$0xf]
        %v1463 = vlaneseq
        %v1464 = vshrl.u32 %v1463, 7
        %v1465 = vsub.s32 0, %v1464
        %v1466 = vrot.slane %v1461, %v1465
        %v1467 = vlaneseq
        %v1468 = vshrl.u32 %v1467, 7
        %v1469 = vsub.s32 1, %v1468
        %v1470 = vrot.slane %v1461, %v1469
        %v1471 = vlaneseq
        %v1472 = vshrl.u32 %v1471, 7
        %v1473 = vsub.s32 2, %v1472
        %v1474 = vrot.slane %v1461, %v1473
        %v1475 = vlaneseq
        %v1476 = vshrl.u32 %v1475, 7
        %v1477 = vsub.s32 3, %v1476
        %v1478 = vrot.slane %v1461, %v1477
        %v1483 = vadd.f32 %v1453, %v1466
        %v1484 = vadd.f32 %v1454, %v1470
        %v1485 = vadd.f32 %v1455, %v1474
        %v1486 = vadd.f32 %v1456, %v1478
        %v1487 = vadd.f32 %v1457, %v1466
        %v1488 = vadd.f32 %v1458, %v1470
        %v1489 = vadd.f32 %v1459, %v1474
        %v1490 = vadd.f32 %v1460, %v1478
        %v1491 = vmax.f32 %v1483, 0.0
        %v1492 = vmax.f32 %v1484, 0.0
        %v1493 = vmax.f32 %v1485, 0.0
        %v1494 = vmax.f32 %v1486, 0.0
        %v1495 = vmax.f32 %v1487, 0.0
        %v1496 = vmax.f32 %v1488, 0.0
        %v1497 = vmax.f32 %v1489, 0.0
        %v1498 = vmax.f32 %v1490, 0.0
        %v1499 = vpack.c.bf16 %v1495, %v1491
        %v1500 = vpack.c.bf16 %v1496, %v1492
        %v1501 = vpack.c.bf16 %v1497, %v1493
        %v1502 = vpack.c.bf16 %v1498, %v1494
        %v1503 = vld [vmem:[#allocation4] sm:$0xf]
        %vm1504 = vcmask 130048
        %v1506 = vsel %vm1504, %v1503, 0
        %1508 = vmatprep.subr.bf16.mxu0 0
        %1509 = vmatpush1.bf16.msra.mxu0 0
        %1510 = vmatprep.subr.bf16.mxu0 0
        %1511 = vmatpush1.bf16.msra.mxu0 0
        %1512 = vmatprep.subr.bf16.mxu0 0
        %1513 = vmatpush1.bf16.msra.mxu0 0
        %1514 = vmatprep.subr.bf16.mxu0 0
        %1515 = vmatpush1.bf16.msra.mxu0 0
        %1516 = vmatprep.subr.bf16.mxu0 0
        %1517 = vmatpush1.bf16.msra.mxu0 0
        %1518 = vmatprep.subr.bf16.mxu0 0
        %1519 = vmatpush1.bf16.msra.mxu0 0
        %1520 = vmatprep.subr.bf16.mxu0 0
        %1521 = vmatpush1.bf16.msra.mxu0 0
        %1522 = vmatprep.subr.bf16.mxu0 %v1500
        %1523 = vmatpush1.bf16.msra.mxu0 %v1499
        %1524 = vmatprep.subr.bf16.mxu0 0
        %1525 = vmatpush2.bf16.msra.mxu0 0
        %1526 = vmatprep.subr.bf16.mxu0 0
        %1527 = vmatpush2.bf16.msra.mxu0 0
        %1528 = vmatprep.subr.bf16.mxu0 0
        %1529 = vmatpush2.bf16.msra.mxu0 0
        %1530 = vmatprep.subr.bf16.mxu0 0
        %1531 = vmatpush2.bf16.msra.mxu0 0
        %1532 = vmatprep.subr.bf16.mxu0 0
        %1533 = vmatpush2.bf16.msra.mxu0 0
        %1534 = vmatprep.subr.bf16.mxu0 0
        %1535 = vmatpush2.bf16.msra.mxu0 0
        %1536 = vmatprep.subr.bf16.mxu0 0
        %1537 = vmatpush2.bf16.msra.mxu0 0
        %1538 = vmatprep.subr.bf16.mxu0 0
        %1539 = vmatpush2.bf16.msra.mxu0 0
        %1540 = vmatprep.mubr.bf16.mxu0 0
        %1541 = vmatmul.mubr.bf16.gmra.mxu0 %v1506
        %v1542 = vpop.f32.mrf.mxu0
        %v1543 = vadd.f32 0.0, %v1542
        %v1544 = vpop.f32.mrf.mxu0
        %v1545 = vadd.f32 0.0, %v1544
        %v1546 = vpop.f32.mrf.mxu0
        %v1547 = vpop.f32.mrf.mxu0
        %1548 = vdwg.mxu0
        %1549 = vmatprep.subr.bf16.mxu0 0
        %1550 = vmatpush1.bf16.msra.mxu0 0
        %1551 = vmatprep.subr.bf16.mxu0 0
        %1552 = vmatpush1.bf16.msra.mxu0 0
        %1553 = vmatprep.subr.bf16.mxu0 0
        %1554 = vmatpush1.bf16.msra.mxu0 0
        %1555 = vmatprep.subr.bf16.mxu0 0
        %1556 = vmatpush1.bf16.msra.mxu0 0
        %1557 = vmatprep.subr.bf16.mxu0 0
        %1558 = vmatpush1.bf16.msra.mxu0 0
        %1559 = vmatprep.subr.bf16.mxu0 0
        %1560 = vmatpush1.bf16.msra.mxu0 0
        %1561 = vmatprep.subr.bf16.mxu0 0
        %1562 = vmatpush1.bf16.msra.mxu0 0
        %1563 = vmatprep.subr.bf16.mxu0 %v1502
        %1564 = vmatpush1.bf16.msra.mxu0 %v1501
        %1565 = vmatprep.subr.bf16.mxu0 0
        %1566 = vmatpush2.bf16.msra.mxu0 0
        %1567 = vmatprep.subr.bf16.mxu0 0
        %1568 = vmatpush2.bf16.msra.mxu0 0
        %1569 = vmatprep.subr.bf16.mxu0 0
        %1570 = vmatpush2.bf16.msra.mxu0 0
        %1571 = vmatprep.subr.bf16.mxu0 0
        %1572 = vmatpush2.bf16.msra.mxu0 0
        %1573 = vmatprep.subr.bf16.mxu0 0
        %1574 = vmatpush2.bf16.msra.mxu0 0
        %1575 = vmatprep.subr.bf16.mxu0 0
        %1576 = vmatpush2.bf16.msra.mxu0 0
        %1577 = vmatprep.subr.bf16.mxu0 0
        %1578 = vmatpush2.bf16.msra.mxu0 0
        %1579 = vmatprep.subr.bf16.mxu0 0
        %1580 = vmatpush2.bf16.msra.mxu0 0
        %1581 = vmatprep.mubr.bf16.mxu0 0
        %1582 = vmatmul.mubr.bf16.gmra.mxu0 %v1506
        %v1583 = vpop.f32.mrf.mxu0
        %v1584 = vadd.f32 0.0, %v1583
        %v1585 = vpop.f32.mrf.mxu0
        %v1586 = vadd.f32 0.0, %v1585
        %v1587 = vpop.f32.mrf.mxu0
        %v1588 = vpop.f32.mrf.mxu0
        %1589 = vdwg.mxu0
        %v1590 = vpack.c.bf16 %v1543, %v1543
        %v1591 = vpack.c.bf16 %v1545, %v1545
        %v1592 = vpack.c.bf16 %v1584, %v1584
        %v1593 = vpack.c.bf16 %v1586, %v1586
        %v1594 = vld [vmem:[%s5] sm:$0xf]
        %v1595 = vld [vmem:[%s5 + $0x4] sm:$0xf]
        %v1596 = vld [vmem:[%s5 + $0x8] sm:$0xf]
        %v1597 = vld [vmem:[%s5 + $0xc] sm:$0xf]
        %v1598 = vld [vmem:[%s5 + $0x10] sm:$0xf]
        %v1599 = vld [vmem:[%s5 + $0x14] sm:$0xf]
        %v1600 = vld [vmem:[%s5 + $0x18] sm:$0xf]
        %v1601 = vld [vmem:[%s5 + $0x1c] sm:$0xf]
        %v1602 = vld [vmem:[%s5 + $0x20] sm:$0xf]
        %v1603 = vld [vmem:[%s5 + $0x24] sm:$0xf]
        %v1604 = vld [vmem:[%s5 + $0x28] sm:$0xf]
        %v1605 = vld [vmem:[%s5 + $0x2c] sm:$0xf]
        %v1606 = vld [vmem:[%s5 + $0x30] sm:$0xf]
        %v1607 = vld [vmem:[%s5 + $0x34] sm:$0xf]
        %v1608 = vld [vmem:[%s5 + $0x38] sm:$0xf]
        %v1609 = vld [vmem:[%s5 + $0x3c] sm:$0xf]
        %v1610 = vld [vmem:[%s5 + $0x40] sm:$0xf]
        %v1611 = vld [vmem:[%s5 + $0x44] sm:$0xf]
        %v1612 = vld [vmem:[%s5 + $0x48] sm:$0xf]
        %v1613 = vld [vmem:[%s5 + $0x4c] sm:$0xf]
        %v1614 = vld [vmem:[%s5 + $0x50] sm:$0xf]
        %v1615 = vld [vmem:[%s5 + $0x54] sm:$0xf]
        %v1616 = vld [vmem:[%s5 + $0x58] sm:$0xf]
        %v1617 = vld [vmem:[%s5 + $0x5c] sm:$0xf]
        %v1618 = vld [vmem:[%s5 + $0x60] sm:$0xf]
        %v1619 = vld [vmem:[%s5 + $0x64] sm:$0xf]
        %v1620 = vld [vmem:[%s5 + $0x68] sm:$0xf]
        %v1621 = vld [vmem:[%s5 + $0x6c] sm:$0xf]
        %v1622 = vld [vmem:[%s5 + $0x70] sm:$0xf]
        %v1623 = vld [vmem:[%s5 + $0x74] sm:$0xf]
        %v1624 = vld [vmem:[%s5 + $0x78] sm:$0xf]
        %v1625 = vld [vmem:[%s5 + $0x7c] sm:$0xf]
        %v1626 = vld [vmem:[%s5 + $0x80] sm:$0xf]
        %v1627 = vld [vmem:[%s5 + $0x84] sm:$0xf]
        %v1628 = vld [vmem:[%s5 + $0x88] sm:$0xf]
        %v1629 = vld [vmem:[%s5 + $0x8c] sm:$0xf]
        %v1630 = vld [vmem:[%s5 + $0x90] sm:$0xf]
        %v1631 = vld [vmem:[%s5 + $0x94] sm:$0xf]
        %v1632 = vld [vmem:[%s5 + $0x98] sm:$0xf]
        %v1633 = vld [vmem:[%s5 + $0x9c] sm:$0xf]
        %v1634 = vld [vmem:[%s5 + $0xa0] sm:$0xf]
        %v1635 = vld [vmem:[%s5 + $0xa4] sm:$0xf]
        %v1636 = vld [vmem:[%s5 + $0xa8] sm:$0xf]
        %v1637 = vld [vmem:[%s5 + $0xac] sm:$0xf]
        %v1638 = vld [vmem:[%s5 + $0xb0] sm:$0xf]
        %v1639 = vld [vmem:[%s5 + $0xb4] sm:$0xf]
        %v1640 = vld [vmem:[%s5 + $0xb8] sm:$0xf]
        %v1641 = vld [vmem:[%s5 + $0xbc] sm:$0xf]
        %v1642 = vld [vmem:[%s5 + $0xc0] sm:$0xf]
        %v1643 = vld [vmem:[%s5 + $0xc4] sm:$0xf]
        %v1644 = vld [vmem:[%s5 + $0xc8] sm:$0xf]
        %v1645 = vld [vmem:[%s5 + $0xcc] sm:$0xf]
        %v1646 = vld [vmem:[%s5 + $0xd0] sm:$0xf]
        %v1647 = vld [vmem:[%s5 + $0xd4] sm:$0xf]
        %v1648 = vld [vmem:[%s5 + $0xd8] sm:$0xf]
        %v1649 = vld [vmem:[%s5 + $0xdc] sm:$0xf]
        %v1650 = vld [vmem:[%s5 + $0xe0] sm:$0xf]
        %v1651 = vld [vmem:[%s5 + $0xe4] sm:$0xf]
        %v1652 = vld [vmem:[%s5 + $0xe8] sm:$0xf]
        %v1653 = vld [vmem:[%s5 + $0xec] sm:$0xf]
        %v1654 = vld [vmem:[%s5 + $0xf0] sm:$0xf]
        %v1655 = vld [vmem:[%s5 + $0xf4] sm:$0xf]
        %v1656 = vld [vmem:[%s5 + $0xf8] sm:$0xf]
        %v1657 = vld [vmem:[%s5 + $0xfc] sm:$0xf]
        %s1658 = scalar_lea.vmem [#allocation4], 4
        %v1659 = vld [vmem:[%s1658] sm:$0xf]
        %v1661 = vsel %vm1504, %v1659, 0
        %1663 = vmatprep.subr.bf16.mxu0 0
        %1664 = vmatpush1.bf16.msra.mxu0 0
        %1665 = vmatprep.subr.bf16.mxu0 0
        %1666 = vmatpush1.bf16.msra.mxu0 0
        %1667 = vmatprep.subr.bf16.mxu0 0
        %1668 = vmatpush1.bf16.msra.mxu0 0
        %1669 = vmatprep.subr.bf16.mxu0 0
        %1670 = vmatpush1.bf16.msra.mxu0 0
        %1671 = vmatprep.subr.bf16.mxu0 0
        %1672 = vmatpush1.bf16.msra.mxu0 0
        %1673 = vmatprep.subr.bf16.mxu0 0
        %1674 = vmatpush1.bf16.msra.mxu0 0
        %1675 = vmatprep.subr.bf16.mxu0 0
        %1676 = vmatpush1.bf16.msra.mxu0 0
        %1677 = vmatprep.subr.bf16.mxu0 %v1500
        %1678 = vmatpush1.bf16.msra.mxu0 %v1499
        %1679 = vmatprep.subr.bf16.mxu0 0
        %1680 = vmatpush2.bf16.msra.mxu0 0
        %1681 = vmatprep.subr.bf16.mxu0 0
        %1682 = vmatpush2.bf16.msra.mxu0 0
        %1683 = vmatprep.subr.bf16.mxu0 0
        %1684 = vmatpush2.bf16.msra.mxu0 0
        %1685 = vmatprep.subr.bf16.mxu0 0
        %1686 = vmatpush2.bf16.msra.mxu0 0
        %1687 = vmatprep.subr.bf16.mxu0 0
        %1688 = vmatpush2.bf16.msra.mxu0 0
        %1689 = vmatprep.subr.bf16.mxu0 0
        %1690 = vmatpush2.bf16.msra.mxu0 0
        %1691 = vmatprep.subr.bf16.mxu0 0
        %1692 = vmatpush2.bf16.msra.mxu0 0
        %1693 = vmatprep.subr.bf16.mxu0 0
        %1694 = vmatpush2.bf16.msra.mxu0 0
        %1695 = vmatprep.mubr.bf16.mxu0 0
        %1696 = vmatmul.mubr.bf16.gmra.mxu0 %v1661
        %v1697 = vpop.f32.mrf.mxu0
        %v1698 = vadd.f32 0.0, %v1697
        %v1699 = vpop.f32.mrf.mxu0
        %v1700 = vadd.f32 0.0, %v1699
        %v1701 = vpop.f32.mrf.mxu0
        %v1702 = vpop.f32.mrf.mxu0
        %1703 = vdwg.mxu0
        %1704 = vmatprep.subr.bf16.mxu0 0
        %1705 = vmatpush1.bf16.msra.mxu0 0
        %1706 = vmatprep.subr.bf16.mxu0 0
        %1707 = vmatpush1.bf16.msra.mxu0 0
        %1708 = vmatprep.subr.bf16.mxu0 0
        %1709 = vmatpush1.bf16.msra.mxu0 0
        %1710 = vmatprep.subr.bf16.mxu0 0
        %1711 = vmatpush1.bf16.msra.mxu0 0
        %1712 = vmatprep.subr.bf16.mxu0 0
        %1713 = vmatpush1.bf16.msra.mxu0 0
        %1714 = vmatprep.subr.bf16.mxu0 0
        %1715 = vmatpush1.bf16.msra.mxu0 0
        %1716 = vmatprep.subr.bf16.mxu0 0
        %1717 = vmatpush1.bf16.msra.mxu0 0
        %1718 = vmatprep.subr.bf16.mxu0 %v1502
        %1719 = vmatpush1.bf16.msra.mxu0 %v1501
        %1720 = vmatprep.subr.bf16.mxu0 0
        %1721 = vmatpush2.bf16.msra.mxu0 0
        %1722 = vmatprep.subr.bf16.mxu0 0
        %1723 = vmatpush2.bf16.msra.mxu0 0
        %1724 = vmatprep.subr.bf16.mxu0 0
        %1725 = vmatpush2.bf16.msra.mxu0 0
        %1726 = vmatprep.subr.bf16.mxu0 0
        %1727 = vmatpush2.bf16.msra.mxu0 0
        %1728 = vmatprep.subr.bf16.mxu0 0
        %1729 = vmatpush2.bf16.msra.mxu0 0
        %1730 = vmatprep.subr.bf16.mxu0 0
        %1731 = vmatpush2.bf16.msra.mxu0 0
        %1732 = vmatprep.subr.bf16.mxu0 0
        %1733 = vmatpush2.bf16.msra.mxu0 0
        %1734 = vmatprep.subr.bf16.mxu0 0
        %1735 = vmatpush2.bf16.msra.mxu0 0
        %1736 = vmatprep.mubr.bf16.mxu0 0
        %1737 = vmatmul.mubr.bf16.gmra.mxu0 %v1661
        %v1738 = vpop.f32.mrf.mxu0
        %v1739 = vadd.f32 0.0, %v1738
        %v1740 = vpop.f32.mrf.mxu0
        %v1741 = vadd.f32 0.0, %v1740
        %v1742 = vpop.f32.mrf.mxu0
        %v1743 = vpop.f32.mrf.mxu0
        %1744 = vdwg.mxu0
        %v1745 = vpack.c.bf16 %v1698, %v1698
        %v1746 = vpack.c.bf16 %v1700, %v1700
        %v1747 = vpack.c.bf16 %v1739, %v1739
        %v1748 = vpack.c.bf16 %v1741, %v1741
        %s1749 = scalar_lea.vmem %s5, 256
        %v1750 = vld [vmem:[%s1749] sm:$0xf]
        %v1751 = vld [vmem:[%s1749 + $0x4] sm:$0xf]
        %v1752 = vld [vmem:[%s1749 + $0x8] sm:$0xf]
        %v1753 = vld [vmem:[%s1749 + $0xc] sm:$0xf]
        %v1754 = vld [vmem:[%s1749 + $0x10] sm:$0xf]
        %v1755 = vld [vmem:[%s1749 + $0x14] sm:$0xf]
        %v1756 = vld [vmem:[%s1749 + $0x18] sm:$0xf]
        %v1757 = vld [vmem:[%s1749 + $0x1c] sm:$0xf]
        %v1758 = vld [vmem:[%s1749 + $0x20] sm:$0xf]
        %v1759 = vld [vmem:[%s1749 + $0x24] sm:$0xf]
        %v1760 = vld [vmem:[%s1749 + $0x28] sm:$0xf]
        %v1761 = vld [vmem:[%s1749 + $0x2c] sm:$0xf]
        %v1762 = vld [vmem:[%s1749 + $0x30] sm:$0xf]
        %v1763 = vld [vmem:[%s1749 + $0x34] sm:$0xf]
        %v1764 = vld [vmem:[%s1749 + $0x38] sm:$0xf]
        %v1765 = vld [vmem:[%s1749 + $0x3c] sm:$0xf]
        %v1766 = vld [vmem:[%s1749 + $0x40] sm:$0xf]
        %v1767 = vld [vmem:[%s1749 + $0x44] sm:$0xf]
        %v1768 = vld [vmem:[%s1749 + $0x48] sm:$0xf]
        %v1769 = vld [vmem:[%s1749 + $0x4c] sm:$0xf]
        %v1770 = vld [vmem:[%s1749 + $0x50] sm:$0xf]
        %v1771 = vld [vmem:[%s1749 + $0x54] sm:$0xf]
        %v1772 = vld [vmem:[%s1749 + $0x58] sm:$0xf]
        %v1773 = vld [vmem:[%s1749 + $0x5c] sm:$0xf]
        %v1774 = vld [vmem:[%s1749 + $0x60] sm:$0xf]
        %v1775 = vld [vmem:[%s1749 + $0x64] sm:$0xf]
        %v1776 = vld [vmem:[%s1749 + $0x68] sm:$0xf]
        %v1777 = vld [vmem:[%s1749 + $0x6c] sm:$0xf]
        %v1778 = vld [vmem:[%s1749 + $0x70] sm:$0xf]
        %v1779 = vld [vmem:[%s1749 + $0x74] sm:$0xf]
        %v1780 = vld [vmem:[%s1749 + $0x78] sm:$0xf]
        %v1781 = vld [vmem:[%s1749 + $0x7c] sm:$0xf]
        %v1782 = vld [vmem:[%s1749 + $0x80] sm:$0xf]
        %v1783 = vld [vmem:[%s1749 + $0x84] sm:$0xf]
        %v1784 = vld [vmem:[%s1749 + $0x88] sm:$0xf]
        %v1785 = vld [vmem:[%s1749 + $0x8c] sm:$0xf]
        %v1786 = vld [vmem:[%s1749 + $0x90] sm:$0xf]
        %v1787 = vld [vmem:[%s1749 + $0x94] sm:$0xf]
        %v1788 = vld [vmem:[%s1749 + $0x98] sm:$0xf]
        %v1789 = vld [vmem:[%s1749 + $0x9c] sm:$0xf]
        %v1790 = vld [vmem:[%s1749 + $0xa0] sm:$0xf]
        %v1791 = vld [vmem:[%s1749 + $0xa4] sm:$0xf]
        %v1792 = vld [vmem:[%s1749 + $0xa8] sm:$0xf]
        %v1793 = vld [vmem:[%s1749 + $0xac] sm:$0xf]
        %v1794 = vld [vmem:[%s1749 + $0xb0] sm:$0xf]
        %v1795 = vld [vmem:[%s1749 + $0xb4] sm:$0xf]
        %v1796 = vld [vmem:[%s1749 + $0xb8] sm:$0xf]
        %v1797 = vld [vmem:[%s1749 + $0xbc] sm:$0xf]
        %v1798 = vld [vmem:[%s1749 + $0xc0] sm:$0xf]
        %v1799 = vld [vmem:[%s1749 + $0xc4] sm:$0xf]
        %v1800 = vld [vmem:[%s1749 + $0xc8] sm:$0xf]
        %v1801 = vld [vmem:[%s1749 + $0xcc] sm:$0xf]
        %v1802 = vld [vmem:[%s1749 + $0xd0] sm:$0xf]
        %v1803 = vld [vmem:[%s1749 + $0xd4] sm:$0xf]
        %v1804 = vld [vmem:[%s1749 + $0xd8] sm:$0xf]
        %v1805 = vld [vmem:[%s1749 + $0xdc] sm:$0xf]
        %v1806 = vld [vmem:[%s1749 + $0xe0] sm:$0xf]
        %v1807 = vld [vmem:[%s1749 + $0xe4] sm:$0xf]
        %v1808 = vld [vmem:[%s1749 + $0xe8] sm:$0xf]
        %v1809 = vld [vmem:[%s1749 + $0xec] sm:$0xf]
        %v1810 = vld [vmem:[%s1749 + $0xf0] sm:$0xf]
        %v1811 = vld [vmem:[%s1749 + $0xf4] sm:$0xf]
        %v1812 = vld [vmem:[%s1749 + $0xf8] sm:$0xf]
        %v1813 = vld [vmem:[%s1749 + $0xfc] sm:$0xf]
        %v1878 = vunpack.c.l.b16 %v1750
        %v1879 = vunpack.c.l.b16 %v1751
        %v1880 = vunpack.c.l.b16 %v1752
        %v1881 = vunpack.c.l.b16 %v1753
        %v1882 = vunpack.c.l.b16 %v1754
        %v1883 = vunpack.c.l.b16 %v1755
        %v1884 = vunpack.c.l.b16 %v1756
        %v1885 = vunpack.c.l.b16 %v1757
        %v1886 = vunpack.c.l.b16 %v1758
        %v1887 = vunpack.c.l.b16 %v1759
        %v1888 = vunpack.c.l.b16 %v1760
        %v1889 = vunpack.c.l.b16 %v1761
        %v1890 = vunpack.c.l.b16 %v1762
        %v1891 = vunpack.c.l.b16 %v1763
        %v1892 = vunpack.c.l.b16 %v1764
        %v1893 = vunpack.c.l.b16 %v1765
        %v1894 = vunpack.c.l.b16 %v1766
        %v1895 = vunpack.c.l.b16 %v1767
        %v1896 = vunpack.c.l.b16 %v1768
        %v1897 = vunpack.c.l.b16 %v1769
        %v1898 = vunpack.c.l.b16 %v1770
        %v1899 = vunpack.c.l.b16 %v1771
        %v1900 = vunpack.c.l.b16 %v1772
        %v1901 = vunpack.c.l.b16 %v1773
        %v1902 = vunpack.c.l.b16 %v1774
        %v1903 = vunpack.c.l.b16 %v1775
        %v1904 = vunpack.c.l.b16 %v1776
        %v1905 = vunpack.c.l.b16 %v1777
        %v1906 = vunpack.c.l.b16 %v1778
        %v1907 = vunpack.c.l.b16 %v1779
        %v1908 = vunpack.c.l.b16 %v1780
        %v1909 = vunpack.c.l.b16 %v1781
        %v1910 = vunpack.c.l.b16 %v1782
        %v1911 = vunpack.c.l.b16 %v1783
        %v1912 = vunpack.c.l.b16 %v1784
        %v1913 = vunpack.c.l.b16 %v1785
        %v1914 = vunpack.c.l.b16 %v1786
        %v1915 = vunpack.c.l.b16 %v1787
        %v1916 = vunpack.c.l.b16 %v1788
        %v1917 = vunpack.c.l.b16 %v1789
        %v1918 = vunpack.c.l.b16 %v1790
        %v1919 = vunpack.c.l.b16 %v1791
        %v1920 = vunpack.c.l.b16 %v1792
        %v1921 = vunpack.c.l.b16 %v1793
        %v1922 = vunpack.c.l.b16 %v1794
        %v1923 = vunpack.c.l.b16 %v1795
        %v1924 = vunpack.c.l.b16 %v1796
        %v1925 = vunpack.c.l.b16 %v1797
        %v1926 = vunpack.c.l.b16 %v1798
        %v1927 = vunpack.c.l.b16 %v1799
        %v1928 = vunpack.c.l.b16 %v1800
        %v1929 = vunpack.c.l.b16 %v1801
        %v1930 = vunpack.c.l.b16 %v1802
        %v1931 = vunpack.c.l.b16 %v1803
        %v1932 = vunpack.c.l.b16 %v1804
        %v1933 = vunpack.c.l.b16 %v1805
        %v1934 = vunpack.c.l.b16 %v1806
        %v1935 = vunpack.c.l.b16 %v1807
        %v1936 = vunpack.c.l.b16 %v1808
        %v1937 = vunpack.c.l.b16 %v1809
        %v1938 = vunpack.c.l.b16 %v1810
        %v1939 = vunpack.c.l.b16 %v1811
        %v1940 = vunpack.c.l.b16 %v1812
        %v1941 = vunpack.c.l.b16 %v1813
        %v1942 = vpack.c.b16 %v1879, %v1878
        %v1943 = vpack.c.b16 %v1881, %v1880
        %v1944 = vpack.c.b16 %v1883, %v1882
        %v1945 = vpack.c.b16 %v1885, %v1884
        %v1946 = vpack.c.b16 %v1887, %v1886
        %v1947 = vpack.c.b16 %v1889, %v1888
        %v1948 = vpack.c.b16 %v1891, %v1890
        %v1949 = vpack.c.b16 %v1893, %v1892
        %v1950 = vpack.c.b16 %v1895, %v1894
        %v1951 = vpack.c.b16 %v1897, %v1896
        %v1952 = vpack.c.b16 %v1899, %v1898
        %v1953 = vpack.c.b16 %v1901, %v1900
        %v1954 = vpack.c.b16 %v1903, %v1902
        %v1955 = vpack.c.b16 %v1905, %v1904
        %v1956 = vpack.c.b16 %v1907, %v1906
        %v1957 = vpack.c.b16 %v1909, %v1908
        %v1958 = vpack.c.b16 %v1911, %v1910
        %v1959 = vpack.c.b16 %v1913, %v1912
        %v1960 = vpack.c.b16 %v1915, %v1914
        %v1961 = vpack.c.b16 %v1917, %v1916
        %v1962 = vpack.c.b16 %v1919, %v1918
        %v1963 = vpack.c.b16 %v1921, %v1920
        %v1964 = vpack.c.b16 %v1923, %v1922
        %v1965 = vpack.c.b16 %v1925, %v1924
        %v1966 = vpack.c.b16 %v1927, %v1926
        %v1967 = vpack.c.b16 %v1929, %v1928
        %v1968 = vpack.c.b16 %v1931, %v1930
        %v1969 = vpack.c.b16 %v1933, %v1932
        %v1970 = vpack.c.b16 %v1935, %v1934
        %v1971 = vpack.c.b16 %v1937, %v1936
        %v1972 = vpack.c.b16 %v1939, %v1938
        %v1973 = vpack.c.b16 %v1941, %v1940
        %2006 = vmatprep.subr.bf16.mxu0 0
        %2007 = vmatpush1.bf16.msra.mxu0 %v1949
        %2008 = vmatprep.subr.bf16.mxu0 0
        %2009 = vmatpush1.bf16.msra.mxu0 %v1948
        %2010 = vmatprep.subr.bf16.mxu0 0
        %2011 = vmatpush1.bf16.msra.mxu0 %v1947
        %2012 = vmatprep.subr.bf16.mxu0 0
        %2013 = vmatpush1.bf16.msra.mxu0 %v1946
        %2014 = vmatprep.subr.bf16.mxu0 0
        %2015 = vmatpush1.bf16.msra.mxu0 %v1945
        %2016 = vmatprep.subr.bf16.mxu0 0
        %2017 = vmatpush1.bf16.msra.mxu0 %v1944
        %2018 = vmatprep.subr.bf16.mxu0 0
        %2019 = vmatpush1.bf16.msra.mxu0 %v1943
        %2020 = vmatprep.subr.bf16.mxu0 0
        %2021 = vmatpush1.bf16.msra.mxu0 %v1942
        %2022 = vmatprep.subr.bf16.mxu0 0
        %2023 = vmatpush2.bf16.msra.mxu0 %v1957
        %2024 = vmatprep.subr.bf16.mxu0 0
        %2025 = vmatpush2.bf16.msra.mxu0 %v1956
        %2026 = vmatprep.subr.bf16.mxu0 0
        %2027 = vmatpush2.bf16.msra.mxu0 %v1955
        %2028 = vmatprep.subr.bf16.mxu0 0
        %2029 = vmatpush2.bf16.msra.mxu0 %v1954
        %2030 = vmatprep.subr.bf16.mxu0 0
        %2031 = vmatpush2.bf16.msra.mxu0 %v1953
        %2032 = vmatprep.subr.bf16.mxu0 0
        %2033 = vmatpush2.bf16.msra.mxu0 %v1952
        %2034 = vmatprep.subr.bf16.mxu0 0
        %2035 = vmatpush2.bf16.msra.mxu0 %v1951
        %2036 = vmatprep.subr.bf16.mxu0 0
        %2037 = vmatpush2.bf16.msra.mxu0 %v1950
        %2038 = vmatprep.mubr.bf16.mxu0 %v1746
        %2039 = vmatmul.mubr.bf16.gmra.mxu0 %v1745
        %v2040 = vpop.f32.mrf.mxu0
        %v2041 = vadd.f32 0.0, %v2040
        %v2042 = vpop.f32.mrf.mxu0
        %v2043 = vpop.f32.mrf.mxu0
        %v2044 = vpop.f32.mrf.mxu0
        %2045 = vdwg.mxu0
        %2046 = vmatprep.subr.bf16.mxu0 0
        %2047 = vmatpush1.bf16.msra.mxu0 %v1965
        %2048 = vmatprep.subr.bf16.mxu0 0
        %2049 = vmatpush1.bf16.msra.mxu0 %v1964
        %2050 = vmatprep.subr.bf16.mxu0 0
        %2051 = vmatpush1.bf16.msra.mxu0 %v1963
        %2052 = vmatprep.subr.bf16.mxu0 0
        %2053 = vmatpush1.bf16.msra.mxu0 %v1962
        %2054 = vmatprep.subr.bf16.mxu0 0
        %2055 = vmatpush1.bf16.msra.mxu0 %v1961
        %2056 = vmatprep.subr.bf16.mxu0 0
        %2057 = vmatpush1.bf16.msra.mxu0 %v1960
        %2058 = vmatprep.subr.bf16.mxu0 0
        %2059 = vmatpush1.bf16.msra.mxu0 %v1959
        %2060 = vmatprep.subr.bf16.mxu0 0
        %2061 = vmatpush1.bf16.msra.mxu0 %v1958
        %2062 = vmatprep.subr.bf16.mxu0 0
        %2063 = vmatpush2.bf16.msra.mxu0 %v1973
        %2064 = vmatprep.subr.bf16.mxu0 0
        %2065 = vmatpush2.bf16.msra.mxu0 %v1972
        %2066 = vmatprep.subr.bf16.mxu0 0
        %2067 = vmatpush2.bf16.msra.mxu0 %v1971
        %2068 = vmatprep.subr.bf16.mxu0 0
        %2069 = vmatpush2.bf16.msra.mxu0 %v1970
        %2070 = vmatprep.subr.bf16.mxu0 0
        %2071 = vmatpush2.bf16.msra.mxu0 %v1969
        %2072 = vmatprep.subr.bf16.mxu0 0
        %2073 = vmatpush2.bf16.msra.mxu0 %v1968
        %2074 = vmatprep.subr.bf16.mxu0 0
        %2075 = vmatpush2.bf16.msra.mxu0 %v1967
        %2076 = vmatprep.subr.bf16.mxu0 0
        %2077 = vmatpush2.bf16.msra.mxu0 %v1966
        %2078 = vmatprep.mubr.bf16.mxu0 %v1748
        %2079 = vmatmul.mubr.bf16.gmra.mxu0 %v1747
        %v2080 = vpop.f32.mrf.mxu0
        %v2081 = vadd.f32 %v2041, %v2080
        %v2082 = vpop.f32.mrf.mxu0
        %v2083 = vpop.f32.mrf.mxu0
        %v2084 = vpop.f32.mrf.mxu0
        %2085 = vdwg.mxu0
        %v2150 = vunpack.c.l.b16 %v1594
        %v2151 = vunpack.c.l.b16 %v1595
        %v2152 = vunpack.c.l.b16 %v1596
        %v2153 = vunpack.c.l.b16 %v1597
        %v2154 = vunpack.c.l.b16 %v1598
        %v2155 = vunpack.c.l.b16 %v1599
        %v2156 = vunpack.c.l.b16 %v1600
        %v2157 = vunpack.c.l.b16 %v1601
        %v2158 = vunpack.c.l.b16 %v1602
        %v2159 = vunpack.c.l.b16 %v1603
        %v2160 = vunpack.c.l.b16 %v1604
        %v2161 = vunpack.c.l.b16 %v1605
        %v2162 = vunpack.c.l.b16 %v1606
        %v2163 = vunpack.c.l.b16 %v1607
        %v2164 = vunpack.c.l.b16 %v1608
        %v2165 = vunpack.c.l.b16 %v1609
        %v2166 = vunpack.c.l.b16 %v1610
        %v2167 = vunpack.c.l.b16 %v1611
        %v2168 = vunpack.c.l.b16 %v1612
        %v2169 = vunpack.c.l.b16 %v1613
        %v2170 = vunpack.c.l.b16 %v1614
        %v2171 = vunpack.c.l.b16 %v1615
        %v2172 = vunpack.c.l.b16 %v1616
        %v2173 = vunpack.c.l.b16 %v1617
        %v2174 = vunpack.c.l.b16 %v1618
        %v2175 = vunpack.c.l.b16 %v1619
        %v2176 = vunpack.c.l.b16 %v1620
        %v2177 = vunpack.c.l.b16 %v1621
        %v2178 = vunpack.c.l.b16 %v1622
        %v2179 = vunpack.c.l.b16 %v1623
        %v2180 = vunpack.c.l.b16 %v1624
        %v2181 = vunpack.c.l.b16 %v1625
        %v2182 = vunpack.c.l.b16 %v1626
        %v2183 = vunpack.c.l.b16 %v1627
        %v2184 = vunpack.c.l.b16 %v1628
        %v2185 = vunpack.c.l.b16 %v1629
        %v2186 = vunpack.c.l.b16 %v1630
        %v2187 = vunpack.c.l.b16 %v1631
        %v2188 = vunpack.c.l.b16 %v1632
        %v2189 = vunpack.c.l.b16 %v1633
        %v2190 = vunpack.c.l.b16 %v1634
        %v2191 = vunpack.c.l.b16 %v1635
        %v2192 = vunpack.c.l.b16 %v1636
        %v2193 = vunpack.c.l.b16 %v1637
        %v2194 = vunpack.c.l.b16 %v1638
        %v2195 = vunpack.c.l.b16 %v1639
        %v2196 = vunpack.c.l.b16 %v1640
        %v2197 = vunpack.c.l.b16 %v1641
        %v2198 = vunpack.c.l.b16 %v1642
        %v2199 = vunpack.c.l.b16 %v1643
        %v2200 = vunpack.c.l.b16 %v1644
        %v2201 = vunpack.c.l.b16 %v1645
        %v2202 = vunpack.c.l.b16 %v1646
        %v2203 = vunpack.c.l.b16 %v1647
        %v2204 = vunpack.c.l.b16 %v1648
        %v2205 = vunpack.c.l.b16 %v1649
        %v2206 = vunpack.c.l.b16 %v1650
        %v2207 = vunpack.c.l.b16 %v1651
        %v2208 = vunpack.c.l.b16 %v1652
        %v2209 = vunpack.c.l.b16 %v1653
        %v2210 = vunpack.c.l.b16 %v1654
        %v2211 = vunpack.c.l.b16 %v1655
        %v2212 = vunpack.c.l.b16 %v1656
        %v2213 = vunpack.c.l.b16 %v1657
        %v2214 = vpack.c.b16 %v2151, %v2150
        %v2215 = vpack.c.b16 %v2153, %v2152
        %v2216 = vpack.c.b16 %v2155, %v2154
        %v2217 = vpack.c.b16 %v2157, %v2156
        %v2218 = vpack.c.b16 %v2159, %v2158
        %v2219 = vpack.c.b16 %v2161, %v2160
        %v2220 = vpack.c.b16 %v2163, %v2162
        %v2221 = vpack.c.b16 %v2165, %v2164
        %v2222 = vpack.c.b16 %v2167, %v2166
        %v2223 = vpack.c.b16 %v2169, %v2168
        %v2224 = vpack.c.b16 %v2171, %v2170
        %v2225 = vpack.c.b16 %v2173, %v2172
        %v2226 = vpack.c.b16 %v2175, %v2174
        %v2227 = vpack.c.b16 %v2177, %v2176
        %v2228 = vpack.c.b16 %v2179, %v2178
        %v2229 = vpack.c.b16 %v2181, %v2180
        %v2230 = vpack.c.b16 %v2183, %v2182
        %v2231 = vpack.c.b16 %v2185, %v2184
        %v2232 = vpack.c.b16 %v2187, %v2186
        %v2233 = vpack.c.b16 %v2189, %v2188
        %v2234 = vpack.c.b16 %v2191, %v2190
        %v2235 = vpack.c.b16 %v2193, %v2192
        %v2236 = vpack.c.b16 %v2195, %v2194
        %v2237 = vpack.c.b16 %v2197, %v2196
        %v2238 = vpack.c.b16 %v2199, %v2198
        %v2239 = vpack.c.b16 %v2201, %v2200
        %v2240 = vpack.c.b16 %v2203, %v2202
        %v2241 = vpack.c.b16 %v2205, %v2204
        %v2242 = vpack.c.b16 %v2207, %v2206
        %v2243 = vpack.c.b16 %v2209, %v2208
        %v2244 = vpack.c.b16 %v2211, %v2210
        %v2245 = vpack.c.b16 %v2213, %v2212
        %2278 = vmatprep.subr.bf16.mxu0 0
        %2279 = vmatpush1.bf16.msra.mxu0 %v2221
        %2280 = vmatprep.subr.bf16.mxu0 0
        %2281 = vmatpush1.bf16.msra.mxu0 %v2220
        %2282 = vmatprep.subr.bf16.mxu0 0
        %2283 = vmatpush1.bf16.msra.mxu0 %v2219
        %2284 = vmatprep.subr.bf16.mxu0 0
        %2285 = vmatpush1.bf16.msra.mxu0 %v2218
        %2286 = vmatprep.subr.bf16.mxu0 0
        %2287 = vmatpush1.bf16.msra.mxu0 %v2217
        %2288 = vmatprep.subr.bf16.mxu0 0
        %2289 = vmatpush1.bf16.msra.mxu0 %v2216
        %2290 = vmatprep.subr.bf16.mxu0 0
        %2291 = vmatpush1.bf16.msra.mxu0 %v2215
        %2292 = vmatprep.subr.bf16.mxu0 0
        %2293 = vmatpush1.bf16.msra.mxu0 %v2214
        %2294 = vmatprep.subr.bf16.mxu0 0
        %2295 = vmatpush2.bf16.msra.mxu0 %v2229
        %2296 = vmatprep.subr.bf16.mxu0 0
        %2297 = vmatpush2.bf16.msra.mxu0 %v2228
        %2298 = vmatprep.subr.bf16.mxu0 0
        %2299 = vmatpush2.bf16.msra.mxu0 %v2227
        %2300 = vmatprep.subr.bf16.mxu0 0
        %2301 = vmatpush2.bf16.msra.mxu0 %v2226
        %2302 = vmatprep.subr.bf16.mxu0 0
        %2303 = vmatpush2.bf16.msra.mxu0 %v2225
        %2304 = vmatprep.subr.bf16.mxu0 0
        %2305 = vmatpush2.bf16.msra.mxu0 %v2224
        %2306 = vmatprep.subr.bf16.mxu0 0
        %2307 = vmatpush2.bf16.msra.mxu0 %v2223
        %2308 = vmatprep.subr.bf16.mxu0 0
        %2309 = vmatpush2.bf16.msra.mxu0 %v2222
        %2310 = vmatprep.mubr.bf16.mxu0 %v1591
        %2311 = vmatmul.mubr.bf16.gmra.mxu0 %v1590
        %v2312 = vpop.f32.mrf.mxu0
        %v2313 = vadd.f32 %v2081, %v2312
        %v2314 = vpop.f32.mrf.mxu0
        %v2315 = vpop.f32.mrf.mxu0
        %v2316 = vpop.f32.mrf.mxu0
        %2317 = vdwg.mxu0
        %2318 = vmatprep.subr.bf16.mxu0 0
        %2319 = vmatpush1.bf16.msra.mxu0 %v2237
        %2320 = vmatprep.subr.bf16.mxu0 0
        %2321 = vmatpush1.bf16.msra.mxu0 %v2236
        %2322 = vmatprep.subr.bf16.mxu0 0
        %2323 = vmatpush1.bf16.msra.mxu0 %v2235
        %2324 = vmatprep.subr.bf16.mxu0 0
        %2325 = vmatpush1.bf16.msra.mxu0 %v2234
        %2326 = vmatprep.subr.bf16.mxu0 0
        %2327 = vmatpush1.bf16.msra.mxu0 %v2233
        %2328 = vmatprep.subr.bf16.mxu0 0
        %2329 = vmatpush1.bf16.msra.mxu0 %v2232
        %2330 = vmatprep.subr.bf16.mxu0 0
        %2331 = vmatpush1.bf16.msra.mxu0 %v2231
        %2332 = vmatprep.subr.bf16.mxu0 0
        %2333 = vmatpush1.bf16.msra.mxu0 %v2230
        %2334 = vmatprep.subr.bf16.mxu0 0
        %2335 = vmatpush2.bf16.msra.mxu0 %v2245
        %2336 = vmatprep.subr.bf16.mxu0 0
        %2337 = vmatpush2.bf16.msra.mxu0 %v2244
        %2338 = vmatprep.subr.bf16.mxu0 0
        %2339 = vmatpush2.bf16.msra.mxu0 %v2243
        %2340 = vmatprep.subr.bf16.mxu0 0
        %2341 = vmatpush2.bf16.msra.mxu0 %v2242
        %2342 = vmatprep.subr.bf16.mxu0 0
        %2343 = vmatpush2.bf16.msra.mxu0 %v2241
        %2344 = vmatprep.subr.bf16.mxu0 0
        %2345 = vmatpush2.bf16.msra.mxu0 %v2240
        %2346 = vmatprep.subr.bf16.mxu0 0
        %2347 = vmatpush2.bf16.msra.mxu0 %v2239
        %2348 = vmatprep.subr.bf16.mxu0 0
        %2349 = vmatpush2.bf16.msra.mxu0 %v2238
        %2350 = vmatprep.mubr.bf16.mxu0 %v1593
        %2351 = vmatmul.mubr.bf16.gmra.mxu0 %v1592
        %v2352 = vpop.f32.mrf.mxu0
        %v2353 = vadd.f32 %v2313, %v2352
        %v2354 = vpop.f32.mrf.mxu0
        %v2355 = vpop.f32.mrf.mxu0
        %v2356 = vpop.f32.mrf.mxu0
        %2357 = vdwg.mxu0
        %s2358 = scalar_lea.vmem [#allocation4], 8
        %v2359 = vld [vmem:[%s2358] sm:$0xf]
        %v2361 = vsel %vm1504, %v2359, 0
        %2363 = vmatprep.subr.bf16.mxu0 0
        %2364 = vmatpush1.bf16.msra.mxu0 0
        %2365 = vmatprep.subr.bf16.mxu0 0
        %2366 = vmatpush1.bf16.msra.mxu0 0
        %2367 = vmatprep.subr.bf16.mxu0 0
        %2368 = vmatpush1.bf16.msra.mxu0 0
        %2369 = vmatprep.subr.bf16.mxu0 0
        %2370 = vmatpush1.bf16.msra.mxu0 0
        %2371 = vmatprep.subr.bf16.mxu0 0
        %2372 = vmatpush1.bf16.msra.mxu0 0
        %2373 = vmatprep.subr.bf16.mxu0 0
        %2374 = vmatpush1.bf16.msra.mxu0 0
        %2375 = vmatprep.subr.bf16.mxu0 0
        %2376 = vmatpush1.bf16.msra.mxu0 0
        %2377 = vmatprep.subr.bf16.mxu0 %v1500
        %2378 = vmatpush1.bf16.msra.mxu0 %v1499
        %2379 = vmatprep.subr.bf16.mxu0 0
        %2380 = vmatpush2.bf16.msra.mxu0 0
        %2381 = vmatprep.subr.bf16.mxu0 0
        %2382 = vmatpush2.bf16.msra.mxu0 0
        %2383 = vmatprep.subr.bf16.mxu0 0
        %2384 = vmatpush2.bf16.msra.mxu0 0
        %2385 = vmatprep.subr.bf16.mxu0 0
        %2386 = vmatpush2.bf16.msra.mxu0 0
        %2387 = vmatprep.subr.bf16.mxu0 0
        %2388 = vmatpush2.bf16.msra.mxu0 0
        %2389 = vmatprep.subr.bf16.mxu0 0
        %2390 = vmatpush2.bf16.msra.mxu0 0
        %2391 = vmatprep.subr.bf16.mxu0 0
        %2392 = vmatpush2.bf16.msra.mxu0 0
        %2393 = vmatprep.subr.bf16.mxu0 0
        %2394 = vmatpush2.bf16.msra.mxu0 0
        %2395 = vmatprep.mubr.bf16.mxu0 0
        %2396 = vmatmul.mubr.bf16.gmra.mxu0 %v2361
        %v2397 = vpop.f32.mrf.mxu0
        %v2398 = vadd.f32 0.0, %v2397
        %v2399 = vpop.f32.mrf.mxu0
        %v2400 = vadd.f32 0.0, %v2399
        %v2401 = vpop.f32.mrf.mxu0
        %v2402 = vpop.f32.mrf.mxu0
        %2403 = vdwg.mxu0
        %2404 = vmatprep.subr.bf16.mxu0 0
        %2405 = vmatpush1.bf16.msra.mxu0 0
        %2406 = vmatprep.subr.bf16.mxu0 0
        %2407 = vmatpush1.bf16.msra.mxu0 0
        %2408 = vmatprep.subr.bf16.mxu0 0
        %2409 = vmatpush1.bf16.msra.mxu0 0
        %2410 = vmatprep.subr.bf16.mxu0 0
        %2411 = vmatpush1.bf16.msra.mxu0 0
        %2412 = vmatprep.subr.bf16.mxu0 0
        %2413 = vmatpush1.bf16.msra.mxu0 0
        %2414 = vmatprep.subr.bf16.mxu0 0
        %2415 = vmatpush1.bf16.msra.mxu0 0
        %2416 = vmatprep.subr.bf16.mxu0 0
        %2417 = vmatpush1.bf16.msra.mxu0 0
        %2418 = vmatprep.subr.bf16.mxu0 %v1502
        %2419 = vmatpush1.bf16.msra.mxu0 %v1501
        %2420 = vmatprep.subr.bf16.mxu0 0
        %2421 = vmatpush2.bf16.msra.mxu0 0
        %2422 = vmatprep.subr.bf16.mxu0 0
        %2423 = vmatpush2.bf16.msra.mxu0 0
        %2424 = vmatprep.subr.bf16.mxu0 0
        %2425 = vmatpush2.bf16.msra.mxu0 0
        %2426 = vmatprep.subr.bf16.mxu0 0
        %2427 = vmatpush2.bf16.msra.mxu0 0
        %2428 = vmatprep.subr.bf16.mxu0 0
        %2429 = vmatpush2.bf16.msra.mxu0 0
        %2430 = vmatprep.subr.bf16.mxu0 0
        %2431 = vmatpush2.bf16.msra.mxu0 0
        %2432 = vmatprep.subr.bf16.mxu0 0
        %2433 = vmatpush2.bf16.msra.mxu0 0
        %2434 = vmatprep.subr.bf16.mxu0 0
        %2435 = vmatpush2.bf16.msra.mxu0 0
        %2436 = vmatprep.mubr.bf16.mxu0 0
        %2437 = vmatmul.mubr.bf16.gmra.mxu0 %v2361
        %v2438 = vpop.f32.mrf.mxu0
        %v2439 = vadd.f32 0.0, %v2438
        %v2440 = vpop.f32.mrf.mxu0
        %v2441 = vadd.f32 0.0, %v2440
        %v2442 = vpop.f32.mrf.mxu0
        %v2443 = vpop.f32.mrf.mxu0
        %2444 = vdwg.mxu0
        %v2445 = vpack.c.bf16 %v2398, %v2398
        %v2446 = vpack.c.bf16 %v2400, %v2400
        %v2447 = vpack.c.bf16 %v2439, %v2439
        %v2448 = vpack.c.bf16 %v2441, %v2441
        %s2449 = scalar_lea.vmem %s5, 512
        %v2450 = vld [vmem:[%s2449] sm:$0xf]
        %v2451 = vld [vmem:[%s2449 + $0x4] sm:$0xf]
        %v2452 = vld [vmem:[%s2449 + $0x8] sm:$0xf]
        %v2453 = vld [vmem:[%s2449 + $0xc] sm:$0xf]
        %v2454 = vld [vmem:[%s2449 + $0x10] sm:$0xf]
        %v2455 = vld [vmem:[%s2449 + $0x14] sm:$0xf]
        %v2456 = vld [vmem:[%s2449 + $0x18] sm:$0xf]
        %v2457 = vld [vmem:[%s2449 + $0x1c] sm:$0xf]
        %v2458 = vld [vmem:[%s2449 + $0x20] sm:$0xf]
        %v2459 = vld [vmem:[%s2449 + $0x24] sm:$0xf]
        %v2460 = vld [vmem:[%s2449 + $0x28] sm:$0xf]
        %v2461 = vld [vmem:[%s2449 + $0x2c] sm:$0xf]
        %v2462 = vld [vmem:[%s2449 + $0x30] sm:$0xf]
        %v2463 = vld [vmem:[%s2449 + $0x34] sm:$0xf]
        %v2464 = vld [vmem:[%s2449 + $0x38] sm:$0xf]
        %v2465 = vld [vmem:[%s2449 + $0x3c] sm:$0xf]
        %v2466 = vld [vmem:[%s2449 + $0x40] sm:$0xf]
        %v2467 = vld [vmem:[%s2449 + $0x44] sm:$0xf]
        %v2468 = vld [vmem:[%s2449 + $0x48] sm:$0xf]
        %v2469 = vld [vmem:[%s2449 + $0x4c] sm:$0xf]
        %v2470 = vld [vmem:[%s2449 + $0x50] sm:$0xf]
        %v2471 = vld [vmem:[%s2449 + $0x54] sm:$0xf]
        %v2472 = vld [vmem:[%s2449 + $0x58] sm:$0xf]
        %v2473 = vld [vmem:[%s2449 + $0x5c] sm:$0xf]
        %v2474 = vld [vmem:[%s2449 + $0x60] sm:$0xf]
        %v2475 = vld [vmem:[%s2449 + $0x64] sm:$0xf]
        %v2476 = vld [vmem:[%s2449 + $0x68] sm:$0xf]
        %v2477 = vld [vmem:[%s2449 + $0x6c] sm:$0xf]
        %v2478 = vld [vmem:[%s2449 + $0x70] sm:$0xf]
        %v2479 = vld [vmem:[%s2449 + $0x74] sm:$0xf]
        %v2480 = vld [vmem:[%s2449 + $0x78] sm:$0xf]
        %v2481 = vld [vmem:[%s2449 + $0x7c] sm:$0xf]
        %v2482 = vld [vmem:[%s2449 + $0x80] sm:$0xf]
        %v2483 = vld [vmem:[%s2449 + $0x84] sm:$0xf]
        %v2484 = vld [vmem:[%s2449 + $0x88] sm:$0xf]
        %v2485 = vld [vmem:[%s2449 + $0x8c] sm:$0xf]
        %v2486 = vld [vmem:[%s2449 + $0x90] sm:$0xf]
        %v2487 = vld [vmem:[%s2449 + $0x94] sm:$0xf]
        %v2488 = vld [vmem:[%s2449 + $0x98] sm:$0xf]
        %v2489 = vld [vmem:[%s2449 + $0x9c] sm:$0xf]
        %v2490 = vld [vmem:[%s2449 + $0xa0] sm:$0xf]
        %v2491 = vld [vmem:[%s2449 + $0xa4] sm:$0xf]
        %v2492 = vld [vmem:[%s2449 + $0xa8] sm:$0xf]
        %v2493 = vld [vmem:[%s2449 + $0xac] sm:$0xf]
        %v2494 = vld [vmem:[%s2449 + $0xb0] sm:$0xf]
        %v2495 = vld [vmem:[%s2449 + $0xb4] sm:$0xf]
        %v2496 = vld [vmem:[%s2449 + $0xb8] sm:$0xf]
        %v2497 = vld [vmem:[%s2449 + $0xbc] sm:$0xf]
        %v2498 = vld [vmem:[%s2449 + $0xc0] sm:$0xf]
        %v2499 = vld [vmem:[%s2449 + $0xc4] sm:$0xf]
        %v2500 = vld [vmem:[%s2449 + $0xc8] sm:$0xf]
        %v2501 = vld [vmem:[%s2449 + $0xcc] sm:$0xf]
        %v2502 = vld [vmem:[%s2449 + $0xd0] sm:$0xf]
        %v2503 = vld [vmem:[%s2449 + $0xd4] sm:$0xf]
        %v2504 = vld [vmem:[%s2449 + $0xd8] sm:$0xf]
        %v2505 = vld [vmem:[%s2449 + $0xdc] sm:$0xf]
        %v2506 = vld [vmem:[%s2449 + $0xe0] sm:$0xf]
        %v2507 = vld [vmem:[%s2449 + $0xe4] sm:$0xf]
        %v2508 = vld [vmem:[%s2449 + $0xe8] sm:$0xf]
        %v2509 = vld [vmem:[%s2449 + $0xec] sm:$0xf]
        %v2510 = vld [vmem:[%s2449 + $0xf0] sm:$0xf]
        %v2511 = vld [vmem:[%s2449 + $0xf4] sm:$0xf]
        %v2512 = vld [vmem:[%s2449 + $0xf8] sm:$0xf]
        %v2513 = vld [vmem:[%s2449 + $0xfc] sm:$0xf]
        %v2578 = vunpack.c.l.b16 %v2450
        %v2579 = vunpack.c.l.b16 %v2451
        %v2580 = vunpack.c.l.b16 %v2452
        %v2581 = vunpack.c.l.b16 %v2453
        %v2582 = vunpack.c.l.b16 %v2454
        %v2583 = vunpack.c.l.b16 %v2455
        %v2584 = vunpack.c.l.b16 %v2456
        %v2585 = vunpack.c.l.b16 %v2457
        %v2586 = vunpack.c.l.b16 %v2458
        %v2587 = vunpack.c.l.b16 %v2459
        %v2588 = vunpack.c.l.b16 %v2460
        %v2589 = vunpack.c.l.b16 %v2461
        %v2590 = vunpack.c.l.b16 %v2462
        %v2591 = vunpack.c.l.b16 %v2463
        %v2592 = vunpack.c.l.b16 %v2464
        %v2593 = vunpack.c.l.b16 %v2465
        %v2594 = vunpack.c.l.b16 %v2466
        %v2595 = vunpack.c.l.b16 %v2467
        %v2596 = vunpack.c.l.b16 %v2468
        %v2597 = vunpack.c.l.b16 %v2469
        %v2598 = vunpack.c.l.b16 %v2470
        %v2599 = vunpack.c.l.b16 %v2471
        %v2600 = vunpack.c.l.b16 %v2472
        %v2601 = vunpack.c.l.b16 %v2473
        %v2602 = vunpack.c.l.b16 %v2474
        %v2603 = vunpack.c.l.b16 %v2475
        %v2604 = vunpack.c.l.b16 %v2476
        %v2605 = vunpack.c.l.b16 %v2477
        %v2606 = vunpack.c.l.b16 %v2478
        %v2607 = vunpack.c.l.b16 %v2479
        %v2608 = vunpack.c.l.b16 %v2480
        %v2609 = vunpack.c.l.b16 %v2481
        %v2610 = vunpack.c.l.b16 %v2482
        %v2611 = vunpack.c.l.b16 %v2483
        %v2612 = vunpack.c.l.b16 %v2484
        %v2613 = vunpack.c.l.b16 %v2485
        %v2614 = vunpack.c.l.b16 %v2486
        %v2615 = vunpack.c.l.b16 %v2487
        %v2616 = vunpack.c.l.b16 %v2488
        %v2617 = vunpack.c.l.b16 %v2489
        %v2618 = vunpack.c.l.b16 %v2490
        %v2619 = vunpack.c.l.b16 %v2491
        %v2620 = vunpack.c.l.b16 %v2492
        %v2621 = vunpack.c.l.b16 %v2493
        %v2622 = vunpack.c.l.b16 %v2494
        %v2623 = vunpack.c.l.b16 %v2495
        %v2624 = vunpack.c.l.b16 %v2496
        %v2625 = vunpack.c.l.b16 %v2497
        %v2626 = vunpack.c.l.b16 %v2498
        %v2627 = vunpack.c.l.b16 %v2499
        %v2628 = vunpack.c.l.b16 %v2500
        %v2629 = vunpack.c.l.b16 %v2501
        %v2630 = vunpack.c.l.b16 %v2502
        %v2631 = vunpack.c.l.b16 %v2503
        %v2632 = vunpack.c.l.b16 %v2504
        %v2633 = vunpack.c.l.b16 %v2505
        %v2634 = vunpack.c.l.b16 %v2506
        %v2635 = vunpack.c.l.b16 %v2507
        %v2636 = vunpack.c.l.b16 %v2508
        %v2637 = vunpack.c.l.b16 %v2509
        %v2638 = vunpack.c.l.b16 %v2510
        %v2639 = vunpack.c.l.b16 %v2511
        %v2640 = vunpack.c.l.b16 %v2512
        %v2641 = vunpack.c.l.b16 %v2513
        %v2642 = vpack.c.b16 %v2579, %v2578
        %v2643 = vpack.c.b16 %v2581, %v2580
        %v2644 = vpack.c.b16 %v2583, %v2582
        %v2645 = vpack.c.b16 %v2585, %v2584
        %v2646 = vpack.c.b16 %v2587, %v2586
        %v2647 = vpack.c.b16 %v2589, %v2588
        %v2648 = vpack.c.b16 %v2591, %v2590
        %v2649 = vpack.c.b16 %v2593, %v2592
        %v2650 = vpack.c.b16 %v2595, %v2594
        %v2651 = vpack.c.b16 %v2597, %v2596
        %v2652 = vpack.c.b16 %v2599, %v2598
        %v2653 = vpack.c.b16 %v2601, %v2600
        %v2654 = vpack.c.b16 %v2603, %v2602
        %v2655 = vpack.c.b16 %v2605, %v2604
        %v2656 = vpack.c.b16 %v2607, %v2606
        %v2657 = vpack.c.b16 %v2609, %v2608
        %v2658 = vpack.c.b16 %v2611, %v2610
        %v2659 = vpack.c.b16 %v2613, %v2612
        %v2660 = vpack.c.b16 %v2615, %v2614
        %v2661 = vpack.c.b16 %v2617, %v2616
        %v2662 = vpack.c.b16 %v2619, %v2618
        %v2663 = vpack.c.b16 %v2621, %v2620
        %v2664 = vpack.c.b16 %v2623, %v2622
        %v2665 = vpack.c.b16 %v2625, %v2624
        %v2666 = vpack.c.b16 %v2627, %v2626
        %v2667 = vpack.c.b16 %v2629, %v2628
        %v2668 = vpack.c.b16 %v2631, %v2630
        %v2669 = vpack.c.b16 %v2633, %v2632
        %v2670 = vpack.c.b16 %v2635, %v2634
        %v2671 = vpack.c.b16 %v2637, %v2636
        %v2672 = vpack.c.b16 %v2639, %v2638
        %v2673 = vpack.c.b16 %v2641, %v2640
        %2706 = vmatprep.subr.bf16.mxu0 0
        %2707 = vmatpush1.bf16.msra.mxu0 %v2649
        %2708 = vmatprep.subr.bf16.mxu0 0
        %2709 = vmatpush1.bf16.msra.mxu0 %v2648
        %2710 = vmatprep.subr.bf16.mxu0 0
        %2711 = vmatpush1.bf16.msra.mxu0 %v2647
        %2712 = vmatprep.subr.bf16.mxu0 0
        %2713 = vmatpush1.bf16.msra.mxu0 %v2646
        %2714 = vmatprep.subr.bf16.mxu0 0
        %2715 = vmatpush1.bf16.msra.mxu0 %v2645
        %2716 = vmatprep.subr.bf16.mxu0 0
        %2717 = vmatpush1.bf16.msra.mxu0 %v2644
        %2718 = vmatprep.subr.bf16.mxu0 0
        %2719 = vmatpush1.bf16.msra.mxu0 %v2643
        %2720 = vmatprep.subr.bf16.mxu0 0
        %2721 = vmatpush1.bf16.msra.mxu0 %v2642
        %2722 = vmatprep.subr.bf16.mxu0 0
        %2723 = vmatpush2.bf16.msra.mxu0 %v2657
        %2724 = vmatprep.subr.bf16.mxu0 0
        %2725 = vmatpush2.bf16.msra.mxu0 %v2656
        %2726 = vmatprep.subr.bf16.mxu0 0
        %2727 = vmatpush2.bf16.msra.mxu0 %v2655
        %2728 = vmatprep.subr.bf16.mxu0 0
        %2729 = vmatpush2.bf16.msra.mxu0 %v2654
        %2730 = vmatprep.subr.bf16.mxu0 0
        %2731 = vmatpush2.bf16.msra.mxu0 %v2653
        %2732 = vmatprep.subr.bf16.mxu0 0
        %2733 = vmatpush2.bf16.msra.mxu0 %v2652
        %2734 = vmatprep.subr.bf16.mxu0 0
        %2735 = vmatpush2.bf16.msra.mxu0 %v2651
        %2736 = vmatprep.subr.bf16.mxu0 0
        %2737 = vmatpush2.bf16.msra.mxu0 %v2650
        %2738 = vmatprep.mubr.bf16.mxu0 %v2446
        %2739 = vmatmul.mubr.bf16.gmra.mxu0 %v2445
        %v2740 = vpop.f32.mrf.mxu0
        %v2741 = vadd.f32 0.0, %v2740
        %v2742 = vpop.f32.mrf.mxu0
        %v2743 = vpop.f32.mrf.mxu0
        %v2744 = vpop.f32.mrf.mxu0
        %2745 = vdwg.mxu0
        %2746 = vmatprep.subr.bf16.mxu0 0
        %2747 = vmatpush1.bf16.msra.mxu0 %v2665
        %2748 = vmatprep.subr.bf16.mxu0 0
        %2749 = vmatpush1.bf16.msra.mxu0 %v2664
        %2750 = vmatprep.subr.bf16.mxu0 0
        %2751 = vmatpush1.bf16.msra.mxu0 %v2663
        %2752 = vmatprep.subr.bf16.mxu0 0
        %2753 = vmatpush1.bf16.msra.mxu0 %v2662
        %2754 = vmatprep.subr.bf16.mxu0 0
        %2755 = vmatpush1.bf16.msra.mxu0 %v2661
        %2756 = vmatprep.subr.bf16.mxu0 0
        %2757 = vmatpush1.bf16.msra.mxu0 %v2660
        %2758 = vmatprep.subr.bf16.mxu0 0
        %2759 = vmatpush1.bf16.msra.mxu0 %v2659
        %2760 = vmatprep.subr.bf16.mxu0 0
        %2761 = vmatpush1.bf16.msra.mxu0 %v2658
        %2762 = vmatprep.subr.bf16.mxu0 0
        %2763 = vmatpush2.bf16.msra.mxu0 %v2673
        %2764 = vmatprep.subr.bf16.mxu0 0
        %2765 = vmatpush2.bf16.msra.mxu0 %v2672
        %2766 = vmatprep.subr.bf16.mxu0 0
        %2767 = vmatpush2.bf16.msra.mxu0 %v2671
        %2768 = vmatprep.subr.bf16.mxu0 0
        %2769 = vmatpush2.bf16.msra.mxu0 %v2670
        %2770 = vmatprep.subr.bf16.mxu0 0
        %2771 = vmatpush2.bf16.msra.mxu0 %v2669
        %2772 = vmatprep.subr.bf16.mxu0 0
        %2773 = vmatpush2.bf16.msra.mxu0 %v2668
        %2774 = vmatprep.subr.bf16.mxu0 0
        %2775 = vmatpush2.bf16.msra.mxu0 %v2667
        %2776 = vmatprep.subr.bf16.mxu0 0
        %2777 = vmatpush2.bf16.msra.mxu0 %v2666
        %2778 = vmatprep.mubr.bf16.mxu0 %v2448
        %2779 = vmatmul.mubr.bf16.gmra.mxu0 %v2447
        %v2780 = vpop.f32.mrf.mxu0
        %v2781 = vadd.f32 %v2741, %v2780
        %v2782 = vpop.f32.mrf.mxu0
        %v2783 = vpop.f32.mrf.mxu0
        %v2784 = vpop.f32.mrf.mxu0
        %2785 = vdwg.mxu0
        %v2786 = vadd.f32 %v2353, %v2781
        %v2787 = vld [vmem:[#allocation6] sm:$0x1]
        %v2789 = vlaneseq
        %v2790 = vshrl.u32 %v2789, 7
        %v2791 = vsub.s32 0, %v2790
        %v2792 = vrot.slane %v2787, %v2791
        %v2794 = vadd.f32 %v2786, %v2792
        %v2795 = vmax.f32 %v2794, 0.0
        %v2796 = vpack.c.bf16 %v2795, %v2795
        %v2797 = vld [vmem:[#allocation7] sm:$0x3]
        %vm2798 = vcmask 64512
        %v2800 = vsel %vm2798, %v2797, 0
        %vm2802 = vcmask 1043456
        %v2804 = vsel %vm2802, %v2796, 0
        %2806 = vmatprep.subr.bf16.mxu0 0
        %2807 = vmatpush1.bf16.msra.mxu0 0
        %2808 = vmatprep.subr.bf16.mxu0 0
        %2809 = vmatpush1.bf16.msra.mxu0 0
        %2810 = vmatprep.subr.bf16.mxu0 0
        %2811 = vmatpush1.bf16.msra.mxu0 0
        %2812 = vmatprep.subr.bf16.mxu0 0
        %2813 = vmatpush1.bf16.msra.mxu0 0
        %2814 = vmatprep.subr.bf16.mxu0 0
        %2815 = vmatpush1.bf16.msra.mxu0 0
        %2816 = vmatprep.subr.bf16.mxu0 0
        %2817 = vmatpush1.bf16.msra.mxu0 0
        %2818 = vmatprep.subr.bf16.mxu0 0
        %2819 = vmatpush1.bf16.msra.mxu0 0
        %2820 = vmatprep.subr.bf16.mxu0 0
        %2821 = vmatpush1.bf16.msra.mxu0 %v2804
        %2822 = vmatprep.subr.bf16.mxu0 0
        %2823 = vmatpush2.bf16.msra.mxu0 0
        %2824 = vmatprep.subr.bf16.mxu0 0
        %2825 = vmatpush2.bf16.msra.mxu0 0
        %2826 = vmatprep.subr.bf16.mxu0 0
        %2827 = vmatpush2.bf16.msra.mxu0 0
        %2828 = vmatprep.subr.bf16.mxu0 0
        %2829 = vmatpush2.bf16.msra.mxu0 0
        %2830 = vmatprep.subr.bf16.mxu0 0
        %2831 = vmatpush2.bf16.msra.mxu0 0
        %2832 = vmatprep.subr.bf16.mxu0 0
        %2833 = vmatpush2.bf16.msra.mxu0 0
        %2834 = vmatprep.subr.bf16.mxu0 0
        %2835 = vmatpush2.bf16.msra.mxu0 0
        %2836 = vmatprep.subr.bf16.mxu0 0
        %2837 = vmatpush2.bf16.msra.mxu0 0
        %2838 = vmatprep.mubr.bf16.mxu0 0
        %2839 = vmatmul.mubr.bf16.gmra.mxu0 %v2800
        %v2840 = vpop.f32.mrf.mxu0
        %v2841 = vadd.f32 0.0, %v2840
        %v2842 = vpop.f32.mrf.mxu0
        %v2843 = vpop.f32.mrf.mxu0
        %v2844 = vpop.f32.mrf.mxu0
        %2845 = vdwg.mxu0
        %v2846 = vpack.c.bf16 %v2841, %v2841
        %v2847 = vld [vmem:[%s8] sm:$0xf]
        %v2848 = vld [vmem:[%s8 + $0x4] sm:$0xf]
        %v2849 = vld [vmem:[%s8 + $0x8] sm:$0xf]
        %v2850 = vld [vmem:[%s8 + $0xc] sm:$0xf]
        %v2851 = vld [vmem:[%s8 + $0x10] sm:$0xf]
        %v2852 = vld [vmem:[%s8 + $0x14] sm:$0xf]
        %v2853 = vld [vmem:[%s8 + $0x18] sm:$0xf]
        %v2854 = vld [vmem:[%s8 + $0x1c] sm:$0xf]
        %v2855 = vld [vmem:[%s8 + $0x20] sm:$0xf]
        %v2856 = vld [vmem:[%s8 + $0x24] sm:$0xf]
        %v2857 = vld [vmem:[%s8 + $0x28] sm:$0xf]
        %v2858 = vld [vmem:[%s8 + $0x2c] sm:$0xf]
        %v2859 = vld [vmem:[%s8 + $0x30] sm:$0xf]
        %v2860 = vld [vmem:[%s8 + $0x34] sm:$0xf]
        %v2861 = vld [vmem:[%s8 + $0x38] sm:$0xf]
        %v2862 = vld [vmem:[%s8 + $0x3c] sm:$0xf]
        %s2863 = scalar_lea.vmem [#allocation7], 2
        %v2864 = vld [vmem:[%s2863] sm:$0x3]
        %v2866 = vsel %vm2798, %v2864, 0
        %2868 = vmatprep.subr.bf16.mxu0 0
        %2869 = vmatpush1.bf16.msra.mxu0 0
        %2870 = vmatprep.subr.bf16.mxu0 0
        %2871 = vmatpush1.bf16.msra.mxu0 0
        %2872 = vmatprep.subr.bf16.mxu0 0
        %2873 = vmatpush1.bf16.msra.mxu0 0
        %2874 = vmatprep.subr.bf16.mxu0 0
        %2875 = vmatpush1.bf16.msra.mxu0 0
        %2876 = vmatprep.subr.bf16.mxu0 0
        %2877 = vmatpush1.bf16.msra.mxu0 0
        %2878 = vmatprep.subr.bf16.mxu0 0
        %2879 = vmatpush1.bf16.msra.mxu0 0
        %2880 = vmatprep.subr.bf16.mxu0 0
        %2881 = vmatpush1.bf16.msra.mxu0 0
        %2882 = vmatprep.subr.bf16.mxu0 0
        %2883 = vmatpush1.bf16.msra.mxu0 %v2804
        %2884 = vmatprep.subr.bf16.mxu0 0
        %2885 = vmatpush2.bf16.msra.mxu0 0
        %2886 = vmatprep.subr.bf16.mxu0 0
        %2887 = vmatpush2.bf16.msra.mxu0 0
        %2888 = vmatprep.subr.bf16.mxu0 0
        %2889 = vmatpush2.bf16.msra.mxu0 0
        %2890 = vmatprep.subr.bf16.mxu0 0
        %2891 = vmatpush2.bf16.msra.mxu0 0
        %2892 = vmatprep.subr.bf16.mxu0 0
        %2893 = vmatpush2.bf16.msra.mxu0 0
        %2894 = vmatprep.subr.bf16.mxu0 0
        %2895 = vmatpush2.bf16.msra.mxu0 0
        %2896 = vmatprep.subr.bf16.mxu0 0
        %2897 = vmatpush2.bf16.msra.mxu0 0
        %2898 = vmatprep.subr.bf16.mxu0 0
        %2899 = vmatpush2.bf16.msra.mxu0 0
        %2900 = vmatprep.mubr.bf16.mxu0 0
        %2901 = vmatmul.mubr.bf16.gmra.mxu0 %v2866
        %v2902 = vpop.f32.mrf.mxu0
        %v2903 = vadd.f32 0.0, %v2902
        %v2904 = vpop.f32.mrf.mxu0
        %v2905 = vpop.f32.mrf.mxu0
        %v2906 = vpop.f32.mrf.mxu0
        %2907 = vdwg.mxu0
        %v2908 = vpack.c.bf16 %v2903, %v2903
        %s2909 = scalar_lea.vmem %s8, 64
        %v2910 = vld [vmem:[%s2909] sm:$0xf]
        %v2911 = vld [vmem:[%s2909 + $0x4] sm:$0xf]
        %v2912 = vld [vmem:[%s2909 + $0x8] sm:$0xf]
        %v2913 = vld [vmem:[%s2909 + $0xc] sm:$0xf]
        %v2914 = vld [vmem:[%s2909 + $0x10] sm:$0xf]
        %v2915 = vld [vmem:[%s2909 + $0x14] sm:$0xf]
        %v2916 = vld [vmem:[%s2909 + $0x18] sm:$0xf]
        %v2917 = vld [vmem:[%s2909 + $0x1c] sm:$0xf]
        %v2918 = vld [vmem:[%s2909 + $0x20] sm:$0xf]
        %v2919 = vld [vmem:[%s2909 + $0x24] sm:$0xf]
        %v2920 = vld [vmem:[%s2909 + $0x28] sm:$0xf]
        %v2921 = vld [vmem:[%s2909 + $0x2c] sm:$0xf]
        %v2922 = vld [vmem:[%s2909 + $0x30] sm:$0xf]
        %v2923 = vld [vmem:[%s2909 + $0x34] sm:$0xf]
        %v2924 = vld [vmem:[%s2909 + $0x38] sm:$0xf]
        %v2925 = vld [vmem:[%s2909 + $0x3c] sm:$0xf]
        %v2942 = vunpack.c.l.b16 %v2910
        %v2943 = vunpack.c.l.b16 %v2911
        %v2944 = vunpack.c.l.b16 %v2912
        %v2945 = vunpack.c.l.b16 %v2913
        %v2946 = vunpack.c.l.b16 %v2914
        %v2947 = vunpack.c.l.b16 %v2915
        %v2948 = vunpack.c.l.b16 %v2916
        %v2949 = vunpack.c.l.b16 %v2917
        %v2950 = vunpack.c.l.b16 %v2918
        %v2951 = vunpack.c.l.b16 %v2919
        %v2952 = vunpack.c.l.b16 %v2920
        %v2953 = vunpack.c.l.b16 %v2921
        %v2954 = vunpack.c.l.b16 %v2922
        %v2955 = vunpack.c.l.b16 %v2923
        %v2956 = vunpack.c.l.b16 %v2924
        %v2957 = vunpack.c.l.b16 %v2925
        %v2958 = vpack.c.b16 %v2943, %v2942
        %v2959 = vpack.c.b16 %v2945, %v2944
        %v2960 = vpack.c.b16 %v2947, %v2946
        %v2961 = vpack.c.b16 %v2949, %v2948
        %v2962 = vpack.c.b16 %v2951, %v2950
        %v2963 = vpack.c.b16 %v2953, %v2952
        %v2964 = vpack.c.b16 %v2955, %v2954
        %v2965 = vpack.c.b16 %v2957, %v2956
        %2974 = vmatprep.subr.bf16.mxu0 0
        %2975 = vmatpush1.bf16.msra.mxu0 %v2965
        %2976 = vmatprep.subr.bf16.mxu0 0
        %2977 = vmatpush1.bf16.msra.mxu0 %v2964
        %2978 = vmatprep.subr.bf16.mxu0 0
        %2979 = vmatpush1.bf16.msra.mxu0 %v2963
        %2980 = vmatprep.subr.bf16.mxu0 0
        %2981 = vmatpush1.bf16.msra.mxu0 %v2962
        %2982 = vmatprep.subr.bf16.mxu0 0
        %2983 = vmatpush1.bf16.msra.mxu0 %v2961
        %2984 = vmatprep.subr.bf16.mxu0 0
        %2985 = vmatpush1.bf16.msra.mxu0 %v2960
        %2986 = vmatprep.subr.bf16.mxu0 0
        %2987 = vmatpush1.bf16.msra.mxu0 %v2959
        %2988 = vmatprep.subr.bf16.mxu0 0
        %2989 = vmatpush1.bf16.msra.mxu0 %v2958
        %2990 = vmatprep.subr.bf16.mxu0 0
        %2991 = vmatpush2.bf16.msra.mxu0 0
        %2992 = vmatprep.subr.bf16.mxu0 0
        %2993 = vmatpush2.bf16.msra.mxu0 0
        %2994 = vmatprep.subr.bf16.mxu0 0
        %2995 = vmatpush2.bf16.msra.mxu0 0
        %2996 = vmatprep.subr.bf16.mxu0 0
        %2997 = vmatpush2.bf16.msra.mxu0 0
        %2998 = vmatprep.subr.bf16.mxu0 0
        %2999 = vmatpush2.bf16.msra.mxu0 0
        %3000 = vmatprep.subr.bf16.mxu0 0
        %3001 = vmatpush2.bf16.msra.mxu0 0
        %3002 = vmatprep.subr.bf16.mxu0 0
        %3003 = vmatpush2.bf16.msra.mxu0 0
        %3004 = vmatprep.subr.bf16.mxu0 0
        %3005 = vmatpush2.bf16.msra.mxu0 0
        %3006 = vmatprep.mubr.bf16.mxu0 0
        %3007 = vmatmul.mubr.bf16.gmra.mxu0 %v2908
        %v3008 = vpop.f32.mrf.mxu0
        %v3009 = vadd.f32 0.0, %v3008
        %v3010 = vpop.f32.mrf.mxu0
        %v3011 = vpop.f32.mrf.mxu0
        %v3012 = vpop.f32.mrf.mxu0
        %3013 = vdwg.mxu0
        %v3030 = vunpack.c.l.b16 %v2847
        %v3031 = vunpack.c.l.b16 %v2848
        %v3032 = vunpack.c.l.b16 %v2849
        %v3033 = vunpack.c.l.b16 %v2850
        %v3034 = vunpack.c.l.b16 %v2851
        %v3035 = vunpack.c.l.b16 %v2852
        %v3036 = vunpack.c.l.b16 %v2853
        %v3037 = vunpack.c.l.b16 %v2854
        %v3038 = vunpack.c.l.b16 %v2855
        %v3039 = vunpack.c.l.b16 %v2856
        %v3040 = vunpack.c.l.b16 %v2857
        %v3041 = vunpack.c.l.b16 %v2858
        %v3042 = vunpack.c.l.b16 %v2859
        %v3043 = vunpack.c.l.b16 %v2860
        %v3044 = vunpack.c.l.b16 %v2861
        %v3045 = vunpack.c.l.b16 %v2862
        %v3046 = vpack.c.b16 %v3031, %v3030
        %v3047 = vpack.c.b16 %v3033, %v3032
        %v3048 = vpack.c.b16 %v3035, %v3034
        %v3049 = vpack.c.b16 %v3037, %v3036
        %v3050 = vpack.c.b16 %v3039, %v3038
        %v3051 = vpack.c.b16 %v3041, %v3040
        %v3052 = vpack.c.b16 %v3043, %v3042
        %v3053 = vpack.c.b16 %v3045, %v3044
        %3062 = vmatprep.subr.bf16.mxu0 0
        %3063 = vmatpush1.bf16.msra.mxu0 %v3053
        %3064 = vmatprep.subr.bf16.mxu0 0
        %3065 = vmatpush1.bf16.msra.mxu0 %v3052
        %3066 = vmatprep.subr.bf16.mxu0 0
        %3067 = vmatpush1.bf16.msra.mxu0 %v3051
        %3068 = vmatprep.subr.bf16.mxu0 0
        %3069 = vmatpush1.bf16.msra.mxu0 %v3050
        %3070 = vmatprep.subr.bf16.mxu0 0
        %3071 = vmatpush1.bf16.msra.mxu0 %v3049
        %3072 = vmatprep.subr.bf16.mxu0 0
        %3073 = vmatpush1.bf16.msra.mxu0 %v3048
        %3074 = vmatprep.subr.bf16.mxu0 0
        %3075 = vmatpush1.bf16.msra.mxu0 %v3047
        %3076 = vmatprep.subr.bf16.mxu0 0
        %3077 = vmatpush1.bf16.msra.mxu0 %v3046
        %3078 = vmatprep.subr.bf16.mxu0 0
        %3079 = vmatpush2.bf16.msra.mxu0 0
        %3080 = vmatprep.subr.bf16.mxu0 0
        %3081 = vmatpush2.bf16.msra.mxu0 0
        %3082 = vmatprep.subr.bf16.mxu0 0
        %3083 = vmatpush2.bf16.msra.mxu0 0
        %3084 = vmatprep.subr.bf16.mxu0 0
        %3085 = vmatpush2.bf16.msra.mxu0 0
        %3086 = vmatprep.subr.bf16.mxu0 0
        %3087 = vmatpush2.bf16.msra.mxu0 0
        %3088 = vmatprep.subr.bf16.mxu0 0
        %3089 = vmatpush2.bf16.msra.mxu0 0
        %3090 = vmatprep.subr.bf16.mxu0 0
        %3091 = vmatpush2.bf16.msra.mxu0 0
        %3092 = vmatprep.subr.bf16.mxu0 0
        %3093 = vmatpush2.bf16.msra.mxu0 0
        %3094 = vmatprep.mubr.bf16.mxu0 0
        %3095 = vmatmul.mubr.bf16.gmra.mxu0 %v2846
        %v3096 = vpop.f32.mrf.mxu0
        %v3097 = vadd.f32 %v3009, %v3096
        %v3098 = vpop.f32.mrf.mxu0
        %v3099 = vpop.f32.mrf.mxu0
        %v3100 = vpop.f32.mrf.mxu0
        %3101 = vdwg.mxu0
        %s3102 = scalar_lea.vmem [#allocation7], 4
        %v3103 = vld [vmem:[%s3102] sm:$0x3]
        %v3105 = vsel %vm2798, %v3103, 0
        %3107 = vmatprep.subr.bf16.mxu0 0
        %3108 = vmatpush1.bf16.msra.mxu0 0
        %3109 = vmatprep.subr.bf16.mxu0 0
        %3110 = vmatpush1.bf16.msra.mxu0 0
        %3111 = vmatprep.subr.bf16.mxu0 0
        %3112 = vmatpush1.bf16.msra.mxu0 0
        %3113 = vmatprep.subr.bf16.mxu0 0
        %3114 = vmatpush1.bf16.msra.mxu0 0
        %3115 = vmatprep.subr.bf16.mxu0 0
        %3116 = vmatpush1.bf16.msra.mxu0 0
        %3117 = vmatprep.subr.bf16.mxu0 0
        %3118 = vmatpush1.bf16.msra.mxu0 0
        %3119 = vmatprep.subr.bf16.mxu0 0
        %3120 = vmatpush1.bf16.msra.mxu0 0
        %3121 = vmatprep.subr.bf16.mxu0 0
        %3122 = vmatpush1.bf16.msra.mxu0 %v2804
        %3123 = vmatprep.subr.bf16.mxu0 0
        %3124 = vmatpush2.bf16.msra.mxu0 0
        %3125 = vmatprep.subr.bf16.mxu0 0
        %3126 = vmatpush2.bf16.msra.mxu0 0
        %3127 = vmatprep.subr.bf16.mxu0 0
        %3128 = vmatpush2.bf16.msra.mxu0 0
        %3129 = vmatprep.subr.bf16.mxu0 0
        %3130 = vmatpush2.bf16.msra.mxu0 0
        %3131 = vmatprep.subr.bf16.mxu0 0
        %3132 = vmatpush2.bf16.msra.mxu0 0
        %3133 = vmatprep.subr.bf16.mxu0 0
        %3134 = vmatpush2.bf16.msra.mxu0 0
        %3135 = vmatprep.subr.bf16.mxu0 0
        %3136 = vmatpush2.bf16.msra.mxu0 0
        %3137 = vmatprep.subr.bf16.mxu0 0
        %3138 = vmatpush2.bf16.msra.mxu0 0
        %3139 = vmatprep.mubr.bf16.mxu0 0
        %3140 = vmatmul.mubr.bf16.gmra.mxu0 %v3105
        %v3141 = vpop.f32.mrf.mxu0
        %v3142 = vadd.f32 0.0, %v3141
        %v3143 = vpop.f32.mrf.mxu0
        %v3144 = vpop.f32.mrf.mxu0
        %v3145 = vpop.f32.mrf.mxu0
        %3146 = vdwg.mxu0
        %v3147 = vpack.c.bf16 %v3142, %v3142
        %s3148 = scalar_lea.vmem %s8, 128
        %v3149 = vld [vmem:[%s3148] sm:$0xf]
        %v3150 = vld [vmem:[%s3148 + $0x4] sm:$0xf]
        %v3151 = vld [vmem:[%s3148 + $0x8] sm:$0xf]
        %v3152 = vld [vmem:[%s3148 + $0xc] sm:$0xf]
        %v3153 = vld [vmem:[%s3148 + $0x10] sm:$0xf]
        %v3154 = vld [vmem:[%s3148 + $0x14] sm:$0xf]
        %v3155 = vld [vmem:[%s3148 + $0x18] sm:$0xf]
        %v3156 = vld [vmem:[%s3148 + $0x1c] sm:$0xf]
        %v3157 = vld [vmem:[%s3148 + $0x20] sm:$0xf]
        %v3158 = vld [vmem:[%s3148 + $0x24] sm:$0xf]
        %v3159 = vld [vmem:[%s3148 + $0x28] sm:$0xf]
        %v3160 = vld [vmem:[%s3148 + $0x2c] sm:$0xf]
        %v3161 = vld [vmem:[%s3148 + $0x30] sm:$0xf]
        %v3162 = vld [vmem:[%s3148 + $0x34] sm:$0xf]
        %v3163 = vld [vmem:[%s3148 + $0x38] sm:$0xf]
        %v3164 = vld [vmem:[%s3148 + $0x3c] sm:$0xf]
        %v3181 = vunpack.c.l.b16 %v3149
        %v3182 = vunpack.c.l.b16 %v3150
        %v3183 = vunpack.c.l.b16 %v3151
        %v3184 = vunpack.c.l.b16 %v3152
        %v3185 = vunpack.c.l.b16 %v3153
        %v3186 = vunpack.c.l.b16 %v3154
        %v3187 = vunpack.c.l.b16 %v3155
        %v3188 = vunpack.c.l.b16 %v3156
        %v3189 = vunpack.c.l.b16 %v3157
        %v3190 = vunpack.c.l.b16 %v3158
        %v3191 = vunpack.c.l.b16 %v3159
        %v3192 = vunpack.c.l.b16 %v3160
        %v3193 = vunpack.c.l.b16 %v3161
        %v3194 = vunpack.c.l.b16 %v3162
        %v3195 = vunpack.c.l.b16 %v3163
        %v3196 = vunpack.c.l.b16 %v3164
        %v3197 = vpack.c.b16 %v3182, %v3181
        %v3198 = vpack.c.b16 %v3184, %v3183
        %v3199 = vpack.c.b16 %v3186, %v3185
        %v3200 = vpack.c.b16 %v3188, %v3187
        %v3201 = vpack.c.b16 %v3190, %v3189
        %v3202 = vpack.c.b16 %v3192, %v3191
        %v3203 = vpack.c.b16 %v3194, %v3193
        %v3204 = vpack.c.b16 %v3196, %v3195
        %3213 = vmatprep.subr.bf16.mxu0 0
        %3214 = vmatpush1.bf16.msra.mxu0 %v3204
        %3215 = vmatprep.subr.bf16.mxu0 0
        %3216 = vmatpush1.bf16.msra.mxu0 %v3203
        %3217 = vmatprep.subr.bf16.mxu0 0
        %3218 = vmatpush1.bf16.msra.mxu0 %v3202
        %3219 = vmatprep.subr.bf16.mxu0 0
        %3220 = vmatpush1.bf16.msra.mxu0 %v3201
        %3221 = vmatprep.subr.bf16.mxu0 0
        %3222 = vmatpush1.bf16.msra.mxu0 %v3200
        %3223 = vmatprep.subr.bf16.mxu0 0
        %3224 = vmatpush1.bf16.msra.mxu0 %v3199
        %3225 = vmatprep.subr.bf16.mxu0 0
        %3226 = vmatpush1.bf16.msra.mxu0 %v3198
        %3227 = vmatprep.subr.bf16.mxu0 0
        %3228 = vmatpush1.bf16.msra.mxu0 %v3197
        %3229 = vmatprep.subr.bf16.mxu0 0
        %3230 = vmatpush2.bf16.msra.mxu0 0
        %3231 = vmatprep.subr.bf16.mxu0 0
        %3232 = vmatpush2.bf16.msra.mxu0 0
        %3233 = vmatprep.subr.bf16.mxu0 0
        %3234 = vmatpush2.bf16.msra.mxu0 0
        %3235 = vmatprep.subr.bf16.mxu0 0
        %3236 = vmatpush2.bf16.msra.mxu0 0
        %3237 = vmatprep.subr.bf16.mxu0 0
        %3238 = vmatpush2.bf16.msra.mxu0 0
        %3239 = vmatprep.subr.bf16.mxu0 0
        %3240 = vmatpush2.bf16.msra.mxu0 0
        %3241 = vmatprep.subr.bf16.mxu0 0
        %3242 = vmatpush2.bf16.msra.mxu0 0
        %3243 = vmatprep.subr.bf16.mxu0 0
        %3244 = vmatpush2.bf16.msra.mxu0 0
        %3245 = vmatprep.mubr.bf16.mxu0 0
        %3246 = vmatmul.mubr.bf16.gmra.mxu0 %v3147
        %v3247 = vpop.f32.mrf.mxu0
        %v3248 = vadd.f32 0.0, %v3247
        %v3249 = vpop.f32.mrf.mxu0
        %v3250 = vpop.f32.mrf.mxu0
        %v3251 = vpop.f32.mrf.mxu0
        %3252 = vdwg.mxu0
        %v3253 = vadd.f32 %v3097, %v3248
        %s3254 = scalar_lea.vmem [#allocation7], 6
        %v3255 = vld [vmem:[%s3254] sm:$0x3]
        %v3257 = vsel %vm2798, %v3255, 0
        %3259 = vmatprep.subr.bf16.mxu0 0
        %3260 = vmatpush1.bf16.msra.mxu0 0
        %3261 = vmatprep.subr.bf16.mxu0 0
        %3262 = vmatpush1.bf16.msra.mxu0 0
        %3263 = vmatprep.subr.bf16.mxu0 0
        %3264 = vmatpush1.bf16.msra.mxu0 0
        %3265 = vmatprep.subr.bf16.mxu0 0
        %3266 = vmatpush1.bf16.msra.mxu0 0
        %3267 = vmatprep.subr.bf16.mxu0 0
        %3268 = vmatpush1.bf16.msra.mxu0 0
        %3269 = vmatprep.subr.bf16.mxu0 0
        %3270 = vmatpush1.bf16.msra.mxu0 0
        %3271 = vmatprep.subr.bf16.mxu0 0
        %3272 = vmatpush1.bf16.msra.mxu0 0
        %3273 = vmatprep.subr.bf16.mxu0 0
        %3274 = vmatpush1.bf16.msra.mxu0 %v2804
        %3275 = vmatprep.subr.bf16.mxu0 0
        %3276 = vmatpush2.bf16.msra.mxu0 0
        %3277 = vmatprep.subr.bf16.mxu0 0
        %3278 = vmatpush2.bf16.msra.mxu0 0
        %3279 = vmatprep.subr.bf16.mxu0 0
        %3280 = vmatpush2.bf16.msra.mxu0 0
        %3281 = vmatprep.subr.bf16.mxu0 0
        %3282 = vmatpush2.bf16.msra.mxu0 0
        %3283 = vmatprep.subr.bf16.mxu0 0
        %3284 = vmatpush2.bf16.msra.mxu0 0
        %3285 = vmatprep.subr.bf16.mxu0 0
        %3286 = vmatpush2.bf16.msra.mxu0 0
        %3287 = vmatprep.subr.bf16.mxu0 0
        %3288 = vmatpush2.bf16.msra.mxu0 0
        %3289 = vmatprep.subr.bf16.mxu0 0
        %3290 = vmatpush2.bf16.msra.mxu0 0
        %3291 = vmatprep.mubr.bf16.mxu0 0
        %3292 = vmatmul.mubr.bf16.gmra.mxu0 %v3257
        %v3293 = vpop.f32.mrf.mxu0
        %v3294 = vadd.f32 0.0, %v3293
        %v3295 = vpop.f32.mrf.mxu0
        %v3296 = vpop.f32.mrf.mxu0
        %v3297 = vpop.f32.mrf.mxu0
        %3298 = vdwg.mxu0
        %v3299 = vpack.c.bf16 %v3294, %v3294
        %s3300 = scalar_lea.vmem %s8, 192
        %v3301 = vld [vmem:[%s3300] sm:$0xf]
        %v3302 = vld [vmem:[%s3300 + $0x4] sm:$0xf]
        %v3303 = vld [vmem:[%s3300 + $0x8] sm:$0xf]
        %v3304 = vld [vmem:[%s3300 + $0xc] sm:$0xf]
        %v3305 = vld [vmem:[%s3300 + $0x10] sm:$0xf]
        %v3306 = vld [vmem:[%s3300 + $0x14] sm:$0xf]
        %v3307 = vld [vmem:[%s3300 + $0x18] sm:$0xf]
        %v3308 = vld [vmem:[%s3300 + $0x1c] sm:$0xf]
        %v3309 = vld [vmem:[%s3300 + $0x20] sm:$0xf]
        %v3310 = vld [vmem:[%s3300 + $0x24] sm:$0xf]
        %v3311 = vld [vmem:[%s3300 + $0x28] sm:$0xf]
        %v3312 = vld [vmem:[%s3300 + $0x2c] sm:$0xf]
        %v3313 = vld [vmem:[%s3300 + $0x30] sm:$0xf]
        %v3314 = vld [vmem:[%s3300 + $0x34] sm:$0xf]
        %v3315 = vld [vmem:[%s3300 + $0x38] sm:$0xf]
        %v3316 = vld [vmem:[%s3300 + $0x3c] sm:$0xf]
        %v3333 = vunpack.c.l.b16 %v3301
        %v3334 = vunpack.c.l.b16 %v3302
        %v3335 = vunpack.c.l.b16 %v3303
        %v3336 = vunpack.c.l.b16 %v3304
        %v3337 = vunpack.c.l.b16 %v3305
        %v3338 = vunpack.c.l.b16 %v3306
        %v3339 = vunpack.c.l.b16 %v3307
        %v3340 = vunpack.c.l.b16 %v3308
        %v3341 = vunpack.c.l.b16 %v3309
        %v3342 = vunpack.c.l.b16 %v3310
        %v3343 = vunpack.c.l.b16 %v3311
        %v3344 = vunpack.c.l.b16 %v3312
        %v3345 = vunpack.c.l.b16 %v3313
        %v3346 = vunpack.c.l.b16 %v3314
        %v3347 = vunpack.c.l.b16 %v3315
        %v3348 = vunpack.c.l.b16 %v3316
        %v3349 = vpack.c.b16 %v3334, %v3333
        %v3350 = vpack.c.b16 %v3336, %v3335
        %v3351 = vpack.c.b16 %v3338, %v3337
        %v3352 = vpack.c.b16 %v3340, %v3339
        %v3353 = vpack.c.b16 %v3342, %v3341
        %v3354 = vpack.c.b16 %v3344, %v3343
        %v3355 = vpack.c.b16 %v3346, %v3345
        %v3356 = vpack.c.b16 %v3348, %v3347
        %3365 = vmatprep.subr.bf16.mxu0 0
        %3366 = vmatpush1.bf16.msra.mxu0 %v3356
        %3367 = vmatprep.subr.bf16.mxu0 0
        %3368 = vmatpush1.bf16.msra.mxu0 %v3355
        %3369 = vmatprep.subr.bf16.mxu0 0
        %3370 = vmatpush1.bf16.msra.mxu0 %v3354
        %3371 = vmatprep.subr.bf16.mxu0 0
        %3372 = vmatpush1.bf16.msra.mxu0 %v3353
        %3373 = vmatprep.subr.bf16.mxu0 0
        %3374 = vmatpush1.bf16.msra.mxu0 %v3352
        %3375 = vmatprep.subr.bf16.mxu0 0
        %3376 = vmatpush1.bf16.msra.mxu0 %v3351
        %3377 = vmatprep.subr.bf16.mxu0 0
        %3378 = vmatpush1.bf16.msra.mxu0 %v3350
        %3379 = vmatprep.subr.bf16.mxu0 0
        %3380 = vmatpush1.bf16.msra.mxu0 %v3349
        %3381 = vmatprep.subr.bf16.mxu0 0
        %3382 = vmatpush2.bf16.msra.mxu0 0
        %3383 = vmatprep.subr.bf16.mxu0 0
        %3384 = vmatpush2.bf16.msra.mxu0 0
        %3385 = vmatprep.subr.bf16.mxu0 0
        %3386 = vmatpush2.bf16.msra.mxu0 0
        %3387 = vmatprep.subr.bf16.mxu0 0
        %3388 = vmatpush2.bf16.msra.mxu0 0
        %3389 = vmatprep.subr.bf16.mxu0 0
        %3390 = vmatpush2.bf16.msra.mxu0 0
        %3391 = vmatprep.subr.bf16.mxu0 0
        %3392 = vmatpush2.bf16.msra.mxu0 0
        %3393 = vmatprep.subr.bf16.mxu0 0
        %3394 = vmatpush2.bf16.msra.mxu0 0
        %3395 = vmatprep.subr.bf16.mxu0 0
        %3396 = vmatpush2.bf16.msra.mxu0 0
        %3397 = vmatprep.mubr.bf16.mxu0 0
        %3398 = vmatmul.mubr.bf16.gmra.mxu0 %v3299
        %v3399 = vpop.f32.mrf.mxu0
        %v3400 = vadd.f32 0.0, %v3399
        %v3401 = vpop.f32.mrf.mxu0
        %v3402 = vpop.f32.mrf.mxu0
        %v3403 = vpop.f32.mrf.mxu0
        %3404 = vdwg.mxu0
        %v3405 = vadd.f32 %v3253, %v3400
        %s3406 = scalar_lea.vmem [#allocation7], 8
        %v3407 = vld [vmem:[%s3406] sm:$0x3]
        %v3409 = vsel %vm2798, %v3407, 0
        %3411 = vmatprep.subr.bf16.mxu0 0
        %3412 = vmatpush1.bf16.msra.mxu0 0
        %3413 = vmatprep.subr.bf16.mxu0 0
        %3414 = vmatpush1.bf16.msra.mxu0 0
        %3415 = vmatprep.subr.bf16.mxu0 0
        %3416 = vmatpush1.bf16.msra.mxu0 0
        %3417 = vmatprep.subr.bf16.mxu0 0
        %3418 = vmatpush1.bf16.msra.mxu0 0
        %3419 = vmatprep.subr.bf16.mxu0 0
        %3420 = vmatpush1.bf16.msra.mxu0 0
        %3421 = vmatprep.subr.bf16.mxu0 0
        %3422 = vmatpush1.bf16.msra.mxu0 0
        %3423 = vmatprep.subr.bf16.mxu0 0
        %3424 = vmatpush1.bf16.msra.mxu0 0
        %3425 = vmatprep.subr.bf16.mxu0 0
        %3426 = vmatpush1.bf16.msra.mxu0 %v2804
        %3427 = vmatprep.subr.bf16.mxu0 0
        %3428 = vmatpush2.bf16.msra.mxu0 0
        %3429 = vmatprep.subr.bf16.mxu0 0
        %3430 = vmatpush2.bf16.msra.mxu0 0
        %3431 = vmatprep.subr.bf16.mxu0 0
        %3432 = vmatpush2.bf16.msra.mxu0 0
        %3433 = vmatprep.subr.bf16.mxu0 0
        %3434 = vmatpush2.bf16.msra.mxu0 0
        %3435 = vmatprep.subr.bf16.mxu0 0
        %3436 = vmatpush2.bf16.msra.mxu0 0
        %3437 = vmatprep.subr.bf16.mxu0 0
        %3438 = vmatpush2.bf16.msra.mxu0 0
        %3439 = vmatprep.subr.bf16.mxu0 0
        %3440 = vmatpush2.bf16.msra.mxu0 0
        %3441 = vmatprep.subr.bf16.mxu0 0
        %3442 = vmatpush2.bf16.msra.mxu0 0
        %3443 = vmatprep.mubr.bf16.mxu0 0
        %3444 = vmatmul.mubr.bf16.gmra.mxu0 %v3409
        %v3445 = vpop.f32.mrf.mxu0
        %v3446 = vadd.f32 0.0, %v3445
        %v3447 = vpop.f32.mrf.mxu0
        %v3448 = vpop.f32.mrf.mxu0
        %v3449 = vpop.f32.mrf.mxu0
        %3450 = vdwg.mxu0
        %v3451 = vpack.c.bf16 %v3446, %v3446
        %s3452 = scalar_lea.vmem %s8, 256
        %v3453 = vld [vmem:[%s3452] sm:$0xf]
        %v3454 = vld [vmem:[%s3452 + $0x4] sm:$0xf]
        %v3455 = vld [vmem:[%s3452 + $0x8] sm:$0xf]
        %v3456 = vld [vmem:[%s3452 + $0xc] sm:$0xf]
        %v3457 = vld [vmem:[%s3452 + $0x10] sm:$0xf]
        %v3458 = vld [vmem:[%s3452 + $0x14] sm:$0xf]
        %v3459 = vld [vmem:[%s3452 + $0x18] sm:$0xf]
        %v3460 = vld [vmem:[%s3452 + $0x1c] sm:$0xf]
        %v3461 = vld [vmem:[%s3452 + $0x20] sm:$0xf]
        %v3462 = vld [vmem:[%s3452 + $0x24] sm:$0xf]
        %v3463 = vld [vmem:[%s3452 + $0x28] sm:$0xf]
        %v3464 = vld [vmem:[%s3452 + $0x2c] sm:$0xf]
        %v3465 = vld [vmem:[%s3452 + $0x30] sm:$0xf]
        %v3466 = vld [vmem:[%s3452 + $0x34] sm:$0xf]
        %v3467 = vld [vmem:[%s3452 + $0x38] sm:$0xf]
        %v3468 = vld [vmem:[%s3452 + $0x3c] sm:$0xf]
        %v3485 = vunpack.c.l.b16 %v3453
        %v3486 = vunpack.c.l.b16 %v3454
        %v3487 = vunpack.c.l.b16 %v3455
        %v3488 = vunpack.c.l.b16 %v3456
        %v3489 = vunpack.c.l.b16 %v3457
        %v3490 = vunpack.c.l.b16 %v3458
        %v3491 = vunpack.c.l.b16 %v3459
        %v3492 = vunpack.c.l.b16 %v3460
        %v3493 = vunpack.c.l.b16 %v3461
        %v3494 = vunpack.c.l.b16 %v3462
        %v3495 = vunpack.c.l.b16 %v3463
        %v3496 = vunpack.c.l.b16 %v3464
        %v3497 = vunpack.c.l.b16 %v3465
        %v3498 = vunpack.c.l.b16 %v3466
        %v3499 = vunpack.c.l.b16 %v3467
        %v3500 = vunpack.c.l.b16 %v3468
        %v3501 = vpack.c.b16 %v3486, %v3485
        %v3502 = vpack.c.b16 %v3488, %v3487
        %v3503 = vpack.c.b16 %v3490, %v3489
        %v3504 = vpack.c.b16 %v3492, %v3491
        %v3505 = vpack.c.b16 %v3494, %v3493
        %v3506 = vpack.c.b16 %v3496, %v3495
        %v3507 = vpack.c.b16 %v3498, %v3497
        %v3508 = vpack.c.b16 %v3500, %v3499
        %3517 = vmatprep.subr.bf16.mxu0 0
        %3518 = vmatpush1.bf16.msra.mxu0 %v3508
        %3519 = vmatprep.subr.bf16.mxu0 0
        %3520 = vmatpush1.bf16.msra.mxu0 %v3507
        %3521 = vmatprep.subr.bf16.mxu0 0
        %3522 = vmatpush1.bf16.msra.mxu0 %v3506
        %3523 = vmatprep.subr.bf16.mxu0 0
        %3524 = vmatpush1.bf16.msra.mxu0 %v3505
        %3525 = vmatprep.subr.bf16.mxu0 0
        %3526 = vmatpush1.bf16.msra.mxu0 %v3504
        %3527 = vmatprep.subr.bf16.mxu0 0
        %3528 = vmatpush1.bf16.msra.mxu0 %v3503
        %3529 = vmatprep.subr.bf16.mxu0 0
        %3530 = vmatpush1.bf16.msra.mxu0 %v3502
        %3531 = vmatprep.subr.bf16.mxu0 0
        %3532 = vmatpush1.bf16.msra.mxu0 %v3501
        %3533 = vmatprep.subr.bf16.mxu0 0
        %3534 = vmatpush2.bf16.msra.mxu0 0
        %3535 = vmatprep.subr.bf16.mxu0 0
        %3536 = vmatpush2.bf16.msra.mxu0 0
        %3537 = vmatprep.subr.bf16.mxu0 0
        %3538 = vmatpush2.bf16.msra.mxu0 0
        %3539 = vmatprep.subr.bf16.mxu0 0
        %3540 = vmatpush2.bf16.msra.mxu0 0
        %3541 = vmatprep.subr.bf16.mxu0 0
        %3542 = vmatpush2.bf16.msra.mxu0 0
        %3543 = vmatprep.subr.bf16.mxu0 0
        %3544 = vmatpush2.bf16.msra.mxu0 0
        %3545 = vmatprep.subr.bf16.mxu0 0
        %3546 = vmatpush2.bf16.msra.mxu0 0
        %3547 = vmatprep.subr.bf16.mxu0 0
        %3548 = vmatpush2.bf16.msra.mxu0 0
        %3549 = vmatprep.mubr.bf16.mxu0 0
        %3550 = vmatmul.mubr.bf16.gmra.mxu0 %v3451
        %v3551 = vpop.f32.mrf.mxu0
        %v3552 = vadd.f32 0.0, %v3551
        %v3553 = vpop.f32.mrf.mxu0
        %v3554 = vpop.f32.mrf.mxu0
        %v3555 = vpop.f32.mrf.mxu0
        %3556 = vdwg.mxu0
        %v3557 = vadd.f32 %v3405, %v3552
        %v3558 = vld [vmem:[#allocation9] sm:$0x1]
        %v3560 = vlaneseq
        %v3561 = vshrl.u32 %v3560, 7
        %v3562 = vsub.s32 0, %v3561
        %v3563 = vrot.slane %v3558, %v3562
        %v3565 = vadd.f32 %v3557, %v3563
        %v3566 = vmax.f32 %v3565, 0.0
        %v3567 = vpack.c.bf16 %v3566, %v3566
        %v3568 = vld [vmem:[%s10] sm:$0x1]
        %vm3569 = vcmask 31744
        %v3571 = vsel %vm3569, %v3568, 0
        %vm3573 = vcmask 1041408
        %v3575 = vsel %vm3573, %v3567, 0
        %3577 = vmatprep.subr.bf16.mxu0 0
        %3578 = vmatpush1.bf16.msra.mxu0 0
        %3579 = vmatprep.subr.bf16.mxu0 0
        %3580 = vmatpush1.bf16.msra.mxu0 0
        %3581 = vmatprep.subr.bf16.mxu0 0
        %3582 = vmatpush1.bf16.msra.mxu0 0
        %3583 = vmatprep.subr.bf16.mxu0 0
        %3584 = vmatpush1.bf16.msra.mxu0 0
        %3585 = vmatprep.subr.bf16.mxu0 0
        %3586 = vmatpush1.bf16.msra.mxu0 0
        %3587 = vmatprep.subr.bf16.mxu0 0
        %3588 = vmatpush1.bf16.msra.mxu0 0
        %3589 = vmatprep.subr.bf16.mxu0 0
        %3590 = vmatpush1.bf16.msra.mxu0 0
        %3591 = vmatprep.subr.bf16.mxu0 0
        %3592 = vmatpush1.bf16.msra.mxu0 %v3575
        %3593 = vmatprep.subr.bf16.mxu0 0
        %3594 = vmatpush2.bf16.msra.mxu0 0
        %3595 = vmatprep.subr.bf16.mxu0 0
        %3596 = vmatpush2.bf16.msra.mxu0 0
        %3597 = vmatprep.subr.bf16.mxu0 0
        %3598 = vmatpush2.bf16.msra.mxu0 0
        %3599 = vmatprep.subr.bf16.mxu0 0
        %3600 = vmatpush2.bf16.msra.mxu0 0
        %3601 = vmatprep.subr.bf16.mxu0 0
        %3602 = vmatpush2.bf16.msra.mxu0 0
        %3603 = vmatprep.subr.bf16.mxu0 0
        %3604 = vmatpush2.bf16.msra.mxu0 0
        %3605 = vmatprep.subr.bf16.mxu0 0
        %3606 = vmatpush2.bf16.msra.mxu0 0
        %3607 = vmatprep.subr.bf16.mxu0 0
        %3608 = vmatpush2.bf16.msra.mxu0 0
        %3609 = vmatprep.mubr.bf16.mxu0 0
        %3610 = vmatmul.mubr.bf16.gmra.mxu0 %v3571
        %v3611 = vpop.f32.mrf.mxu0
        %v3612 = vadd.f32 0.0, %v3611
        %v3613 = vpop.f32.mrf.mxu0
        %v3614 = vpop.f32.mrf.mxu0
        %v3615 = vpop.f32.mrf.mxu0
        %3616 = vdwg.mxu0
        %v3617 = vpack.c.bf16 %v3612, %v3612
        %v3618 = vld [vmem:[%s11] sm:$0xf]
        %v3619 = vld [vmem:[%s11 + $0x4] sm:$0xf]
        %v3620 = vld [vmem:[%s11 + $0x8] sm:$0xf]
        %v3621 = vld [vmem:[%s11 + $0xc] sm:$0xf]
        %v3622 = vld [vmem:[%s11 + $0x10] sm:$0xf]
        %v3623 = vld [vmem:[%s11 + $0x14] sm:$0xf]
        %v3624 = vld [vmem:[%s11 + $0x18] sm:$0xf]
        %v3625 = vld [vmem:[%s11 + $0x1c] sm:$0xf]
        %s3626 = scalar_lea.vmem %s10, 1
        %v3627 = vld [vmem:[%s3626] sm:$0x1]
        %v3629 = vsel %vm3569, %v3627, 0
        %3631 = vmatprep.subr.bf16.mxu0 0
        %3632 = vmatpush1.bf16.msra.mxu0 0
        %3633 = vmatprep.subr.bf16.mxu0 0
        %3634 = vmatpush1.bf16.msra.mxu0 0
        %3635 = vmatprep.subr.bf16.mxu0 0
        %3636 = vmatpush1.bf16.msra.mxu0 0
        %3637 = vmatprep.subr.bf16.mxu0 0
        %3638 = vmatpush1.bf16.msra.mxu0 0
        %3639 = vmatprep.subr.bf16.mxu0 0
        %3640 = vmatpush1.bf16.msra.mxu0 0
        %3641 = vmatprep.subr.bf16.mxu0 0
        %3642 = vmatpush1.bf16.msra.mxu0 0
        %3643 = vmatprep.subr.bf16.mxu0 0
        %3644 = vmatpush1.bf16.msra.mxu0 0
        %3645 = vmatprep.subr.bf16.mxu0 0
        %3646 = vmatpush1.bf16.msra.mxu0 %v3575
        %3647 = vmatprep.subr.bf16.mxu0 0
        %3648 = vmatpush2.bf16.msra.mxu0 0
        %3649 = vmatprep.subr.bf16.mxu0 0
        %3650 = vmatpush2.bf16.msra.mxu0 0
        %3651 = vmatprep.subr.bf16.mxu0 0
        %3652 = vmatpush2.bf16.msra.mxu0 0
        %3653 = vmatprep.subr.bf16.mxu0 0
        %3654 = vmatpush2.bf16.msra.mxu0 0
        %3655 = vmatprep.subr.bf16.mxu0 0
        %3656 = vmatpush2.bf16.msra.mxu0 0
        %3657 = vmatprep.subr.bf16.mxu0 0
        %3658 = vmatpush2.bf16.msra.mxu0 0
        %3659 = vmatprep.subr.bf16.mxu0 0
        %3660 = vmatpush2.bf16.msra.mxu0 0
        %3661 = vmatprep.subr.bf16.mxu0 0
        %3662 = vmatpush2.bf16.msra.mxu0 0
        %3663 = vmatprep.mubr.bf16.mxu0 0
        %3664 = vmatmul.mubr.bf16.gmra.mxu0 %v3629
        %v3665 = vpop.f32.mrf.mxu0
        %v3666 = vadd.f32 0.0, %v3665
        %v3667 = vpop.f32.mrf.mxu0
        %v3668 = vpop.f32.mrf.mxu0
        %v3669 = vpop.f32.mrf.mxu0
        %3670 = vdwg.mxu0
        %v3671 = vpack.c.bf16 %v3666, %v3666
        %s3672 = scalar_lea.vmem %s11, 32
        %v3673 = vld [vmem:[%s3672] sm:$0xf]
        %v3674 = vld [vmem:[%s3672 + $0x4] sm:$0xf]
        %v3675 = vld [vmem:[%s3672 + $0x8] sm:$0xf]
        %v3676 = vld [vmem:[%s3672 + $0xc] sm:$0xf]
        %v3677 = vld [vmem:[%s3672 + $0x10] sm:$0xf]
        %v3678 = vld [vmem:[%s3672 + $0x14] sm:$0xf]
        %v3679 = vld [vmem:[%s3672 + $0x18] sm:$0xf]
        %v3680 = vld [vmem:[%s3672 + $0x1c] sm:$0xf]
        %v3689 = vunpack.c.l.b16 %v3673
        %v3690 = vunpack.c.l.b16 %v3674
        %v3691 = vunpack.c.l.b16 %v3675
        %v3692 = vunpack.c.l.b16 %v3676
        %v3693 = vunpack.c.l.b16 %v3677
        %v3694 = vunpack.c.l.b16 %v3678
        %v3695 = vunpack.c.l.b16 %v3679
        %v3696 = vunpack.c.l.b16 %v3680
        %v3697 = vpack.c.b16 %v3690, %v3689
        %v3698 = vpack.c.b16 %v3692, %v3691
        %v3699 = vpack.c.b16 %v3694, %v3693
        %v3700 = vpack.c.b16 %v3696, %v3695
        %vm3705 = vcmask 523264
        %v3707 = vsel %vm3705, %v3671, 0
        %3709 = vmatprep.subr.bf16.mxu0 0
        %3710 = vmatpush1.bf16.msra.mxu0 0
        %3711 = vmatprep.subr.bf16.mxu0 0
        %3712 = vmatpush1.bf16.msra.mxu0 0
        %3713 = vmatprep.subr.bf16.mxu0 0
        %3714 = vmatpush1.bf16.msra.mxu0 0
        %3715 = vmatprep.subr.bf16.mxu0 0
        %3716 = vmatpush1.bf16.msra.mxu0 0
        %3717 = vmatprep.subr.bf16.mxu0 0
        %3718 = vmatpush1.bf16.msra.mxu0 %v3700
        %3719 = vmatprep.subr.bf16.mxu0 0
        %3720 = vmatpush1.bf16.msra.mxu0 %v3699
        %3721 = vmatprep.subr.bf16.mxu0 0
        %3722 = vmatpush1.bf16.msra.mxu0 %v3698
        %3723 = vmatprep.subr.bf16.mxu0 0
        %3724 = vmatpush1.bf16.msra.mxu0 %v3697
        %3725 = vmatprep.subr.bf16.mxu0 0
        %3726 = vmatpush2.bf16.msra.mxu0 0
        %3727 = vmatprep.subr.bf16.mxu0 0
        %3728 = vmatpush2.bf16.msra.mxu0 0
        %3729 = vmatprep.subr.bf16.mxu0 0
        %3730 = vmatpush2.bf16.msra.mxu0 0
        %3731 = vmatprep.subr.bf16.mxu0 0
        %3732 = vmatpush2.bf16.msra.mxu0 0
        %3733 = vmatprep.subr.bf16.mxu0 0
        %3734 = vmatpush2.bf16.msra.mxu0 0
        %3735 = vmatprep.subr.bf16.mxu0 0
        %3736 = vmatpush2.bf16.msra.mxu0 0
        %3737 = vmatprep.subr.bf16.mxu0 0
        %3738 = vmatpush2.bf16.msra.mxu0 0
        %3739 = vmatprep.subr.bf16.mxu0 0
        %3740 = vmatpush2.bf16.msra.mxu0 0
        %3741 = vmatprep.mubr.bf16.mxu0 0
        %3742 = vmatmul.mubr.bf16.gmra.mxu0 %v3707
        %v3743 = vpop.f32.mrf.mxu0
        %v3744 = vadd.f32 0.0, %v3743
        %v3745 = vpop.f32.mrf.mxu0
        %v3746 = vpop.f32.mrf.mxu0
        %v3747 = vpop.f32.mrf.mxu0
        %3748 = vdwg.mxu0
        %v3757 = vunpack.c.l.b16 %v3618
        %v3758 = vunpack.c.l.b16 %v3619
        %v3759 = vunpack.c.l.b16 %v3620
        %v3760 = vunpack.c.l.b16 %v3621
        %v3761 = vunpack.c.l.b16 %v3622
        %v3762 = vunpack.c.l.b16 %v3623
        %v3763 = vunpack.c.l.b16 %v3624
        %v3764 = vunpack.c.l.b16 %v3625
        %v3765 = vpack.c.b16 %v3758, %v3757
        %v3766 = vpack.c.b16 %v3760, %v3759
        %v3767 = vpack.c.b16 %v3762, %v3761
        %v3768 = vpack.c.b16 %v3764, %v3763
        %v3774 = vsel %vm3705, %v3617, 0
        %3776 = vmatprep.subr.bf16.mxu0 0
        %3777 = vmatpush1.bf16.msra.mxu0 0
        %3778 = vmatprep.subr.bf16.mxu0 0
        %3779 = vmatpush1.bf16.msra.mxu0 0
        %3780 = vmatprep.subr.bf16.mxu0 0
        %3781 = vmatpush1.bf16.msra.mxu0 0
        %3782 = vmatprep.subr.bf16.mxu0 0
        %3783 = vmatpush1.bf16.msra.mxu0 0
        %3784 = vmatprep.subr.bf16.mxu0 0
        %3785 = vmatpush1.bf16.msra.mxu0 %v3768
        %3786 = vmatprep.subr.bf16.mxu0 0
        %3787 = vmatpush1.bf16.msra.mxu0 %v3767
        %3788 = vmatprep.subr.bf16.mxu0 0
        %3789 = vmatpush1.bf16.msra.mxu0 %v3766
        %3790 = vmatprep.subr.bf16.mxu0 0
        %3791 = vmatpush1.bf16.msra.mxu0 %v3765
        %3792 = vmatprep.subr.bf16.mxu0 0
        %3793 = vmatpush2.bf16.msra.mxu0 0
        %3794 = vmatprep.subr.bf16.mxu0 0
        %3795 = vmatpush2.bf16.msra.mxu0 0
        %3796 = vmatprep.subr.bf16.mxu0 0
        %3797 = vmatpush2.bf16.msra.mxu0 0
        %3798 = vmatprep.subr.bf16.mxu0 0
        %3799 = vmatpush2.bf16.msra.mxu0 0
        %3800 = vmatprep.subr.bf16.mxu0 0
        %3801 = vmatpush2.bf16.msra.mxu0 0
        %3802 = vmatprep.subr.bf16.mxu0 0
        %3803 = vmatpush2.bf16.msra.mxu0 0
        %3804 = vmatprep.subr.bf16.mxu0 0
        %3805 = vmatpush2.bf16.msra.mxu0 0
        %3806 = vmatprep.subr.bf16.mxu0 0
        %3807 = vmatpush2.bf16.msra.mxu0 0
        %3808 = vmatprep.mubr.bf16.mxu0 0
        %3809 = vmatmul.mubr.bf16.gmra.mxu0 %v3774
        %v3810 = vpop.f32.mrf.mxu0
        %v3811 = vadd.f32 %v3744, %v3810
        %v3812 = vpop.f32.mrf.mxu0
        %v3813 = vpop.f32.mrf.mxu0
        %v3814 = vpop.f32.mrf.mxu0
        %3815 = vdwg.mxu0
        %s3816 = scalar_lea.vmem %s10, 2
        %v3817 = vld [vmem:[%s3816] sm:$0x1]
        %v3819 = vsel %vm3569, %v3817, 0
        %3821 = vmatprep.subr.bf16.mxu0 0
        %3822 = vmatpush1.bf16.msra.mxu0 0
        %3823 = vmatprep.subr.bf16.mxu0 0
        %3824 = vmatpush1.bf16.msra.mxu0 0
        %3825 = vmatprep.subr.bf16.mxu0 0
        %3826 = vmatpush1.bf16.msra.mxu0 0
        %3827 = vmatprep.subr.bf16.mxu0 0
        %3828 = vmatpush1.bf16.msra.mxu0 0
        %3829 = vmatprep.subr.bf16.mxu0 0
        %3830 = vmatpush1.bf16.msra.mxu0 0
        %3831 = vmatprep.subr.bf16.mxu0 0
        %3832 = vmatpush1.bf16.msra.mxu0 0
        %3833 = vmatprep.subr.bf16.mxu0 0
        %3834 = vmatpush1.bf16.msra.mxu0 0
        %3835 = vmatprep.subr.bf16.mxu0 0
        %3836 = vmatpush1.bf16.msra.mxu0 %v3575
        %3837 = vmatprep.subr.bf16.mxu0 0
        %3838 = vmatpush2.bf16.msra.mxu0 0
        %3839 = vmatprep.subr.bf16.mxu0 0
        %3840 = vmatpush2.bf16.msra.mxu0 0
        %3841 = vmatprep.subr.bf16.mxu0 0
        %3842 = vmatpush2.bf16.msra.mxu0 0
        %3843 = vmatprep.subr.bf16.mxu0 0
        %3844 = vmatpush2.bf16.msra.mxu0 0
        %3845 = vmatprep.subr.bf16.mxu0 0
        %3846 = vmatpush2.bf16.msra.mxu0 0
        %3847 = vmatprep.subr.bf16.mxu0 0
        %3848 = vmatpush2.bf16.msra.mxu0 0
        %3849 = vmatprep.subr.bf16.mxu0 0
        %3850 = vmatpush2.bf16.msra.mxu0 0
        %3851 = vmatprep.subr.bf16.mxu0 0
        %3852 = vmatpush2.bf16.msra.mxu0 0
        %3853 = vmatprep.mubr.bf16.mxu0 0
        %3854 = vmatmul.mubr.bf16.gmra.mxu0 %v3819
        %v3855 = vpop.f32.mrf.mxu0
        %v3856 = vadd.f32 0.0, %v3855
        %v3857 = vpop.f32.mrf.mxu0
        %v3858 = vpop.f32.mrf.mxu0
        %v3859 = vpop.f32.mrf.mxu0
        %3860 = vdwg.mxu0
        %v3861 = vpack.c.bf16 %v3856, %v3856
        %s3862 = scalar_lea.vmem %s11, 64
        %v3863 = vld [vmem:[%s3862] sm:$0xf]
        %v3864 = vld [vmem:[%s3862 + $0x4] sm:$0xf]
        %v3865 = vld [vmem:[%s3862 + $0x8] sm:$0xf]
        %v3866 = vld [vmem:[%s3862 + $0xc] sm:$0xf]
        %v3867 = vld [vmem:[%s3862 + $0x10] sm:$0xf]
        %v3868 = vld [vmem:[%s3862 + $0x14] sm:$0xf]
        %v3869 = vld [vmem:[%s3862 + $0x18] sm:$0xf]
        %v3870 = vld [vmem:[%s3862 + $0x1c] sm:$0xf]
        %v3879 = vunpack.c.l.b16 %v3863
        %v3880 = vunpack.c.l.b16 %v3864
        %v3881 = vunpack.c.l.b16 %v3865
        %v3882 = vunpack.c.l.b16 %v3866
        %v3883 = vunpack.c.l.b16 %v3867
        %v3884 = vunpack.c.l.b16 %v3868
        %v3885 = vunpack.c.l.b16 %v3869
        %v3886 = vunpack.c.l.b16 %v3870
        %v3887 = vpack.c.b16 %v3880, %v3879
        %v3888 = vpack.c.b16 %v3882, %v3881
        %v3889 = vpack.c.b16 %v3884, %v3883
        %v3890 = vpack.c.b16 %v3886, %v3885
        %v3896 = vsel %vm3705, %v3861, 0
        %3898 = vmatprep.subr.bf16.mxu0 0
        %3899 = vmatpush1.bf16.msra.mxu0 0
        %3900 = vmatprep.subr.bf16.mxu0 0
        %3901 = vmatpush1.bf16.msra.mxu0 0
        %3902 = vmatprep.subr.bf16.mxu0 0
        %3903 = vmatpush1.bf16.msra.mxu0 0
        %3904 = vmatprep.subr.bf16.mxu0 0
        %3905 = vmatpush1.bf16.msra.mxu0 0
        %3906 = vmatprep.subr.bf16.mxu0 0
        %3907 = vmatpush1.bf16.msra.mxu0 %v3890
        %3908 = vmatprep.subr.bf16.mxu0 0
        %3909 = vmatpush1.bf16.msra.mxu0 %v3889
        %3910 = vmatprep.subr.bf16.mxu0 0
        %3911 = vmatpush1.bf16.msra.mxu0 %v3888
        %3912 = vmatprep.subr.bf16.mxu0 0
        %3913 = vmatpush1.bf16.msra.mxu0 %v3887
        %3914 = vmatprep.subr.bf16.mxu0 0
        %3915 = vmatpush2.bf16.msra.mxu0 0
        %3916 = vmatprep.subr.bf16.mxu0 0
        %3917 = vmatpush2.bf16.msra.mxu0 0
        %3918 = vmatprep.subr.bf16.mxu0 0
        %3919 = vmatpush2.bf16.msra.mxu0 0
        %3920 = vmatprep.subr.bf16.mxu0 0
        %3921 = vmatpush2.bf16.msra.mxu0 0
        %3922 = vmatprep.subr.bf16.mxu0 0
        %3923 = vmatpush2.bf16.msra.mxu0 0
        %3924 = vmatprep.subr.bf16.mxu0 0
        %3925 = vmatpush2.bf16.msra.mxu0 0
        %3926 = vmatprep.subr.bf16.mxu0 0
        %3927 = vmatpush2.bf16.msra.mxu0 0
        %3928 = vmatprep.subr.bf16.mxu0 0
        %3929 = vmatpush2.bf16.msra.mxu0 0
        %3930 = vmatprep.mubr.bf16.mxu0 0
        %3931 = vmatmul.mubr.bf16.gmra.mxu0 %v3896
        %v3932 = vpop.f32.mrf.mxu0
        %v3933 = vadd.f32 0.0, %v3932
        %v3934 = vpop.f32.mrf.mxu0
        %v3935 = vpop.f32.mrf.mxu0
        %v3936 = vpop.f32.mrf.mxu0
        %3937 = vdwg.mxu0
        %v3938 = vadd.f32 %v3811, %v3933
        %s3939 = scalar_lea.vmem %s10, 3
        %v3940 = vld [vmem:[%s3939] sm:$0x1]
        %v3942 = vsel %vm3569, %v3940, 0
        %3944 = vmatprep.subr.bf16.mxu0 0
        %3945 = vmatpush1.bf16.msra.mxu0 0
        %3946 = vmatprep.subr.bf16.mxu0 0
        %3947 = vmatpush1.bf16.msra.mxu0 0
        %3948 = vmatprep.subr.bf16.mxu0 0
        %3949 = vmatpush1.bf16.msra.mxu0 0
        %3950 = vmatprep.subr.bf16.mxu0 0
        %3951 = vmatpush1.bf16.msra.mxu0 0
        %3952 = vmatprep.subr.bf16.mxu0 0
        %3953 = vmatpush1.bf16.msra.mxu0 0
        %3954 = vmatprep.subr.bf16.mxu0 0
        %3955 = vmatpush1.bf16.msra.mxu0 0
        %3956 = vmatprep.subr.bf16.mxu0 0
        %3957 = vmatpush1.bf16.msra.mxu0 0
        %3958 = vmatprep.subr.bf16.mxu0 0
        %3959 = vmatpush1.bf16.msra.mxu0 %v3575
        %3960 = vmatprep.subr.bf16.mxu0 0
        %3961 = vmatpush2.bf16.msra.mxu0 0
        %3962 = vmatprep.subr.bf16.mxu0 0
        %3963 = vmatpush2.bf16.msra.mxu0 0
        %3964 = vmatprep.subr.bf16.mxu0 0
        %3965 = vmatpush2.bf16.msra.mxu0 0
        %3966 = vmatprep.subr.bf16.mxu0 0
        %3967 = vmatpush2.bf16.msra.mxu0 0
        %3968 = vmatprep.subr.bf16.mxu0 0
        %3969 = vmatpush2.bf16.msra.mxu0 0
        %3970 = vmatprep.subr.bf16.mxu0 0
        %3971 = vmatpush2.bf16.msra.mxu0 0
        %3972 = vmatprep.subr.bf16.mxu0 0
        %3973 = vmatpush2.bf16.msra.mxu0 0
        %3974 = vmatprep.subr.bf16.mxu0 0
        %3975 = vmatpush2.bf16.msra.mxu0 0
        %3976 = vmatprep.mubr.bf16.mxu0 0
        %3977 = vmatmul.mubr.bf16.gmra.mxu0 %v3942
        %v3978 = vpop.f32.mrf.mxu0
        %v3979 = vadd.f32 0.0, %v3978
        %v3980 = vpop.f32.mrf.mxu0
        %v3981 = vpop.f32.mrf.mxu0
        %v3982 = vpop.f32.mrf.mxu0
        %3983 = vdwg.mxu0
        %v3984 = vpack.c.bf16 %v3979, %v3979
        %s3985 = scalar_lea.vmem %s11, 96
        %v3986 = vld [vmem:[%s3985] sm:$0xf]
        %v3987 = vld [vmem:[%s3985 + $0x4] sm:$0xf]
        %v3988 = vld [vmem:[%s3985 + $0x8] sm:$0xf]
        %v3989 = vld [vmem:[%s3985 + $0xc] sm:$0xf]
        %v3990 = vld [vmem:[%s3985 + $0x10] sm:$0xf]
        %v3991 = vld [vmem:[%s3985 + $0x14] sm:$0xf]
        %v3992 = vld [vmem:[%s3985 + $0x18] sm:$0xf]
        %v3993 = vld [vmem:[%s3985 + $0x1c] sm:$0xf]
        %v4002 = vunpack.c.l.b16 %v3986
        %v4003 = vunpack.c.l.b16 %v3987
        %v4004 = vunpack.c.l.b16 %v3988
        %v4005 = vunpack.c.l.b16 %v3989
        %v4006 = vunpack.c.l.b16 %v3990
        %v4007 = vunpack.c.l.b16 %v3991
        %v4008 = vunpack.c.l.b16 %v3992
        %v4009 = vunpack.c.l.b16 %v3993
        %v4010 = vpack.c.b16 %v4003, %v4002
        %v4011 = vpack.c.b16 %v4005, %v4004
        %v4012 = vpack.c.b16 %v4007, %v4006
        %v4013 = vpack.c.b16 %v4009, %v4008
        %v4019 = vsel %vm3705, %v3984, 0
        %4021 = vmatprep.subr.bf16.mxu0 0
        %4022 = vmatpush1.bf16.msra.mxu0 0
        %4023 = vmatprep.subr.bf16.mxu0 0
        %4024 = vmatpush1.bf16.msra.mxu0 0
        %4025 = vmatprep.subr.bf16.mxu0 0
        %4026 = vmatpush1.bf16.msra.mxu0 0
        %4027 = vmatprep.subr.bf16.mxu0 0
        %4028 = vmatpush1.bf16.msra.mxu0 0
        %4029 = vmatprep.subr.bf16.mxu0 0
        %4030 = vmatpush1.bf16.msra.mxu0 %v4013
        %4031 = vmatprep.subr.bf16.mxu0 0
        %4032 = vmatpush1.bf16.msra.mxu0 %v4012
        %4033 = vmatprep.subr.bf16.mxu0 0
        %4034 = vmatpush1.bf16.msra.mxu0 %v4011
        %4035 = vmatprep.subr.bf16.mxu0 0
        %4036 = vmatpush1.bf16.msra.mxu0 %v4010
        %4037 = vmatprep.subr.bf16.mxu0 0
        %4038 = vmatpush2.bf16.msra.mxu0 0
        %4039 = vmatprep.subr.bf16.mxu0 0
        %4040 = vmatpush2.bf16.msra.mxu0 0
        %4041 = vmatprep.subr.bf16.mxu0 0
        %4042 = vmatpush2.bf16.msra.mxu0 0
        %4043 = vmatprep.subr.bf16.mxu0 0
        %4044 = vmatpush2.bf16.msra.mxu0 0
        %4045 = vmatprep.subr.bf16.mxu0 0
        %4046 = vmatpush2.bf16.msra.mxu0 0
        %4047 = vmatprep.subr.bf16.mxu0 0
        %4048 = vmatpush2.bf16.msra.mxu0 0
        %4049 = vmatprep.subr.bf16.mxu0 0
        %4050 = vmatpush2.bf16.msra.mxu0 0
        %4051 = vmatprep.subr.bf16.mxu0 0
        %4052 = vmatpush2.bf16.msra.mxu0 0
        %4053 = vmatprep.mubr.bf16.mxu0 0
        %4054 = vmatmul.mubr.bf16.gmra.mxu0 %v4019
        %v4055 = vpop.f32.mrf.mxu0
        %v4056 = vadd.f32 0.0, %v4055
        %v4057 = vpop.f32.mrf.mxu0
        %v4058 = vpop.f32.mrf.mxu0
        %v4059 = vpop.f32.mrf.mxu0
        %4060 = vdwg.mxu0
        %v4061 = vadd.f32 %v3938, %v4056
        %s4062 = scalar_lea.vmem %s10, 4
        %v4063 = vld [vmem:[%s4062] sm:$0x1]
        %v4065 = vsel %vm3569, %v4063, 0
        %4067 = vmatprep.subr.bf16.mxu0 0
        %4068 = vmatpush1.bf16.msra.mxu0 0
        %4069 = vmatprep.subr.bf16.mxu0 0
        %4070 = vmatpush1.bf16.msra.mxu0 0
        %4071 = vmatprep.subr.bf16.mxu0 0
        %4072 = vmatpush1.bf16.msra.mxu0 0
        %4073 = vmatprep.subr.bf16.mxu0 0
        %4074 = vmatpush1.bf16.msra.mxu0 0
        %4075 = vmatprep.subr.bf16.mxu0 0
        %4076 = vmatpush1.bf16.msra.mxu0 0
        %4077 = vmatprep.subr.bf16.mxu0 0
        %4078 = vmatpush1.bf16.msra.mxu0 0
        %4079 = vmatprep.subr.bf16.mxu0 0
        %4080 = vmatpush1.bf16.msra.mxu0 0
        %4081 = vmatprep.subr.bf16.mxu0 0
        %4082 = vmatpush1.bf16.msra.mxu0 %v3575
        %4083 = vmatprep.subr.bf16.mxu0 0
        %4084 = vmatpush2.bf16.msra.mxu0 0
        %4085 = vmatprep.subr.bf16.mxu0 0
        %4086 = vmatpush2.bf16.msra.mxu0 0
        %4087 = vmatprep.subr.bf16.mxu0 0
        %4088 = vmatpush2.bf16.msra.mxu0 0
        %4089 = vmatprep.subr.bf16.mxu0 0
        %4090 = vmatpush2.bf16.msra.mxu0 0
        %4091 = vmatprep.subr.bf16.mxu0 0
        %4092 = vmatpush2.bf16.msra.mxu0 0
        %4093 = vmatprep.subr.bf16.mxu0 0
        %4094 = vmatpush2.bf16.msra.mxu0 0
        %4095 = vmatprep.subr.bf16.mxu0 0
        %4096 = vmatpush2.bf16.msra.mxu0 0
        %4097 = vmatprep.subr.bf16.mxu0 0
        %4098 = vmatpush2.bf16.msra.mxu0 0
        %4099 = vmatprep.mubr.bf16.mxu0 0
        %4100 = vmatmul.mubr.bf16.gmra.mxu0 %v4065
        %v4101 = vpop.f32.mrf.mxu0
        %v4102 = vadd.f32 0.0, %v4101
        %v4103 = vpop.f32.mrf.mxu0
        %v4104 = vpop.f32.mrf.mxu0
        %v4105 = vpop.f32.mrf.mxu0
        %4106 = vdwg.mxu0
        %v4107 = vpack.c.bf16 %v4102, %v4102
        %s4108 = scalar_lea.vmem %s11, 128
        %v4109 = vld [vmem:[%s4108] sm:$0xf]
        %v4110 = vld [vmem:[%s4108 + $0x4] sm:$0xf]
        %v4111 = vld [vmem:[%s4108 + $0x8] sm:$0xf]
        %v4112 = vld [vmem:[%s4108 + $0xc] sm:$0xf]
        %v4113 = vld [vmem:[%s4108 + $0x10] sm:$0xf]
        %v4114 = vld [vmem:[%s4108 + $0x14] sm:$0xf]
        %v4115 = vld [vmem:[%s4108 + $0x18] sm:$0xf]
        %v4116 = vld [vmem:[%s4108 + $0x1c] sm:$0xf]
        %v4125 = vunpack.c.l.b16 %v4109
        %v4126 = vunpack.c.l.b16 %v4110
        %v4127 = vunpack.c.l.b16 %v4111
        %v4128 = vunpack.c.l.b16 %v4112
        %v4129 = vunpack.c.l.b16 %v4113
        %v4130 = vunpack.c.l.b16 %v4114
        %v4131 = vunpack.c.l.b16 %v4115
        %v4132 = vunpack.c.l.b16 %v4116
        %v4133 = vpack.c.b16 %v4126, %v4125
        %v4134 = vpack.c.b16 %v4128, %v4127
        %v4135 = vpack.c.b16 %v4130, %v4129
        %v4136 = vpack.c.b16 %v4132, %v4131
        %v4142 = vsel %vm3705, %v4107, 0
        %4144 = vmatprep.subr.bf16.mxu0 0
        %4145 = vmatpush1.bf16.msra.mxu0 0
        %4146 = vmatprep.subr.bf16.mxu0 0
        %4147 = vmatpush1.bf16.msra.mxu0 0
        %4148 = vmatprep.subr.bf16.mxu0 0
        %4149 = vmatpush1.bf16.msra.mxu0 0
        %4150 = vmatprep.subr.bf16.mxu0 0
        %4151 = vmatpush1.bf16.msra.mxu0 0
        %4152 = vmatprep.subr.bf16.mxu0 0
        %4153 = vmatpush1.bf16.msra.mxu0 %v4136
        %4154 = vmatprep.subr.bf16.mxu0 0
        %4155 = vmatpush1.bf16.msra.mxu0 %v4135
        %4156 = vmatprep.subr.bf16.mxu0 0
        %4157 = vmatpush1.bf16.msra.mxu0 %v4134
        %4158 = vmatprep.subr.bf16.mxu0 0
        %4159 = vmatpush1.bf16.msra.mxu0 %v4133
        %4160 = vmatprep.subr.bf16.mxu0 0
        %4161 = vmatpush2.bf16.msra.mxu0 0
        %4162 = vmatprep.subr.bf16.mxu0 0
        %4163 = vmatpush2.bf16.msra.mxu0 0
        %4164 = vmatprep.subr.bf16.mxu0 0
        %4165 = vmatpush2.bf16.msra.mxu0 0
        %4166 = vmatprep.subr.bf16.mxu0 0
        %4167 = vmatpush2.bf16.msra.mxu0 0
        %4168 = vmatprep.subr.bf16.mxu0 0
        %4169 = vmatpush2.bf16.msra.mxu0 0
        %4170 = vmatprep.subr.bf16.mxu0 0
        %4171 = vmatpush2.bf16.msra.mxu0 0
        %4172 = vmatprep.subr.bf16.mxu0 0
        %4173 = vmatpush2.bf16.msra.mxu0 0
        %4174 = vmatprep.subr.bf16.mxu0 0
        %4175 = vmatpush2.bf16.msra.mxu0 0
        %4176 = vmatprep.mubr.bf16.mxu0 0
        %4177 = vmatmul.mubr.bf16.gmra.mxu0 %v4142
        %v4178 = vpop.f32.mrf.mxu0
        %v4179 = vadd.f32 0.0, %v4178
        %v4180 = vpop.f32.mrf.mxu0
        %v4181 = vpop.f32.mrf.mxu0
        %v4182 = vpop.f32.mrf.mxu0
        %4183 = vdwg.mxu0
        %v4184 = vadd.f32 %v4061, %v4179
        %v4185 = vld [vmem:[#allocation10] sm:$0x1]
        %v4187 = vlaneseq
        %v4188 = vshrl.u32 %v4187, 7
        %v4189 = vsub.s32 0, %v4188
        %v4190 = vrot.slane %v4185, %v4189
        %v4192 = vadd.f32 %v4184, %v4190
        %v4193 = vmax.f32 %v4192, 0.0
        %v4194 = vpack.c.bf16 %v4193, %v4193
        %v4195 = vld [vmem:[%s13] sm:$0xf]
        %v4196 = vld [vmem:[%s13 + $0x4] sm:$0xf]
        %s4197 = scalar_lea.vmem %s13, 8
        %v4198 = vld [vmem:[%s4197] sm:$0xf]
        %v4199 = vld [vmem:[%s4197 + $0x4] sm:$0xf]
        %v4201 = vshrl.u32 %v4194, 16
        %v4205 = vunpack.c.l.b16 %v4198
        %v4206 = vunpack.c.l.b16 %v4199
        %v4207 = vpack.c.b16 %v4206, %v4205
        %v4210 = vsel %vm1504, %v4201, 0
        %4212 = vmatprep.subr.bf16.mxu0 0
        %4213 = vmatpush1.bf16.msra.mxu0 0
        %4214 = vmatprep.subr.bf16.mxu0 0
        %4215 = vmatpush1.bf16.msra.mxu0 0
        %4216 = vmatprep.subr.bf16.mxu0 0
        %4217 = vmatpush1.bf16.msra.mxu0 0
        %4218 = vmatprep.subr.bf16.mxu0 0
        %4219 = vmatpush1.bf16.msra.mxu0 0
        %4220 = vmatprep.subr.bf16.mxu0 0
        %4221 = vmatpush1.bf16.msra.mxu0 0
        %4222 = vmatprep.subr.bf16.mxu0 0
        %4223 = vmatpush1.bf16.msra.mxu0 0
        %4224 = vmatprep.subr.bf16.mxu0 0
        %4225 = vmatpush1.bf16.msra.mxu0 0
        %4226 = vmatprep.subr.bf16.mxu0 0
        %4227 = vmatpush1.bf16.msra.mxu0 %v4207
        %4228 = vmatprep.subr.bf16.mxu0 0
        %4229 = vmatpush2.bf16.msra.mxu0 0
        %4230 = vmatprep.subr.bf16.mxu0 0
        %4231 = vmatpush2.bf16.msra.mxu0 0
        %4232 = vmatprep.subr.bf16.mxu0 0
        %4233 = vmatpush2.bf16.msra.mxu0 0
        %4234 = vmatprep.subr.bf16.mxu0 0
        %4235 = vmatpush2.bf16.msra.mxu0 0
        %4236 = vmatprep.subr.bf16.mxu0 0
        %4237 = vmatpush2.bf16.msra.mxu0 0
        %4238 = vmatprep.subr.bf16.mxu0 0
        %4239 = vmatpush2.bf16.msra.mxu0 0
        %4240 = vmatprep.subr.bf16.mxu0 0
        %4241 = vmatpush2.bf16.msra.mxu0 0
        %4242 = vmatprep.subr.bf16.mxu0 0
        %4243 = vmatpush2.bf16.msra.mxu0 0
        %4244 = vmatprep.mubr.bf16.mxu0 0
        %4245 = vmatmul.mubr.bf16.gmra.mxu0 %v4210
        %v4246 = vpop.f32.mrf.mxu0
        %v4247 = vadd.f32 0.0, %v4246
        %v4248 = vpop.f32.mrf.mxu0
        %v4249 = vpop.f32.mrf.mxu0
        %v4250 = vpop.f32.mrf.mxu0
        %4251 = vdwg.mxu0
        %v4254 = vunpack.c.l.b16 %v4195
        %v4255 = vunpack.c.l.b16 %v4196
        %v4256 = vpack.c.b16 %v4255, %v4254
        %v4258 = vsel %vm1504, %v4194, 0
        %4260 = vmatprep.subr.bf16.mxu0 0
        %4261 = vmatpush1.bf16.msra.mxu0 0
        %4262 = vmatprep.subr.bf16.mxu0 0
        %4263 = vmatpush1.bf16.msra.mxu0 0
        %4264 = vmatprep.subr.bf16.mxu0 0
        %4265 = vmatpush1.bf16.msra.mxu0 0
        %4266 = vmatprep.subr.bf16.mxu0 0
        %4267 = vmatpush1.bf16.msra.mxu0 0
        %4268 = vmatprep.subr.bf16.mxu0 0
        %4269 = vmatpush1.bf16.msra.mxu0 0
        %4270 = vmatprep.subr.bf16.mxu0 0
        %4271 = vmatpush1.bf16.msra.mxu0 0
        %4272 = vmatprep.subr.bf16.mxu0 0
        %4273 = vmatpush1.bf16.msra.mxu0 0
        %4274 = vmatprep.subr.bf16.mxu0 0
        %4275 = vmatpush1.bf16.msra.mxu0 %v4256
        %4276 = vmatprep.subr.bf16.mxu0 0
        %4277 = vmatpush2.bf16.msra.mxu0 0
        %4278 = vmatprep.subr.bf16.mxu0 0
        %4279 = vmatpush2.bf16.msra.mxu0 0
        %4280 = vmatprep.subr.bf16.mxu0 0
        %4281 = vmatpush2.bf16.msra.mxu0 0
        %4282 = vmatprep.subr.bf16.mxu0 0
        %4283 = vmatpush2.bf16.msra.mxu0 0
        %4284 = vmatprep.subr.bf16.mxu0 0
        %4285 = vmatpush2.bf16.msra.mxu0 0
        %4286 = vmatprep.subr.bf16.mxu0 0
        %4287 = vmatpush2.bf16.msra.mxu0 0
        %4288 = vmatprep.subr.bf16.mxu0 0
        %4289 = vmatpush2.bf16.msra.mxu0 0
        %4290 = vmatprep.subr.bf16.mxu0 0
        %4291 = vmatpush2.bf16.msra.mxu0 0
        %4292 = vmatprep.mubr.bf16.mxu0 0
        %4293 = vmatmul.mubr.bf16.gmra.mxu0 %v4258
        %v4294 = vpop.f32.mrf.mxu0
        %v4295 = vadd.f32 %v4247, %v4294
        %v4296 = vpop.f32.mrf.mxu0
        %v4297 = vpop.f32.mrf.mxu0
        %v4298 = vpop.f32.mrf.mxu0
        %4299 = vdwg.mxu0
        %v4300 = vld [vmem:[#allocation12] sm:$0x1]
        %v4301 = vadd.f32 %v4295, %v4300
        %v4302 = vlaneseq
        %v4303 = vand.u32 %v4302, 127
        %vm4304 = vcmp.lt.s32.totalorder %v4303, 16
        %v4305 = vmax.f32 %v4301, 0.0
        %vm4306 = vcmp.ne.f32.partialorder %v4301, %v4301
        %v4307 = vadd.f32 %v4301, 0.0
        %v4308 = vand.u32 2147483647, %v4301
        %v4309 = vsub.f32 0.0, %v4308
        %v4310 = vmul.f32 %v4309, 1.442695
        %v4311 = vpow.pop %v4310
        %v4312 = vadd.f32 %v4311, 1.0
        %v4313 = vlog2.pop %v4312
        %v4314 = vmul.f32 %v4313, 0.6931472
        %v4315 = vmul.f32 -0.5, %v4311
        %v4316 = vadd.f32 %v4315, 1.0
        %v4317 = vmul.f32 %v4316, %v4311
        %v4318 = vand.u32 2147483647, %v4311
        %vm4319 = vcmp.lt.f32.partialorder %v4318, 0.0004427343
        %v4320 = vsel %vm4319, %v4317, %v4314
        %v4321 = vadd.f32 %v4305, %v4320
        %v4322 = vsel %vm4306, %v4307, %v4321
        %v4323 = vsel %vm4304, %v4301, %v4322
        %vm4324 = vcmask 253952
        %4325 = vst.msk [vmem:[%s584] sm:$0x1] %vm4324, %v4323
        %p4326 = scmp.lt.s32.totalorder %s30, 1
        %s4327 = scalar_select %p4326, %s30, 1
        %s4328 = scalar_lea.vmem %s15, %s4327
        // Predicated region
        $region109: #{celeba_encoder_forward.1} parent=79 // pred_check
          %p4329 = pneg %p368
        $region110: #{celeba_encoder_forward.1} parent=79 // pred_check_branch
          %4331 = sbr.rel (%p4329) target = $region112
        $region111: #{celeba_encoder_forward.1} parent=79 // pred_region
          _
        $region112: #{celeba_encoder_forward.1} parent=79 // pred_fallthru
          _
      $region80: #{celeba_encoder_forward.1} parent=5 // pred_fallthru
        _
      %p4332 = scmp.le.s32.totalorder 2, %s25
      // Predicated region
      $region113: #{celeba_encoder_forward.1} parent=5 // pred_check
        %p4333 = pneg %p4332
      $region114: #{celeba_encoder_forward.1} parent=5 // pred_check_branch
        %4335 = sbr.rel (%p4333) target = $region116
      $region115: #{celeba_encoder_forward.1} parent=5 // pred_region
        %s4336 = ssub.s32 %s25, 2
        // Predicated region
        $region117: #{celeba_encoder_forward.1} parent=115 // pred_check
          %p4337 = pneg %p374
        $region118: #{celeba_encoder_forward.1} parent=115 // pred_check_branch
          %4339 = sbr.rel (%p4337) target = $region120
        $region119: #{celeba_encoder_forward.1} parent=115 // pred_region
          %p4340 = scmp.lt.s32.totalorder %s31, 1
          %s4341 = scalar_select %p4340, %s31, 1
          %s4342 = scalar_lea.vmem %s15, %s4341
        $region120: #{celeba_encoder_forward.1} parent=115 // pred_fallthru
          _
      $region116: #{celeba_encoder_forward.1} parent=5 // pred_fallthru
        _
    $region6: #{celeba_encoder_forward.1} parent=1 // loop_footer
      %s29 = sadd.s32 1, %s25
    $region7: #{celeba_encoder_forward.1} parent=1 // loop_footer_branch
      %24 = sbr.rel target = $region3
    $region8: #{celeba_encoder_forward.1} parent=1 // loop_exit
      _
    %4343 = vsyncpa [#allocation3], 1
    %s4344 = scalar_lea.sflag [#allocation3], 1
    %4345 = vsyncpa %s4344, 1
    %4346 = vsyncpa [#allocation5], 1
    %4347 = vsyncpa [#allocation8], 1
    %4348 = vsyncpa [#allocation11], 1

</llo_original>
